<compile_context>
chip_gen: v7x
topology: tpu7x:2x2x1
jax: 0.10.0
libtpu: 0.0.40
codegen_flags: <defaults>
</compile_context>

<pallas_src>
import functools

import jax
import jax.numpy as jnp
from jax.experimental import pallas as pl
from jax.experimental.pallas import tpu as pltpu


def _round_up(x, m):
    return (x + m - 1) // m * m


def _lstm_cell(gates, c_prev, H):
    # PyTorch LSTMCell gate order: i, f, g, o
    i = jax.nn.sigmoid(gates[:, 0 * H:1 * H])
    f = jax.nn.sigmoid(gates[:, 1 * H:2 * H])
    g = jnp.tanh(gates[:, 2 * H:3 * H])
    o = jax.nn.sigmoid(gates[:, 3 * H:4 * H])
    c_new = f * c_prev + i * g
    h_new = o * jnp.tanh(c_new)
    return h_new, c_new


def butd_recurrent_kernel(
    gate_pre_ref,     # (TB, 4Hp) f32   streamed: emb_t@W_emb + fea_vec@W_fv + bA
    init_ref,         # (TB, 4Hp) f32   [h_A | c_A | h_L | c_L] initial state
    fea_maps_ref,     # (N, TB, I) f32  region-major image features
    att1_ref,         # (N, TB, Ap) f32 region-major fea_att(fea_maps) (hoisted)
    wA_hL_ref, wA_h_ref,               # (Hp, 4Hp) compute dtype
    w_hid_ref, b_hid_ref,              # (Hp, Ap) cd, (1, Ap) f32
    w_attw_ref,                        # (1, 1, Ap) f32
    wL_wf_ref, wL_hA_ref, wL_h_ref,    # (I, 4Hp), (Hp, 4Hp), (Hp, 4Hp) cd
    bL_ref,                            # (1, 4Hp) f32
    hl_out_ref,                        # (TB, Hp) f32 output block
    hA_ref, cA_ref, hL_ref, cL_ref,    # (TB, Hp) f32 scratch (persistent state)
    *, hidden_dim,
):
    Hp = hidden_dim
    t = pl.program_id(1)
    cd = wA_hL_ref.dtype

    # Initialise LSTM state at the first step of each batch tile.
    @pl.when(t == 0)
    def _():
        init = init_ref[...]
        hA_ref[...] = init[:, 0 * Hp:1 * Hp]
        cA_ref[...] = init[:, 1 * Hp:2 * Hp]
        hL_ref[...] = init[:, 2 * Hp:3 * Hp]
        cL_ref[...] = init[:, 3 * Hp:4 * Hp]

    h_A = hA_ref[...]
    h_L = hL_ref[...]

    # --- Top-down attention LSTM cell (split accumulating dots, no concat) ---
    gates_A = (gate_pre_ref[...]
               + jnp.dot(h_L.astype(cd), wA_hL_ref[...],
                         preferred_element_type=jnp.float32)
               + jnp.dot(h_A.astype(cd), wA_h_ref[...],
                         preferred_element_type=jnp.float32))
    h_A, c_A = _lstm_cell(gates_A, cA_ref[...], Hp)
    hA_ref[...] = h_A
    cA_ref[...] = c_A

    # --- BUTD_Attend (region-major layout: leading axis = image regions) ---
    att2 = jnp.dot(h_A.astype(cd), w_hid_ref[...],
                   preferred_element_type=jnp.float32) + b_hid_ref[...]   # (TB, Ap)
    act = jnp.maximum(att1_ref[...] + att2[None, :, :], 0.0)              # (N, TB, Ap)
    # TODO(synk): at very large att_dim this lane-reduce could be routed to the
    # MXU as a (N*TB, Ap) @ (Ap, 1) dot; kept on the XLU here.
    att = jnp.sum(act * w_attw_ref[...], axis=-1, keepdims=True)          # (N, TB, 1)
    # b_attw is omitted: softmax over regions is shift-invariant.
    att = att - jnp.max(att, axis=0, keepdims=True)
    e = jnp.exp(att)
    weight = e / jnp.sum(e, axis=0, keepdims=True)                        # exact recip
    weighted_fea = jnp.sum(fea_maps_ref[...] * weight, axis=0)            # (TB, I)

    # --- Language LSTM cell (split accumulating dots, no concat) ---
    gates_L = (jnp.dot(weighted_fea.astype(cd), wL_wf_ref[...],
                       preferred_element_type=jnp.float32)
               + jnp.dot(h_A.astype(cd), wL_hA_ref[...],
                         preferred_element_type=jnp.float32)
               + jnp.dot(h_L.astype(cd), wL_h_ref[...],
                         preferred_element_type=jnp.float32)
               + bL_ref[...])
    h_L, c_L = _lstm_cell(gates_L, cL_ref[...], Hp)
    hL_ref[...] = h_L
    cL_ref[...] = c_L

    # Emit h_L for this step; the vocab projection runs in a separate kernel.
    hl_out_ref[...] = h_L


def fc_proj_kernel(h_ref, w_ref, b_ref, out_ref):
    # (TM, Hp) @ (Hp, TN) + (1, TN) -> lane-dense (TM, TN) output tile.
    out_ref[...] = jnp.dot(h_ref[...], w_ref[...],
                           preferred_element_type=jnp.float32) + b_ref[...]


def topdown_decoder_forward(params, fea_vec, fea_maps, cap,
                            compute_dtype=jnp.bfloat16):
    """fea_vec: (B, I), fea_maps: (B, N, I), cap: (B, T) int32 -> logits (B, T, V)."""
    p = params
    f32 = jnp.float32
    cd = compute_dtype

    B, N, I = fea_maps.shape
    T = cap.shape[1]
    H = p['wA_h'].shape[0]
    A = p['w_fea'].shape[1]
    V = p['w_fc'].shape[1]

    Hp = _round_up(H, 128)        # lane-dense hidden dim
    Ap = _round_up(A, 128)        # lane-dense attention dim
    B_pad = _round_up(B, 8)       # f32 sublane count
    TN = 256                      # fc vocab tile (matches 256-wide v6e/v7x MXU)
    Vp = _round_up(V, TN)

    # ---- batch padding ----
    if B_pad != B:
        fea_vec = jnp.pad(fea_vec, ((0, B_pad - B), (0, 0)))
        fea_maps = jnp.pad(fea_maps, ((0, B_pad - B), (0, 0), (0, 0)))
        cap = jnp.pad(cap, ((0, B_pad - B), (0, 0)))

    # ---- zero-pad hidden / attention dims to lane width (exact no-op) ----
    def pad_gate_cols(w):             # (..., 4H) -> (..., 4Hp), per gate/state
        lead = w.shape[:-1]
        w4 = w.reshape(lead + (4, H))
        w4 = jnp.pad(w4, [(0, 0)] * len(lead) + [(0, 0), (0, Hp - H)])
        return w4.reshape(lead + (4 * Hp,))

    def pad_rows_h(w):                # (H, X) -> (Hp, X)
        return jnp.pad(w, ((0, Hp - H), (0, 0)))

    def pad_last(w, to):              # pad trailing dim to `to`
        return jnp.pad(w, [(0, 0)] * (w.ndim - 1) + [(0, to - w.shape[-1])])

    wA_hL = pad_gate_cols(pad_rows_h(p['wA_hL'])).astype(cd)
    wA_h = pad_gate_cols(pad_rows_h(p['wA_h'])).astype(cd)
    wL_hA = pad_gate_cols(pad_rows_h(p['wL_hA'])).astype(cd)
    wL_h = pad_gate_cols(pad_rows_h(p['wL_h'])).astype(cd)
    wL_wf = pad_gate_cols(p['wL_wf']).astype(cd)
    bL = pad_gate_cols(p['bL']).astype(f32)
    w_hid = pad_last(pad_rows_h(p['w_hid']), Ap).astype(cd)
    b_hid = pad_last(p['b_hid'], Ap).astype(f32)
    w_attw = pad_last(p['w_attw'], Ap).reshape(1, 1, Ap).astype(f32)

    # ---- hoisted loop-invariant terms (one-shot wrapper matmuls) ----
    # initial LSTM states [h_A | c_A | h_L | c_L]   (w_init never enters VMEM)
    init = (jnp.dot(fea_vec.astype(cd), pad_gate_cols(p['w_init']).astype(cd),
                    preferred_element_type=f32)
            + pad_gate_cols(p['b_init']).astype(f32))                    # (B_pad, 4Hp)

    # attention-LSTM gate pre-activation: emb_t @ W_emb + fea_vec @ W_fv + bA
    emb_tb = jnp.take(p['embed'], cap.T, axis=0).astype(cd)              # (T, B_pad, E)
    gate_fv = jnp.dot(fea_vec.astype(cd), pad_gate_cols(p['wA_fv']).astype(cd),
                      preferred_element_type=f32)                        # (B_pad, 4Hp)
    gate_pre = (jnp.einsum('tbe,eg->tbg', emb_tb,
                           pad_gate_cols(p['wA_emb']).astype(cd),
                           preferred_element_type=f32)
                + gate_fv[None, :, :]
                + pad_gate_cols(p['bA']).astype(f32)[None, :, :])         # (T, B_pad, 4Hp)

    # loop-invariant region projection att1, in region-major layout
    att1 = (jnp.einsum('bni,ia->bna', fea_maps.astype(cd),
                       pad_last(p['w_fea'], Ap).astype(cd),
                       preferred_element_type=f32)
            + pad_last(p['b_fea'], Ap).astype(f32)[None, :, :])           # (B_pad, N, Ap)
    att1_r = jnp.transpose(att1, (1, 0, 2))                               # (N, B_pad, Ap)
    fea_maps_r = jnp.transpose(fea_maps, (1, 0, 2)).astype(f32)           # (N, B_pad, I)

    # ---- batch tiling ("parallel" axis -> 2nd TensorCore on v7x) ----
    if B_pad <= 64:
        TB = B_pad
    else:
        TB = max(c for c in (8, 16, 32, 64) if B_pad % c == 0)
    n_btiles = B_pad // TB

    buf1 = pl.Buffered(1)   # loop-invariant weights: single VMEM buffer

    in_specs = [
        # streamed per (batch tile, step): small gate pre-activation slab
        pl.BlockSpec((None, TB, 4 * Hp), lambda b, t: (t, b, 0)),
        # per batch-tile invariants
        pl.BlockSpec((TB, 4 * Hp), lambda b, t: (b, 0)),                   # init
        pl.BlockSpec((N, TB, I), lambda b, t: (0, b, 0)),                  # fea_maps_r
        pl.BlockSpec((N, TB, Ap), lambda b, t: (0, b, 0)),                 # att1_r
        # fully loop-invariant weights / biases -> single-buffered residents
        pl.BlockSpec((Hp, 4 * Hp), lambda b, t: (0, 0), pipeline_mode=buf1),   # wA_hL
        pl.BlockSpec((Hp, 4 * Hp), lambda b, t: (0, 0), pipeline_mode=buf1),   # wA_h
        pl.BlockSpec((Hp, Ap), lambda b, t: (0, 0), pipeline_mode=buf1),       # w_hid
        pl.BlockSpec((1, Ap), lambda b, t: (0, 0), pipeline_mode=buf1),        # b_hid
        pl.BlockSpec((1, 1, Ap), lambda b, t: (0, 0, 0), pipeline_mode=buf1),  # w_attw
        pl.BlockSpec((I, 4 * Hp), lambda b, t: (0, 0), pipeline_mode=buf1),    # wL_wf
        pl.BlockSpec((Hp, 4 * Hp), lambda b, t: (0, 0), pipeline_mode=buf1),   # wL_hA
        pl.BlockSpec((Hp, 4 * Hp), lambda b, t: (0, 0), pipeline_mode=buf1),   # wL_h
        pl.BlockSpec((1, 4 * Hp), lambda b, t: (0, 0), pipeline_mode=buf1),    # bL
    ]

    # explicit scoped-VMEM limit derived from the actual resident-buffer sum
    isz = jnp.dtype(cd).itemsize
    rec_bytes = (
        2 * (TB * 4 * Hp) * 4 * 2            # gate_pre + init blocks (x2 buffers, f32)
        + 2 * (N * TB * (I + Ap)) * 4        # fea_maps_r + att1_r blocks (x2 buffers)
        + 4 * (Hp * 4 * Hp) * isz            # wA_hL, wA_h, wL_hA, wL_h (x1 buffer)
        + (I * 4 * Hp) * isz                 # wL_wf (x1 buffer)
        + (Hp * Ap) * isz                    # w_hid (x1 buffer)
        + (2 * Ap + 4 * Hp) * 4              # small f32 biases
        + 2 * (TB * Hp) * 4                  # output block (x2 buffers)
        + 4 * (TB * Hp) * 4                  # state scratch
    )
    rec_vmem = int(min(64 * 2 ** 20, max(32 * 2 ** 20, 2 * rec_bytes)))

    hl_seq = pl.pallas_call(
        functools.partial(butd_recurrent_kernel, hidden_dim=Hp),
        out_shape=jax.ShapeDtypeStruct((T, B_pad, Hp), f32),
        grid_spec=pltpu.PrefetchScalarGridSpec(
            num_scalar_prefetch=0,
            grid=(n_btiles, T),
            in_specs=in_specs,
            out_specs=pl.BlockSpec((None, TB, Hp), lambda b, t: (t, b, 0)),
            scratch_shapes=[pltpu.VMEM((TB, Hp), f32)] * 4,   # h_A, c_A, h_L, c_L
        ),
        compiler_params=pltpu.CompilerParams(
            dimension_semantics=("parallel", "arbitrary"),
            vmem_limit_bytes=rec_vmem),
    )(gate_pre, init, fea_maps_r, att1_r,
      wA_hL, wA_h, w_hid, b_hid, w_attw, wL_wf, wL_hA, wL_h, bL)

    # ---- vocab projection: lane-dense (T*B, Hp) @ (Hp, Vp) in 256-wide tiles ----
    M = T * B_pad
    TM = min(M, 256)
    M_pad = _round_up(M, TM)
    h2d = hl_seq.reshape(M, Hp).astype(cd)
    if M_pad != M:
        h2d = jnp.pad(h2d, ((0, M_pad - M), (0, 0)))
    w_fc = pad_last(pad_rows_h(p['w_fc']), Vp).astype(cd)                 # (Hp, Vp)
    b_fc = pad_last(p['b_fc'], Vp).astype(f32)                            # (1, Vp)

    fc_bytes = 2 * (TM * Hp + Hp * TN) * isz + 2 * TN * 4 + 2 * (TM * TN) * 4
    fc_vmem = int(min(64 * 2 ** 20, max(32 * 2 ** 20, 2 * fc_bytes)))

    logits2d = pl.pallas_call(
        fc_proj_kernel,
        out_shape=jax.ShapeDtypeStruct((M_pad, Vp), f32),
        grid_spec=pltpu.PrefetchScalarGridSpec(
            num_scalar_prefetch=0,
            grid=(M_pad // TM, Vp // TN),
            in_specs=[pl.BlockSpec((TM, Hp), lambda i, j: (i, 0)),
                      pl.BlockSpec((Hp, TN), lambda i, j: (0, j)),
                      pl.BlockSpec((1, TN), lambda i, j: (0, j))],
            out_specs=pl.BlockSpec((TM, TN), lambda i, j: (i, j)),
        ),
        compiler_params=pltpu.CompilerParams(
            dimension_semantics=("parallel", "parallel"),
            vmem_limit_bytes=fc_vmem),
    )(h2d, w_fc, b_fc)

    logits = logits2d[:M, :V].reshape(T, B_pad, V)[:, :B, :]
    # TODO(synk): for very large vocabularies, fold this (T,B,V)->(B,T,V)
    # transpose into the fc kernel's output BlockSpec to avoid an HBM pass.
    return jnp.transpose(logits, (1, 0, 2))                               # (B, T, V)


def init_params(key, *, vocab_size, image_dim, embed_dim, hidden_dim, att_dim):
    H = hidden_dim
    ks = iter(jax.random.split(key, 32))

    def u(shape, scale=0.1):
        return jax.random.uniform(next(ks), shape, jnp.float32, -scale, scale)

    return dict(
        embed=u((vocab_size, embed_dim)),
        # init_h_A / init_c_A / init_h_L / init_c_L packed as one (I, 4H) matrix
        w_init=u((image_dim, 4 * H)), b_init=u((1, 4 * H)),
        # Topdown_Attention_lstmcell: W_ih^T split by input segment, W_hh^T, fused bias
        wA_hL=u((H, 4 * H)), wA_fv=u((image_dim, 4 * H)), wA_emb=u((embed_dim, 4 * H)),
        wA_h=u((H, 4 * H)), bA=u((1, 4 * H)),
        # BUTD_Attend
        w_fea=u((image_dim, att_dim)), b_fea=u((1, att_dim)),
        w_hid=u((H, att_dim)), b_hid=u((1, att_dim)),
        w_attw=u((1, att_dim)), b_attw=u((1, 1)),
        # Language_lstmcell
        wL_wf=u((image_dim, 4 * H)), wL_hA=u((H, 4 * H)),
        wL_h=u((H, 4 * H)), bL=u((1, 4 * H)),
        # fc (bias initialized to 0, as in init_weight)
        w_fc=u((H, vocab_size)), b_fc=jnp.zeros((1, vocab_size), jnp.float32),
    )


def reference_forward(params, fea_vec, fea_maps, cap):
    """Pure-JAX reference mirroring the PyTorch forward (eval-mode dropout)."""
    p = params
    H = p['wA_h'].shape[0]
    emb = jnp.take(p['embed'], cap, axis=0)
    init = fea_vec @ p['w_init'] + p['b_init']
    h_A, c_A = init[:, :H], init[:, H:2 * H]
    h_L, c_L = init[:, 2 * H:3 * H], init[:, 3 * H:]

    def lstm(gates, c):
        i = jax.nn.sigmoid(gates[:, :H]); f = jax.nn.sigmoid(gates[:, H:2 * H])
        g = jnp.tanh(gates[:, 2 * H:3 * H]); o = jax.nn.sigmoid(gates[:, 3 * H:])
        c2 = f * c + i * g
        return o * jnp.tanh(c2), c2

    outs = []
    for t in range(cap.shape[1]):
        gA = (h_L @ p['wA_hL'] + fea_vec @ p['wA_fv'] + emb[:, t] @ p['wA_emb']
              + h_A @ p['wA_h'] + p['bA'])
        h_A, c_A = lstm(gA, c_A)
        att1 = jnp.einsum('bni,ia->bna', fea_maps, p['w_fea']) + p['b_fea'][None]
        att2 = h_A @ p['w_hid'] + p['b_hid']
        act = jax.nn.relu(att1 + att2[:, None, :])
        att = jnp.sum(act * p['w_attw'][None], axis=-1) + p['b_attw'][0, 0]
        w = jax.nn.softmax(att, axis=1)
        wf = jnp.sum(fea_maps * w[:, :, None], axis=1)
        gL = wf @ p['wL_wf'] + h_A @ p['wL_hA'] + h_L @ p['wL_h'] + p['bL']
        h_L, c_L = lstm(gL, c_L)
        outs.append(h_L @ p['w_fc'] + p['b_fc'])
    return jnp.stack(outs, axis=1)


if __name__ == "__main__":
    B, N, T = 3, 36, 7
    image_dim, embed_dim, hidden_dim, att_dim, vocab_size = 64, 48, 32, 48, 97

    key = jax.random.PRNGKey(0)
    kp, kf, kc = jax.random.split(key, 3)
    params = init_params(kp, vocab_size=vocab_size, image_dim=image_dim,
                         embed_dim=embed_dim, hidden_dim=hidden_dim, att_dim=att_dim)

    fea_maps = jax.random.normal(kf, (B, N, image_dim), jnp.float32)
    fea_vec = fea_maps.mean(axis=1)
    cap = jax.random.randint(kc, (B, T), 0, vocab_size, dtype=jnp.int32)

    ref = reference_forward(params, fea_vec, fea_maps, cap)

    # f32 compute path: tight check against the pure-JAX reference.
    fwd_f32 = jax.jit(functools.partial(topdown_decoder_forward,
                                        compute_dtype=jnp.float32))
    out_f32 = jax.block_until_ready(fwd_f32(params, fea_vec, fea_maps, cap))
    assert out_f32.shape == (B, T, vocab_size)
    err32 = float(jnp.max(jnp.abs(out_f32 - ref)))
    assert err32 < 1e-2, f"f32 path max_err={err32}"

    # bf16-weight path (default / recommended): looser tolerance.
    fwd_bf16 = jax.jit(functools.partial(topdown_decoder_forward,
                                         compute_dtype=jnp.bfloat16))
    out_bf16 = jax.block_until_ready(fwd_bf16(params, fea_vec, fea_maps, cap))
    assert out_bf16.shape == (B, T, vocab_size)
    err16 = float(jnp.max(jnp.abs(out_bf16 - ref)))
    assert err16 < 5e-2, f"bf16 path max_err={err16}"

    print("KERNEL_OK")
</pallas_src>

<mosaic_0001>
module attributes {stable_mosaic.version = 11 : i64} {
  func.func @fc_proj_kernel(%arg0: i32, %arg1: i32, %arg2: memref<56x128xf32, #tpu.memory_space<vmem>>, %arg3: memref<128x256xf32, #tpu.memory_space<vmem>>, %arg4: memref<1x256xf32, #tpu.memory_space<vmem>>, %arg5: memref<56x256xf32, #tpu.memory_space<vmem>>) attributes {dimension_semantics = [#tpu.dimension_semantics<parallel>, #tpu.dimension_semantics<parallel>], iteration_bounds = array<i64: 1, 1>, scalar_prefetch = 0 : i64, scratch_operands = 0 : i64, tpu.core_type = #tpu.core_type<tc>, window_params = [{transform_indices = @transform_0, window_bounds = array<i64: 56, 128>}, {transform_indices = @transform_1, window_bounds = array<i64: 128, 256>}, {transform_indices = @transform_2, window_bounds = array<i64: 1, 256>}, {transform_indices = @transform_3, window_bounds = array<i64: 56, 256>}]} {
    %c0 = arith.constant 0 : index
    %c0_0 = arith.constant 0 : index
    %0 = vector.load %arg2[%c0, %c0_0] : memref<56x128xf32, #tpu.memory_space<vmem>>, vector<56x128xf32>
    %c0_1 = arith.constant 0 : index
    %c0_2 = arith.constant 0 : index
    %1 = vector.load %arg3[%c0_1, %c0_2] : memref<128x256xf32, #tpu.memory_space<vmem>>, vector<128x256xf32>
    %cst = arith.constant dense<0.000000e+00> : vector<56x256xf32>
    %2 = tpu.matmul %0, %1, %cst {dimension_numbers = #tpu.dot_dimension_numbers<[1], [0], [0], [1], [0, 0, 1, 1], [], []>} : vector<56x128xf32>, vector<128x256xf32>, vector<56x256xf32> -> vector<56x256xf32>
    %c0_3 = arith.constant 0 : index
    %c0_4 = arith.constant 0 : index
    %3 = vector.load %arg4[%c0_3, %c0_4] : memref<1x256xf32, #tpu.memory_space<vmem>>, vector<1x256xf32>
    %4 = vector.broadcast %3 : vector<1x256xf32> to vector<56x256xf32>
    %5 = arith.addf %2, %4 : vector<56x256xf32>
    %c0_5 = arith.constant 0 : index
    %c0_6 = arith.constant 0 : index
    %6 = vector.load %arg5[%c0_5, %c0_6] : memref<56x256xf32, #tpu.memory_space<vmem>>, vector<56x256xf32>
    tpu.vector_store %arg5[%c0_5, %c0_6], %5 {strides = array<i32>} : memref<56x256xf32, #tpu.memory_space<vmem>>, vector<56x256xf32>,
    return
  }
  func.func @transform_0(%arg0: i32, %arg1: i32) -> (i32, i32) {
    %c0_i32 = arith.constant 0 : i32
    %c0_i32_0 = arith.constant 0 : i32
    return %arg0, %c0_i32 : i32, i32
  }
  func.func @transform_1(%arg0: i32, %arg1: i32) -> (i32, i32) {
    %c0_i32 = arith.constant 0 : i32
    %c0_i32_0 = arith.constant 0 : i32
    return %c0_i32, %arg1 : i32, i32
  }
  func.func @transform_2(%arg0: i32, %arg1: i32) -> (i32, i32) {
    %c0_i32 = arith.constant 0 : i32
    %c0_i32_0 = arith.constant 0 : i32
    return %c0_i32, %arg1 : i32, i32
  }
  func.func @transform_3(%arg0: i32, %arg1: i32) -> (i32, i32) {
    %c0_i32 = arith.constant 0 : i32
    return %arg0, %arg1 : i32, i32
  }
}

module attributes {stable_mosaic.version = 11 : i64} {
  func.func @butd_recurrent_kernel(%arg0: i32, %arg1: i32, %arg2: memref<1x8x512xf32, #tpu.memory_space<vmem>>, %arg3: memref<8x512xf32, #tpu.memory_space<vmem>>, %arg4: memref<36x8x64xf32, #tpu.memory_space<vmem>>, %arg5: memref<36x8x128xf32, #tpu.memory_space<vmem>>, %arg6: memref<128x512xf32, #tpu.memory_space<vmem>>, %arg7: memref<128x512xf32, #tpu.memory_space<vmem>>, %arg8: memref<128x128xf32, #tpu.memory_space<vmem>>, %arg9: memref<1x128xf32, #tpu.memory_space<vmem>>, %arg10: memref<1x1x128xf32, #tpu.memory_space<vmem>>, %arg11: memref<64x512xf32, #tpu.memory_space<vmem>>, %arg12: memref<128x512xf32, #tpu.memory_space<vmem>>, %arg13: memref<128x512xf32, #tpu.memory_space<vmem>>, %arg14: memref<1x512xf32, #tpu.memory_space<vmem>>, %arg15: memref<1x8x128xf32, #tpu.memory_space<vmem>>, %arg16: memref<8x128xf32, #tpu.memory_space<vmem>>, %arg17: memref<8x128xf32, #tpu.memory_space<vmem>>, %arg18: memref<8x128xf32, #tpu.memory_space<vmem>>, %arg19: memref<8x128xf32, #tpu.memory_space<vmem>>) attributes {dimension_semantics = [#tpu.dimension_semantics<parallel>, #tpu.dimension_semantics<arbitrary>], iteration_bounds = array<i64: 1, 7>, scalar_prefetch = 0 : i64, scratch_operands = 4 : i64, tpu.core_type = #tpu.core_type<tc>, window_params = [{transform_indices = @transform_0, window_bounds = array<i64: 1, 8, 512>}, {transform_indices = @transform_1, window_bounds = array<i64: 8, 512>}, {transform_indices = @transform_2, window_bounds = array<i64: 36, 8, 64>}, {transform_indices = @transform_3, window_bounds = array<i64: 36, 8, 128>}, {pipeline_mode = #tpu.pipeline_mode<synchronous>, transform_indices = @transform_4, window_bounds = array<i64: 128, 512>}, {pipeline_mode = #tpu.pipeline_mode<synchronous>, transform_indices = @transform_5, window_bounds = array<i64: 128, 512>}, {pipeline_mode = #tpu.pipeline_mode<synchronous>, transform_indices = @transform_6, window_bounds = array<i64: 128, 128>}, {pipeline_mode = #tpu.pipeline_mode<synchronous>, transform_indices = @transform_7, window_bounds = array<i64: 1, 128>}, {pipeline_mode = #tpu.pipeline_mode<synchronous>, transform_indices = @transform_8, window_bounds = array<i64: 1, 1, 128>}, {pipeline_mode = #tpu.pipeline_mode<synchronous>, transform_indices = @transform_9, window_bounds = array<i64: 64, 512>}, {pipeline_mode = #tpu.pipeline_mode<synchronous>, transform_indices = @transform_10, window_bounds = array<i64: 128, 512>}, {pipeline_mode = #tpu.pipeline_mode<synchronous>, transform_indices = @transform_11, window_bounds = array<i64: 128, 512>}, {pipeline_mode = #tpu.pipeline_mode<synchronous>, transform_indices = @transform_12, window_bounds = array<i64: 1, 512>}, {transform_indices = @transform_13, window_bounds = array<i64: 1, 8, 128>}]} {
    %c0_i32 = arith.constant 0 : i32
    %0 = arith.cmpi eq, %arg1, %c0_i32 : i32
    %1 = arith.extui %0 : i1 to i32
    %c0_i32_0 = arith.constant 0 : i32
    %2 = arith.cmpi ne, %1, %c0_i32_0 : i32
    scf.if %2 {
      %c0_63 = arith.constant 0 : index
      %c0_64 = arith.constant 0 : index
      %112 = vector.load %arg3[%c0_63, %c0_64] : memref<8x512xf32, #tpu.memory_space<vmem>>, vector<8x512xf32>
      %113 = vector.extract_strided_slice %112 {offsets = [0, 0], sizes = [8, 128], strides = [1, 1]} : vector<8x512xf32> to vector<8x128xf32>
      %c0_65 = arith.constant 0 : index
      %c0_66 = arith.constant 0 : index
      %114 = vector.load %arg16[%c0_65, %c0_66] : memref<8x128xf32, #tpu.memory_space<vmem>>, vector<8x128xf32>
      tpu.vector_store %arg16[%c0_65, %c0_66], %113 {strides = array<i32>} : memref<8x128xf32, #tpu.memory_space<vmem>>, vector<8x128xf32>,
      %115 = vector.extract_strided_slice %112 {offsets = [0, 128], sizes = [8, 128], strides = [1, 1]} : vector<8x512xf32> to vector<8x128xf32>
      %c0_67 = arith.constant 0 : index
      %c0_68 = arith.constant 0 : index
      %116 = vector.load %arg17[%c0_67, %c0_68] : memref<8x128xf32, #tpu.memory_space<vmem>>, vector<8x128xf32>
      tpu.vector_store %arg17[%c0_67, %c0_68], %115 {strides = array<i32>} : memref<8x128xf32, #tpu.memory_space<vmem>>, vector<8x128xf32>,
      %117 = vector.extract_strided_slice %112 {offsets = [0, 256], sizes = [8, 128], strides = [1, 1]} : vector<8x512xf32> to vector<8x128xf32>
      %c0_69 = arith.constant 0 : index
      %c0_70 = arith.constant 0 : index
      %118 = vector.load %arg18[%c0_69, %c0_70] : memref<8x128xf32, #tpu.memory_space<vmem>>, vector<8x128xf32>
      tpu.vector_store %arg18[%c0_69, %c0_70], %117 {strides = array<i32>} : memref<8x128xf32, #tpu.memory_space<vmem>>, vector<8x128xf32>,
      %119 = vector.extract_strided_slice %112 {offsets = [0, 384], sizes = [8, 128], strides = [1, 1]} : vector<8x512xf32> to vector<8x128xf32>
      %c0_71 = arith.constant 0 : index
      %c0_72 = arith.constant 0 : index
      %120 = vector.load %arg19[%c0_71, %c0_72] : memref<8x128xf32, #tpu.memory_space<vmem>>, vector<8x128xf32>
      tpu.vector_store %arg19[%c0_71, %c0_72], %119 {strides = array<i32>} : memref<8x128xf32, #tpu.memory_space<vmem>>, vector<8x128xf32>,
    } else {
    }
    %c0 = arith.constant 0 : index
    %c0_1 = arith.constant 0 : index
    %3 = vector.load %arg16[%c0, %c0_1] : memref<8x128xf32, #tpu.memory_space<vmem>>, vector<8x128xf32>
    %c0_2 = arith.constant 0 : index
    %c0_3 = arith.constant 0 : index
    %4 = vector.load %arg18[%c0_2, %c0_3] : memref<8x128xf32, #tpu.memory_space<vmem>>, vector<8x128xf32>
    %c0_4 = arith.constant 0 : index
    %c0_5 = arith.constant 0 : index
    %c0_6 = arith.constant 0 : index
    %5 = vector.load %arg2[%c0_4, %c0_5, %c0_6] : memref<1x8x512xf32, #tpu.memory_space<vmem>>, vector<1x8x512xf32>
    %6 = vector.shape_cast %5 : vector<1x8x512xf32> to vector<8x512xf32>
    %c0_7 = arith.constant 0 : index
    %c0_8 = arith.constant 0 : index
    %7 = vector.load %arg6[%c0_7, %c0_8] : memref<128x512xf32, #tpu.memory_space<vmem>>, vector<128x512xf32>
    %cst = arith.constant dense<0.000000e+00> : vector<8x512xf32>
    %8 = tpu.matmul %4, %7, %cst {dimension_numbers = #tpu.dot_dimension_numbers<[1], [0], [0], [1], [0, 0, 1, 1], [], []>} : vector<8x128xf32>, vector<128x512xf32>, vector<8x512xf32> -> vector<8x512xf32>
    %9 = arith.addf %6, %8 : vector<8x512xf32>
    %c0_9 = arith.constant 0 : index
    %c0_10 = arith.constant 0 : index
    %10 = vector.load %arg7[%c0_9, %c0_10] : memref<128x512xf32, #tpu.memory_space<vmem>>, vector<128x512xf32>
    %cst_11 = arith.constant dense<0.000000e+00> : vector<8x512xf32>
    %11 = tpu.matmul %3, %10, %cst_11 {dimension_numbers = #tpu.dot_dimension_numbers<[1], [0], [0], [1], [0, 0, 1, 1], [], []>} : vector<8x128xf32>, vector<128x512xf32>, vector<8x512xf32> -> vector<8x512xf32>
    %12 = arith.addf %9, %11 : vector<8x512xf32>
    %c0_12 = arith.constant 0 : index
    %c0_13 = arith.constant 0 : index
    %13 = vector.load %arg17[%c0_12, %c0_13] : memref<8x128xf32, #tpu.memory_space<vmem>>, vector<8x128xf32>
    %14 = vector.extract_strided_slice %12 {offsets = [0, 0], sizes = [8, 128], strides = [1, 1]} : vector<8x512xf32> to vector<8x128xf32>
    %15 = arith.negf %14 : vector<8x128xf32>
    %16 = math.exp %15 : vector<8x128xf32>
    %cst_14 = arith.constant 1.000000e+00 : f32
    %17 = vector.broadcast %cst_14 : f32 to vector<8x128xf32>
    %18 = arith.addf %17, %16 : vector<8x128xf32>
    %19 = arith.divf %17, %18 : vector<8x128xf32>
    %20 = vector.extract_strided_slice %12 {offsets = [0, 128], sizes = [8, 128], strides = [1, 1]} : vector<8x512xf32> to vector<8x128xf32>
    %21 = arith.negf %20 : vector<8x128xf32>
    %22 = math.exp %21 : vector<8x128xf32>
    %cst_15 = arith.constant 1.000000e+00 : f32
    %23 = vector.broadcast %cst_15 : f32 to vector<8x128xf32>
    %24 = arith.addf %23, %22 : vector<8x128xf32>
    %25 = arith.divf %23, %24 : vector<8x128xf32>
    %26 = vector.extract_strided_slice %12 {offsets = [0, 256], sizes = [8, 128], strides = [1, 1]} : vector<8x512xf32> to vector<8x128xf32>
    %27 = math.tanh %26 : vector<8x128xf32>
    %28 = vector.extract_strided_slice %12 {offsets = [0, 384], sizes = [8, 128], strides = [1, 1]} : vector<8x512xf32> to vector<8x128xf32>
    %29 = arith.negf %28 : vector<8x128xf32>
    %30 = math.exp %29 : vector<8x128xf32>
    %cst_16 = arith.constant 1.000000e+00 : f32
    %31 = vector.broadcast %cst_16 : f32 to vector<8x128xf32>
    %32 = arith.addf %31, %30 : vector<8x128xf32>
    %33 = arith.divf %31, %32 : vector<8x128xf32>
    %34 = arith.mulf %25, %13 : vector<8x128xf32>
    %35 = arith.mulf %19, %27 : vector<8x128xf32>
    %36 = arith.addf %34, %35 : vector<8x128xf32>
    %37 = math.tanh %36 : vector<8x128xf32>
    %38 = arith.mulf %33, %37 : vector<8x128xf32>
    %c0_17 = arith.constant 0 : index
    %c0_18 = arith.constant 0 : index
    %39 = vector.load %arg16[%c0_17, %c0_18] : memref<8x128xf32, #tpu.memory_space<vmem>>, vector<8x128xf32>
    tpu.vector_store %arg16[%c0_17, %c0_18], %38 {strides = array<i32>} : memref<8x128xf32, #tpu.memory_space<vmem>>, vector<8x128xf32>,
    %c0_19 = arith.constant 0 : index
    %c0_20 = arith.constant 0 : index
    %40 = vector.load %arg17[%c0_19, %c0_20] : memref<8x128xf32, #tpu.memory_space<vmem>>, vector<8x128xf32>
    tpu.vector_store %arg17[%c0_19, %c0_20], %36 {strides = array<i32>} : memref<8x128xf32, #tpu.memory_space<vmem>>, vector<8x128xf32>,
    %c0_21 = arith.constant 0 : index
    %c0_22 = arith.constant 0 : index
    %41 = vector.load %arg8[%c0_21, %c0_22] : memref<128x128xf32, #tpu.memory_space<vmem>>, vector<128x128xf32>
    %cst_23 = arith.constant dense<0.000000e+00> : vector<8x128xf32>
    %42 = tpu.matmul %38, %41, %cst_23 {dimension_numbers = #tpu.dot_dimension_numbers<[1], [0], [0], [1], [0, 0, 1, 1], [], []>} : vector<8x128xf32>, vector<128x128xf32>, vector<8x128xf32> -> vector<8x128xf32>
    %c0_24 = arith.constant 0 : index
    %c0_25 = arith.constant 0 : index
    %43 = vector.load %arg9[%c0_24, %c0_25] : memref<1x128xf32, #tpu.memory_space<vmem>>, vector<1x128xf32>
    %44 = vector.broadcast %43 : vector<1x128xf32> to vector<8x128xf32>
    %45 = arith.addf %42, %44 : vector<8x128xf32>
    %c0_26 = arith.constant 0 : index
    %c0_27 = arith.constant 0 : index
    %c0_28 = arith.constant 0 : index
    %46 = vector.load %arg5[%c0_26, %c0_27, %c0_28] : memref<36x8x128xf32, #tpu.memory_space<vmem>>, vector<36x8x128xf32>
    %47 = vector.shape_cast %45 : vector<8x128xf32> to vector<1x8x128xf32>
    %48 = vector.broadcast %47 : vector<1x8x128xf32> to vector<36x8x128xf32>
    %49 = arith.addf %46, %48 : vector<36x8x128xf32>
    %cst_29 = arith.constant 0.000000e+00 : f32
    %50 = vector.broadcast %cst_29 : f32 to vector<36x8x128xf32>
    %51 = arith.maximumf %49, %50 : vector<36x8x128xf32>
    %c0_30 = arith.constant 0 : index
    %c0_31 = arith.constant 0 : index
    %c0_32 = arith.constant 0 : index
    %52 = vector.load %arg10[%c0_30, %c0_31, %c0_32] : memref<1x1x128xf32, #tpu.memory_space<vmem>>, vector<1x1x128xf32>
    %53 = vector.broadcast %52 : vector<1x1x128xf32> to vector<36x8x128xf32>
    %54 = arith.mulf %51, %53 : vector<36x8x128xf32>
    %cst_33 = arith.constant dense<0.000000e+00> : vector<36x8xf32>
    %55 = vector.multi_reduction <add>, %54, %cst_33 [2] : vector<36x8x128xf32> to vector<36x8xf32>
    %56 = vector.shape_cast %55 : vector<36x8xf32> to vector<36x8x1xf32>
    %cst_34 = arith.constant dense<0xFF800000> : vector<8x1xf32>
    %57 = vector.multi_reduction <maximumf>, %56, %cst_34 [0] : vector<36x8x1xf32> to vector<8x1xf32>
    %58 = vector.shape_cast %57 : vector<8x1xf32> to vector<1x8x1xf32>
    %59 = vector.broadcast %58 : vector<1x8x1xf32> to vector<36x8x1xf32>
    %60 = arith.subf %56, %59 : vector<36x8x1xf32>
    %61 = math.exp %60 : vector<36x8x1xf32>
    %cst_35 = arith.constant dense<0.000000e+00> : vector<8x1xf32>
    %62 = vector.multi_reduction <add>, %61, %cst_35 [0] : vector<36x8x1xf32> to vector<8x1xf32>
    %63 = vector.shape_cast %62 : vector<8x1xf32> to vector<1x8x1xf32>
    %64 = vector.broadcast %63 : vector<1x8x1xf32> to vector<36x8x1xf32>
    %65 = arith.divf %61, %64 : vector<36x8x1xf32>
    %c0_36 = arith.constant 0 : index
    %c0_37 = arith.constant 0 : index
    %c0_38 = arith.constant 0 : index
    %66 = vector.load %arg4[%c0_36, %c0_37, %c0_38] : memref<36x8x64xf32, #tpu.memory_space<vmem>>, vector<36x8x64xf32>
    %67 = vector.broadcast %65 : vector<36x8x1xf32> to vector<36x8x64xf32>
    %68 = arith.mulf %66, %67 : vector<36x8x64xf32>
    %cst_39 = arith.constant dense<0.000000e+00> : vector<8x64xf32>
    %69 = vector.multi_reduction <add>, %68, %cst_39 [0] : vector<36x8x64xf32> to vector<8x64xf32>
    %c0_40 = arith.constant 0 : index
    %c0_41 = arith.constant 0 : index
    %70 = vector.load %arg11[%c0_40, %c0_41] : memref<64x512xf32, #tpu.memory_space<vmem>>, vector<64x512xf32>
    %cst_42 = arith.constant dense<0.000000e+00> : vector<8x512xf32>
    %71 = tpu.matmul %69, %70, %cst_42 {dimension_numbers = #tpu.dot_dimension_numbers<[1], [0], [0], [1], [0, 0, 1, 1], [], []>} : vector<8x64xf32>, vector<64x512xf32>, vector<8x512xf32> -> vector<8x512xf32>
    %c0_43 = arith.constant 0 : index
    %c0_44 = arith.constant 0 : index
    %72 = vector.load %arg12[%c0_43, %c0_44] : memref<128x512xf32, #tpu.memory_space<vmem>>, vector<128x512xf32>
    %cst_45 = arith.constant dense<0.000000e+00> : vector<8x512xf32>
    %73 = tpu.matmul %38, %72, %cst_45 {dimension_numbers = #tpu.dot_dimension_numbers<[1], [0], [0], [1], [0, 0, 1, 1], [], []>} : vector<8x128xf32>, vector<128x512xf32>, vector<8x512xf32> -> vector<8x512xf32>
    %74 = arith.addf %71, %73 : vector<8x512xf32>
    %c0_46 = arith.constant 0 : index
    %c0_47 = arith.constant 0 : index
    %75 = vector.load %arg13[%c0_46, %c0_47] : memref<128x512xf32, #tpu.memory_space<vmem>>, vector<128x512xf32>
    %cst_48 = arith.constant dense<0.000000e+00> : vector<8x512xf32>
    %76 = tpu.matmul %4, %75, %cst_48 {dimension_numbers = #tpu.dot_dimension_numbers<[1], [0], [0], [1], [0, 0, 1, 1], [], []>} : vector<8x128xf32>, vector<128x512xf32>, vector<8x512xf32> -> vector<8x512xf32>
    %77 = arith.addf %74, %76 : vector<8x512xf32>
    %c0_49 = arith.constant 0 : index
    %c0_50 = arith.constant 0 : index
    %78 = vector.load %arg14[%c0_49, %c0_50] : memref<1x512xf32, #tpu.memory_space<vmem>>, vector<1x512xf32>
    %79 = vector.broadcast %78 : vector<1x512xf32> to vector<8x512xf32>
    %80 = arith.addf %77, %79 : vector<8x512xf32>
    %c0_51 = arith.constant 0 : index
    %c0_52 = arith.constant 0 : index
    %81 = vector.load %arg19[%c0_51, %c0_52] : memref<8x128xf32, #tpu.memory_space<vmem>>, vector<8x128xf32>
    %82 = vector.extract_strided_slice %80 {offsets = [0, 0], sizes = [8, 128], strides = [1, 1]} : vector<8x512xf32> to vector<8x128xf32>
    %83 = arith.negf %82 : vector<8x128xf32>
    %84 = math.exp %83 : vector<8x128xf32>
    %cst_53 = arith.constant 1.000000e+00 : f32
    %85 = vector.broadcast %cst_53 : f32 to vector<8x128xf32>
    %86 = arith.addf %85, %84 : vector<8x128xf32>
    %87 = arith.divf %85, %86 : vector<8x128xf32>
    %88 = vector.extract_strided_slice %80 {offsets = [0, 128], sizes = [8, 128], strides = [1, 1]} : vector<8x512xf32> to vector<8x128xf32>
    %89 = arith.negf %88 : vector<8x128xf32>
    %90 = math.exp %89 : vector<8x128xf32>
    %cst_54 = arith.constant 1.000000e+00 : f32
    %91 = vector.broadcast %cst_54 : f32 to vector<8x128xf32>
    %92 = arith.addf %91, %90 : vector<8x128xf32>
    %93 = arith.divf %91, %92 : vector<8x128xf32>
    %94 = vector.extract_strided_slice %80 {offsets = [0, 256], sizes = [8, 128], strides = [1, 1]} : vector<8x512xf32> to vector<8x128xf32>
    %95 = math.tanh %94 : vector<8x128xf32>
    %96 = vector.extract_strided_slice %80 {offsets = [0, 384], sizes = [8, 128], strides = [1, 1]} : vector<8x512xf32> to vector<8x128xf32>
    %97 = arith.negf %96 : vector<8x128xf32>
    %98 = math.exp %97 : vector<8x128xf32>
    %cst_55 = arith.constant 1.000000e+00 : f32
    %99 = vector.broadcast %cst_55 : f32 to vector<8x128xf32>
    %100 = arith.addf %99, %98 : vector<8x128xf32>
    %101 = arith.divf %99, %100 : vector<8x128xf32>
    %102 = arith.mulf %93, %81 : vector<8x128xf32>
    %103 = arith.mulf %87, %95 : vector<8x128xf32>
    %104 = arith.addf %102, %103 : vector<8x128xf32>
    %105 = math.tanh %104 : vector<8x128xf32>
    %106 = arith.mulf %101, %105 : vector<8x128xf32>
    %c0_56 = arith.constant 0 : index
    %c0_57 = arith.constant 0 : index
    %107 = vector.load %arg18[%c0_56, %c0_57] : memref<8x128xf32, #tpu.memory_space<vmem>>, vector<8x128xf32>
    tpu.vector_store %arg18[%c0_56, %c0_57], %106 {strides = array<i32>} : memref<8x128xf32, #tpu.memory_space<vmem>>, vector<8x128xf32>,
    %c0_58 = arith.constant 0 : index
    %c0_59 = arith.constant 0 : index
    %108 = vector.load %arg19[%c0_58, %c0_59] : memref<8x128xf32, #tpu.memory_space<vmem>>, vector<8x128xf32>
    tpu.vector_store %arg19[%c0_58, %c0_59], %104 {strides = array<i32>} : memref<8x128xf32, #tpu.memory_space<vmem>>, vector<8x128xf32>,
    %c0_60 = arith.constant 0 : index
    %c0_61 = arith.constant 0 : index
    %c0_62 = arith.constant 0 : index
    %109 = vector.load %arg15[%c0_60, %c0_61, %c0_62] : memref<1x8x128xf32, #tpu.memory_space<vmem>>, vector<1x8x128xf32>
    %110 = vector.shape_cast %109 : vector<1x8x128xf32> to vector<8x128xf32>
    %111 = vector.shape_cast %106 : vector<8x128xf32> to vector<1x8x128xf32>
    tpu.vector_store %arg15[%c0_60, %c0_61, %c0_62], %111 {strides = array<i32>} : memref<1x8x128xf32, #tpu.memory_space<vmem>>, vector<1x8x128xf32>,
    return
  }
  func.func @transform_0(%arg0: i32, %arg1: i32) -> (i32, i32, i32) {
    %c0_i32 = arith.constant 0 : i32
    %c0_i32_0 = arith.constant 0 : i32
    return %arg1, %arg0, %c0_i32 : i32, i32, i32
  }
  func.func @transform_1(%arg0: i32, %arg1: i32) -> (i32, i32) {
    %c0_i32 = arith.constant 0 : i32
    %c0_i32_0 = arith.constant 0 : i32
    return %arg0, %c0_i32 : i32, i32
  }
  func.func @transform_2(%arg0: i32, %arg1: i32) -> (i32, i32, i32) {
    %c0_i32 = arith.constant 0 : i32
    %c0_i32_0 = arith.constant 0 : i32
    %c0_i32_1 = arith.constant 0 : i32
    return %c0_i32, %arg0, %c0_i32_0 : i32, i32, i32
  }
  func.func @transform_3(%arg0: i32, %arg1: i32) -> (i32, i32, i32) {
    %c0_i32 = arith.constant 0 : i32
    %c0_i32_0 = arith.constant 0 : i32
    %c0_i32_1 = arith.constant 0 : i32
    return %c0_i32, %arg0, %c0_i32_0 : i32, i32, i32
  }
  func.func @transform_4(%arg0: i32, %arg1: i32) -> (i32, i32) {
    %c0_i32 = arith.constant 0 : i32
    %c0_i32_0 = arith.constant 0 : i32
    %c0_i32_1 = arith.constant 0 : i32
    return %c0_i32, %c0_i32_0 : i32, i32
  }
  func.func @transform_5(%arg0: i32, %arg1: i32) -> (i32, i32) {
    %c0_i32 = arith.constant 0 : i32
    %c0_i32_0 = arith.constant 0 : i32
    %c0_i32_1 = arith.constant 0 : i32
    return %c0_i32, %c0_i32_0 : i32, i32
  }
  func.func @transform_6(%arg0: i32, %arg1: i32) -> (i32, i32) {
    %c0_i32 = arith.constant 0 : i32
    %c0_i32_0 = arith.constant 0 : i32
    %c0_i32_1 = arith.constant 0 : i32
    return %c0_i32, %c0_i32_0 : i32, i32
  }
  func.func @transform_7(%arg0: i32, %arg1: i32) -> (i32, i32) {
    %c0_i32 = arith.constant 0 : i32
    %c0_i32_0 = arith.constant 0 : i32
    %c0_i32_1 = arith.constant 0 : i32
    return %c0_i32, %c0_i32_0 : i32, i32
  }
  func.func @transform_8(%arg0: i32, %arg1: i32) -> (i32, i32, i32) {
    %c0_i32 = arith.constant 0 : i32
    %c0_i32_0 = arith.constant 0 : i32
    %c0_i32_1 = arith.constant 0 : i32
    %c0_i32_2 = arith.constant 0 : i32
    return %c0_i32, %c0_i32_0, %c0_i32_1 : i32, i32, i32
  }
  func.func @transform_9(%arg0: i32, %arg1: i32) -> (i32, i32) {
    %c0_i32 = arith.constant 0 : i32
    %c0_i32_0 = arith.constant 0 : i32
    %c0_i32_1 = arith.constant 0 : i32
    return %c0_i32, %c0_i32_0 : i32, i32
  }
  func.func @transform_10(%arg0: i32, %arg1: i32) -> (i32, i32) {
    %c0_i32 = arith.constant 0 : i32
    %c0_i32_0 = arith.constant 0 : i32
    %c0_i32_1 = arith.constant 0 : i32
    return %c0_i32, %c0_i32_0 : i32, i32
  }
  func.func @transform_11(%arg0: i32, %arg1: i32) -> (i32, i32) {
    %c0_i32 = arith.constant 0 : i32
    %c0_i32_0 = arith.constant 0 : i32
    %c0_i32_1 = arith.constant 0 : i32
    return %c0_i32, %c0_i32_0 : i32, i32
  }
  func.func @transform_12(%arg0: i32, %arg1: i32) -> (i32, i32) {
    %c0_i32 = arith.constant 0 : i32
    %c0_i32_0 = arith.constant 0 : i32
    %c0_i32_1 = arith.constant 0 : i32
    return %c0_i32, %c0_i32_0 : i32, i32
  }
  func.func @transform_13(%arg0: i32, %arg1: i32) -> (i32, i32, i32) {
    %c0_i32 = arith.constant 0 : i32
    %c0_i32_0 = arith.constant 0 : i32
    return %arg1, %arg0, %c0_i32 : i32, i32, i32
  }
}

</mosaic_0001>

<llo_original>
// kernel: topdown_decoder_forward.3
$region0: #{topdown_decoder_forward.3}
  #allocation0 [shape = 'u32[]', space=smem, size = 0x4, offset = 0x4, fixed_abs, tag = 'smem constant byte address 0x4 - core index']
  #allocation1 [shape = 'u32[144,128]{1,0:T(1,128)}', space=vmem, size = 0x12000, scoped, tag = 'internal scratch']
  %s0 = inlined_call_operand.vmem [shape: f32[56,128], index: 0, kind: input, shape index: {}]
  %s1 = inlined_call_operand.vmem [shape: f32[128,256], index: 1, kind: input, shape index: {}]
  %s2 = inlined_call_operand.vmem [shape: f32[1,256], index: 2, kind: input, shape index: {}]
  %s3 = inlined_call_operand.vmem [shape: f32[56,256], index: 3, kind: output, shape index: {}]
  %s4 = sld [smem:[#allocation0]]
  $region22: #{topdown_decoder_forward.3} parent=0
    _
  %s6 = ssub.s32 1, %s4
  %s7 = scalar_select 0, %s6, %s4
  // Predicated region
  $region2: #{topdown_decoder_forward.3} parent=0 // pred_check
    _
  $region3: #{topdown_decoder_forward.3} parent=0 // pred_check_branch
    %9 = sbr.rel (0) target = $region5
  $region4: #{topdown_decoder_forward.3} parent=0 // pred_region
    _
  $region5: #{topdown_decoder_forward.3} parent=0 // pred_fallthru
    _
  // Predicated region
  $region6: #{topdown_decoder_forward.3} parent=0 // pred_check
    _
  $region7: #{topdown_decoder_forward.3} parent=0 // pred_check_branch
    %11 = sbr.rel (0) target = $region9
  $region8: #{topdown_decoder_forward.3} parent=0 // pred_region
    _
  $region9: #{topdown_decoder_forward.3} parent=0 // pred_fallthru
    _
  // Predicated region
  $region10: #{topdown_decoder_forward.3} parent=0 // pred_check
    _
  $region11: #{topdown_decoder_forward.3} parent=0 // pred_check_branch
    %13 = sbr.rel (0) target = $region13
  $region12: #{topdown_decoder_forward.3} parent=0 // pred_region
    _
  $region13: #{topdown_decoder_forward.3} parent=0 // pred_fallthru
    _
  %v14 = vld [vmem:[%s0] sm:$0xff]
  %v15 = vld [vmem:[%s0 + $0x8] sm:$0xff]
  %v16 = vld [vmem:[%s0 + $0x10] sm:$0xff]
  %v17 = vld [vmem:[%s0 + $0x18] sm:$0xff]
  %v18 = vld [vmem:[%s0 + $0x20] sm:$0xff]
  %v19 = vld [vmem:[%s0 + $0x28] sm:$0xff]
  %v20 = vld [vmem:[%s0 + $0x30] sm:$0xff]
  %v21 = vld [vmem:[%s1] sm:$0xff]
  %v22 = vld [vmem:[%s1 + $0x8] sm:$0xff]
  %v23 = vld [vmem:[%s1 + $0x10] sm:$0xff]
  %v24 = vld [vmem:[%s1 + $0x18] sm:$0xff]
  %v25 = vld [vmem:[%s1 + $0x20] sm:$0xff]
  %v26 = vld [vmem:[%s1 + $0x28] sm:$0xff]
  %v27 = vld [vmem:[%s1 + $0x30] sm:$0xff]
  %v28 = vld [vmem:[%s1 + $0x38] sm:$0xff]
  %v29 = vld [vmem:[%s1 + $0x40] sm:$0xff]
  %v30 = vld [vmem:[%s1 + $0x48] sm:$0xff]
  %v31 = vld [vmem:[%s1 + $0x50] sm:$0xff]
  %v32 = vld [vmem:[%s1 + $0x58] sm:$0xff]
  %v33 = vld [vmem:[%s1 + $0x60] sm:$0xff]
  %v34 = vld [vmem:[%s1 + $0x68] sm:$0xff]
  %v35 = vld [vmem:[%s1 + $0x70] sm:$0xff]
  %v36 = vld [vmem:[%s1 + $0x78] sm:$0xff]
  %v37 = vld [vmem:[%s1 + $0x80] sm:$0xff]
  %v38 = vld [vmem:[%s1 + $0x88] sm:$0xff]
  %v39 = vld [vmem:[%s1 + $0x90] sm:$0xff]
  %v40 = vld [vmem:[%s1 + $0x98] sm:$0xff]
  %v41 = vld [vmem:[%s1 + $0xa0] sm:$0xff]
  %v42 = vld [vmem:[%s1 + $0xa8] sm:$0xff]
  %v43 = vld [vmem:[%s1 + $0xb0] sm:$0xff]
  %v44 = vld [vmem:[%s1 + $0xb8] sm:$0xff]
  %v45 = vld [vmem:[%s1 + $0xc0] sm:$0xff]
  %v46 = vld [vmem:[%s1 + $0xc8] sm:$0xff]
  %v47 = vld [vmem:[%s1 + $0xd0] sm:$0xff]
  %v48 = vld [vmem:[%s1 + $0xd8] sm:$0xff]
  %v49 = vld [vmem:[%s1 + $0xe0] sm:$0xff]
  %v50 = vld [vmem:[%s1 + $0xe8] sm:$0xff]
  %v51 = vld [vmem:[%s1 + $0xf0] sm:$0xff]
  %v52 = vld [vmem:[%s1 + $0xf8] sm:$0xff]
  %v53 = vld [vmem:[%s2] sm:$0x3]
  %v55 = vlaneseq
  %v56 = vshrl.u32 %v55, 7
  %v57 = vsub.s32 0, %v56
  %v58 = vrot.slane %v53, %v57
  %v59 = vlaneseq
  %v60 = vshrl.u32 %v59, 7
  %v61 = vsub.s32 1, %v60
  %v62 = vrot.slane %v53, %v61
  %65 = vmatprep.subr.mxu0 %v22
  %66 = vmatpush1.msra.mxu0 %v21
  %67 = vmatprep.subr.mxu0 %v24
  %68 = vmatpush1.msra.mxu0 %v23
  %69 = vmatprep.subr.mxu0 %v26
  %70 = vmatpush1.msra.mxu0 %v25
  %71 = vmatprep.subr.mxu0 %v28
  %72 = vmatpush1.msra.mxu0 %v27
  %73 = vmatprep.subr.mxu0 %v30
  %74 = vmatpush1.msra.mxu0 %v29
  %75 = vmatprep.subr.mxu0 %v32
  %76 = vmatpush1.msra.mxu0 %v31
  %77 = vmatprep.subr.mxu0 %v34
  %78 = vmatpush1.msra.mxu0 %v33
  %79 = vmatprep.subr.mxu0 %v36
  %80 = vmatpush1.msra.mxu0 %v35
  %81 = vmatprep.subr.mxu0 %v38
  %82 = vmatpush1.msra.mxu0 %v37
  %83 = vmatprep.subr.mxu0 %v40
  %84 = vmatpush1.msra.mxu0 %v39
  %85 = vmatprep.subr.mxu0 %v42
  %86 = vmatpush1.msra.mxu0 %v41
  %87 = vmatprep.subr.mxu0 %v44
  %88 = vmatpush1.msra.mxu0 %v43
  %89 = vmatprep.subr.mxu0 %v46
  %90 = vmatpush1.msra.mxu0 %v45
  %91 = vmatprep.subr.mxu0 %v48
  %92 = vmatpush1.msra.mxu0 %v47
  %93 = vmatprep.subr.mxu0 %v50
  %94 = vmatpush1.msra.mxu0 %v49
  %95 = vmatprep.subr.mxu0 %v52
  %96 = vmatpush1.msra.mxu0 %v51
  %97 = vmatprep.subr.mxu0 0.0
  %98 = vmatpush1.msra.mxu0 0.0
  %99 = vmatprep.subr.mxu0 0.0
  %100 = vmatpush1.msra.mxu0 0.0
  %101 = vmatprep.subr.mxu0 0.0
  %102 = vmatpush1.msra.mxu0 0.0
  %103 = vmatprep.subr.mxu0 0.0
  %104 = vmatpush1.msra.mxu0 0.0
  %105 = vmatprep.subr.mxu0 0.0
  %106 = vmatpush1.msra.mxu0 0.0
  %107 = vmatprep.subr.mxu0 0.0
  %108 = vmatpush1.msra.mxu0 0.0
  %109 = vmatprep.subr.mxu0 0.0
  %110 = vmatpush1.msra.mxu0 0.0
  %111 = vmatprep.subr.mxu0 0.0
  %112 = vmatpush1.msra.mxu0 0.0
  %113 = vmatprep.subr.mxu0 0.0
  %114 = vmatpush1.msra.mxu0 0.0
  %115 = vmatprep.subr.mxu0 0.0
  %116 = vmatpush1.msra.mxu0 0.0
  %117 = vmatprep.subr.mxu0 0.0
  %118 = vmatpush1.msra.mxu0 0.0
  %119 = vmatprep.subr.mxu0 0.0
  %120 = vmatpush1.msra.mxu0 0.0
  %121 = vmatprep.subr.mxu0 0.0
  %122 = vmatpush1.msra.mxu0 0.0
  %123 = vmatprep.subr.mxu0 0.0
  %124 = vmatpush1.msra.mxu0 0.0
  %125 = vmatprep.subr.mxu0 0.0
  %126 = vmatpush1.msra.mxu0 0.0
  %127 = vmatprep.subr.mxu0 0.0
  %128 = vmatpush1.msra.mxu0 0.0
  %129 = vmatprep.mubr.f32.mxu0 0.0
  %130 = vmatmul.mubr.f32.gmra.mrb[0].mxu0 %v14
  %v131 = vpop.f32.mrb[0].mxu0
  %v132 = vadd.f32 %v58, %v131
  %v133 = vpop.f32.mrb[0].mxu0
  %v134 = vadd.f32 %v62, %v133
  %135 = vmatprep.mubr.f32.mxu0 0.0
  %136 = vmatmul.mubr.f32.gmra.mrb[0].mxu0 %v15
  %v137 = vpop.f32.mrb[0].mxu0
  %v138 = vadd.f32 %v58, %v137
  %v139 = vpop.f32.mrb[0].mxu0
  %v140 = vadd.f32 %v62, %v139
  %141 = vmatprep.mubr.f32.mxu0 0.0
  %142 = vmatmul.mubr.f32.gmra.mrb[0].mxu0 %v16
  %v143 = vpop.f32.mrb[0].mxu0
  %v144 = vadd.f32 %v58, %v143
  %v145 = vpop.f32.mrb[0].mxu0
  %v146 = vadd.f32 %v62, %v145
  %147 = vmatprep.mubr.f32.mxu0 0.0
  %148 = vmatmul.mubr.f32.gmra.mrb[0].mxu0 %v17
  %v149 = vpop.f32.mrb[0].mxu0
  %v150 = vadd.f32 %v58, %v149
  %v151 = vpop.f32.mrb[0].mxu0
  %v152 = vadd.f32 %v62, %v151
  %153 = vmatprep.mubr.f32.mxu0 0.0
  %154 = vmatmul.mubr.f32.gmra.mrb[0].mxu0 %v18
  %v155 = vpop.f32.mrb[0].mxu0
  %v156 = vadd.f32 %v58, %v155
  %v157 = vpop.f32.mrb[0].mxu0
  %v158 = vadd.f32 %v62, %v157
  %159 = vmatprep.mubr.f32.mxu0 0.0
  %160 = vmatmul.mubr.f32.gmra.mrb[0].mxu0 %v19
  %v161 = vpop.f32.mrb[0].mxu0
  %v162 = vadd.f32 %v58, %v161
  %v163 = vpop.f32.mrb[0].mxu0
  %v164 = vadd.f32 %v62, %v163
  %165 = vmatprep.mubr.f32.mxu0 0.0
  %166 = vmatmul.mubr.f32.gmra.mrb[0].mxu0 %v20
  %v167 = vpop.f32.mrb[0].mxu0
  %v168 = vadd.f32 %v58, %v167
  %v169 = vpop.f32.mrb[0].mxu0
  %v170 = vadd.f32 %v62, %v169
  %171 = vdwg.mxu0
  %172 = vst [vmem:[%s3] sm:$0xff] %v132
  %173 = vst [vmem:[%s3 + $0x8] sm:$0xff] %v134
  %174 = vst [vmem:[%s3 + $0x10] sm:$0xff] %v138
  %175 = vst [vmem:[%s3 + $0x18] sm:$0xff] %v140
  %176 = vst [vmem:[%s3 + $0x20] sm:$0xff] %v144
  %177 = vst [vmem:[%s3 + $0x28] sm:$0xff] %v146
  %178 = vst [vmem:[%s3 + $0x30] sm:$0xff] %v150
  %179 = vst [vmem:[%s3 + $0x38] sm:$0xff] %v152
  %180 = vst [vmem:[%s3 + $0x40] sm:$0xff] %v156
  %181 = vst [vmem:[%s3 + $0x48] sm:$0xff] %v158
  %182 = vst [vmem:[%s3 + $0x50] sm:$0xff] %v162
  %183 = vst [vmem:[%s3 + $0x58] sm:$0xff] %v164
  %184 = vst [vmem:[%s3 + $0x60] sm:$0xff] %v168
  %185 = vst [vmem:[%s3 + $0x68] sm:$0xff] %v170
  // Predicated region
  $region14: #{topdown_decoder_forward.3} parent=0 // pred_check
    _
  $region15: #{topdown_decoder_forward.3} parent=0 // pred_check_branch
    %187 = sbr.rel (0) target = $region17
  $region16: #{topdown_decoder_forward.3} parent=0 // pred_region
    _
  $region17: #{topdown_decoder_forward.3} parent=0 // pred_fallthru
    _
  // Predicated region
  $region18: #{topdown_decoder_forward.3} parent=0 // pred_check
    _
  $region19: #{topdown_decoder_forward.3} parent=0 // pred_check_branch
    %189 = sbr.rel (0) target = $region21
  $region20: #{topdown_decoder_forward.3} parent=0 // pred_region
    _
  $region21: #{topdown_decoder_forward.3} parent=0 // pred_fallthru
    _

// kernel: topdown_decoder_forward.2
$region0: #{topdown_decoder_forward.2}
  #allocation0 [shape = 'u32[]', space=smem, size = 0x4, offset = 0x4, fixed_abs, tag = 'smem constant byte address 0x4 - core index']
  #allocation1 [shape = 'u32[144,128]{1,0:T(1,128)}', space=vmem, size = 0x12000, scoped, tag = 'internal scratch']
  #allocation2 [shape = 'f32[8,128]{1,0:T(8,128)}', space=vmem, size = 0x1000, scoped, tag = 'scratch operand']
  #allocation3 [shape = 'f32[8,128]{1,0:T(8,128)}', space=vmem, size = 0x1000, scoped, tag = 'scratch operand']
  #allocation4 [shape = 'f32[8,128]{1,0:T(8,128)}', space=vmem, size = 0x1000, scoped, tag = 'scratch operand']
  #allocation5 [shape = 'f32[8,128]{1,0:T(8,128)}', space=vmem, size = 0x1000, scoped, tag = 'scratch operand']
  %s0 = inlined_call_operand.vmem [shape: f32[7,8,512], index: 0, kind: input, shape index: {}]
  %s1 = inlined_call_operand.vmem [shape: f32[8,512], index: 1, kind: input, shape index: {}]
  %s2 = inlined_call_operand.vmem [shape: f32[36,8,64], index: 2, kind: input, shape index: {}]
  %s3 = inlined_call_operand.vmem [shape: f32[36,8,128], index: 3, kind: input, shape index: {}]
  %s4 = inlined_call_operand.vmem [shape: f32[128,512], index: 4, kind: input, shape index: {}]
  %s5 = inlined_call_operand.vmem [shape: f32[128,512], index: 5, kind: input, shape index: {}]
  %s6 = inlined_call_operand.vmem [shape: f32[128,128], index: 6, kind: input, shape index: {}]
  %s7 = inlined_call_operand.vmem [shape: f32[1,128], index: 7, kind: input, shape index: {}]
  %s8 = inlined_call_operand.vmem [shape: f32[1,1,128], index: 8, kind: input, shape index: {}]
  %s9 = inlined_call_operand.vmem [shape: f32[64,512], index: 9, kind: input, shape index: {}]
  %s10 = inlined_call_operand.vmem [shape: f32[128,512], index: 10, kind: input, shape index: {}]
  %s11 = inlined_call_operand.vmem [shape: f32[128,512], index: 11, kind: input, shape index: {}]
  %s12 = inlined_call_operand.vmem [shape: f32[1,512], index: 12, kind: input, shape index: {}]
  %s13 = inlined_call_operand.vmem [shape: f32[7,8,128], index: 13, kind: output, shape index: {}]
  %s14 = sld [smem:[#allocation0]]
  $region89: #{topdown_decoder_forward.2} parent=0
    _
  %s16 = ssub.s32 1, %s14
  %s17 = scalar_select 0, %s16, %s14
  loop: start=0, step=1, limit=9
  $region2: #{topdown_decoder_forward.2} parent=0 // loop_pre_header
    _
  $region3: #{topdown_decoder_forward.2} parent=0 // loop_header
    %s19 = sphi 0, %s23
    %p20 = scmp.ge.s32.totalorder %s19, 9
    %s26 = sphi 0, %s38
    %s27 = sphi 0, %s34
    %s28 = sphi 0, %s26
    %s29 = sphi 0, %s27
    %s30 = sphi 0, %s28
    %s31 = sphi 0, %s29
    %s43 = sphi 0, %s45
    %s46 = sphi 0, %s43
    %s47 = sphi 0, %s46
    %s63 = sphi 0, %s47
    %s69 = sphi 0, %s71
    %s72 = sphi 0, %s69
    %s73 = sphi 0, %s72
    %s89 = sphi 0, %s73
    %s95 = sphi 0, %s97
    %s98 = sphi 0, %s95
    %s99 = sphi 0, %s98
    %s115 = sphi 0, %s99
    %s121 = sphi 0, %s123
    %s124 = sphi 0, %s121
    %s125 = sphi 0, %s124
    %s141 = sphi 0, %s125
    %s145 = sphi 0, %s145
    %s147 = sphi 0, %s145
    %s148 = sphi 0, %s147
    %s162 = sphi 0, %s148
    %s166 = sphi 0, %s166
    %s168 = sphi 0, %s166
    %s169 = sphi 0, %s168
    %s183 = sphi 0, %s169
    %s187 = sphi 0, %s187
    %s189 = sphi 0, %s187
    %s190 = sphi 0, %s189
    %s204 = sphi 0, %s190
    %s208 = sphi 0, %s208
    %s210 = sphi 0, %s208
    %s211 = sphi 0, %s210
    %s225 = sphi 0, %s211
    %s229 = sphi 0, %s229
    %s231 = sphi 0, %s229
    %s232 = sphi 0, %s231
    %s246 = sphi 0, %s232
    %s250 = sphi 0, %s250
    %s252 = sphi 0, %s250
    %s253 = sphi 0, %s252
    %s267 = sphi 0, %s253
    %s271 = sphi 0, %s271
    %s273 = sphi 0, %s271
    %s274 = sphi 0, %s273
    %s288 = sphi 0, %s274
    %s292 = sphi 0, %s292
    %s294 = sphi 0, %s292
    %s295 = sphi 0, %s294
    %s309 = sphi 0, %s295
    %s313 = sphi 0, %s313
    %s315 = sphi 0, %s313
    %s316 = sphi 0, %s315
    %s330 = sphi 0, %s316
    %s338 = sphi 0, %s340
    %s341 = sphi 0, %s338
    %s342 = sphi 0, %s341
    %s358 = sphi 0, %s342
  $region4: #{topdown_decoder_forward.2} parent=0 // loop_header_branch
    %22 = sbr.rel (%p20) target = $region8
  $region5: #{topdown_decoder_forward.2} parent=0 // loop_body
    %s24 = ssub.s32 %s19, 1
    %s25 = ssub.s32 %s19, 2
    %s32 = sadd.s32 1, %s27
    %p33 = scmp.ge.s32.totalorder %s32, 7
    %s34 = scalar_select %p33, 0, %s32
    %s35 = sadd.s32 1, %s26
    %s36 = scalar_select %p33, %s35, %s26
    %p37 = scmp.ge.s32.totalorder %s36, 1
    %s38 = scalar_select %p37, 0, %s36
    %s39 = ssub.s32 %s27, %s34
    %s40 = ssub.s32 %s26, %s38
    %s41 = sor.u32 %s39, %s40
    %p42 = scmp.eq.s32.totalorder %s41, 0
    %s44 = sadd.s32 %s43, 1
    %s45 = scalar_select %p42, %s43, %s44
    %p48 = pneg %p42
    %p49 = scmp.eq.s32.totalorder %s19, 6
    %p50 = por %p48, %p49
    %p51 = scmp.ne.s32.totalorder %s43, %s46
    %p52 = scmp.eq.s32.totalorder %s19, 0
    %p53 = por %p51, %p52
    %p54 = scmp.ne.s32.totalorder %s43, %s46
    %p55 = scmp.eq.s32.totalorder %s24, 6
    %p56 = por %p54, %p55
    %p57 = scmp.ne.s32.totalorder %s46, %s47
    %p58 = scmp.eq.s32.totalorder %s24, 0
    %p59 = por %p57, %p58
    %p60 = scmp.ne.s32.totalorder %s46, %s47
    %p61 = scmp.eq.s32.totalorder %s25, 6
    %p62 = por %p60, %p61
    %p64 = scmp.ne.s32.totalorder %s47, %s63
    %p65 = scmp.eq.s32.totalorder %s25, 0
    %p66 = por %p64, %p65
    %s67 = ssub.s32 %s26, %s38
    %p68 = scmp.eq.s32.totalorder %s67, 0
    %s70 = sadd.s32 %s69, 1
    %s71 = scalar_select %p68, %s69, %s70
    %p74 = pneg %p68
    %p75 = scmp.eq.s32.totalorder %s19, 6
    %p76 = por %p74, %p75
    %p77 = scmp.ne.s32.totalorder %s69, %s72
    %p78 = scmp.eq.s32.totalorder %s19, 0
    %p79 = por %p77, %p78
    %p80 = scmp.ne.s32.totalorder %s69, %s72
    %p81 = scmp.eq.s32.totalorder %s24, 6
    %p82 = por %p80, %p81
    %p83 = scmp.ne.s32.totalorder %s72, %s73
    %p84 = scmp.eq.s32.totalorder %s24, 0
    %p85 = por %p83, %p84
    %p86 = scmp.ne.s32.totalorder %s72, %s73
    %p87 = scmp.eq.s32.totalorder %s25, 6
    %p88 = por %p86, %p87
    %p90 = scmp.ne.s32.totalorder %s73, %s89
    %p91 = scmp.eq.s32.totalorder %s25, 0
    %p92 = por %p90, %p91
    %s93 = ssub.s32 %s26, %s38
    %p94 = scmp.eq.s32.totalorder %s93, 0
    %s96 = sadd.s32 %s95, 1
    %s97 = scalar_select %p94, %s95, %s96
    %p100 = pneg %p94
    %p101 = scmp.eq.s32.totalorder %s19, 6
    %p102 = por %p100, %p101
    %p103 = scmp.ne.s32.totalorder %s95, %s98
    %p104 = scmp.eq.s32.totalorder %s19, 0
    %p105 = por %p103, %p104
    %p106 = scmp.ne.s32.totalorder %s95, %s98
    %p107 = scmp.eq.s32.totalorder %s24, 6
    %p108 = por %p106, %p107
    %p109 = scmp.ne.s32.totalorder %s98, %s99
    %p110 = scmp.eq.s32.totalorder %s24, 0
    %p111 = por %p109, %p110
    %p112 = scmp.ne.s32.totalorder %s98, %s99
    %p113 = scmp.eq.s32.totalorder %s25, 6
    %p114 = por %p112, %p113
    %p116 = scmp.ne.s32.totalorder %s99, %s115
    %p117 = scmp.eq.s32.totalorder %s25, 0
    %p118 = por %p116, %p117
    %s119 = ssub.s32 %s26, %s38
    %p120 = scmp.eq.s32.totalorder %s119, 0
    %s122 = sadd.s32 %s121, 1
    %s123 = scalar_select %p120, %s121, %s122
    %p126 = pneg %p120
    %p127 = scmp.eq.s32.totalorder %s19, 6
    %p128 = por %p126, %p127
    %p129 = scmp.ne.s32.totalorder %s121, %s124
    %p130 = scmp.eq.s32.totalorder %s19, 0
    %p131 = por %p129, %p130
    %p132 = scmp.ne.s32.totalorder %s121, %s124
    %p133 = scmp.eq.s32.totalorder %s24, 6
    %p134 = por %p132, %p133
    %p135 = scmp.ne.s32.totalorder %s124, %s125
    %p136 = scmp.eq.s32.totalorder %s24, 0
    %p137 = por %p135, %p136
    %p138 = scmp.ne.s32.totalorder %s124, %s125
    %p139 = scmp.eq.s32.totalorder %s25, 6
    %p140 = por %p138, %p139
    %p142 = scmp.ne.s32.totalorder %s125, %s141
    %p143 = scmp.eq.s32.totalorder %s25, 0
    %p144 = por %p142, %p143
    %s146 = sadd.s32 %s145, 1
    %p149 = scmp.eq.s32.totalorder %s19, 6
    %p150 = scmp.ne.s32.totalorder %s145, %s147
    %p151 = scmp.eq.s32.totalorder %s19, 0
    %p152 = por %p150, %p151
    %p153 = scmp.ne.s32.totalorder %s145, %s147
    %p154 = scmp.eq.s32.totalorder %s24, 6
    %p155 = por %p153, %p154
    %p156 = scmp.ne.s32.totalorder %s147, %s148
    %p157 = scmp.eq.s32.totalorder %s24, 0
    %p158 = por %p156, %p157
    %p159 = scmp.ne.s32.totalorder %s147, %s148
    %p160 = scmp.eq.s32.totalorder %s25, 6
    %p161 = por %p159, %p160
    %p163 = scmp.ne.s32.totalorder %s148, %s162
    %p164 = scmp.eq.s32.totalorder %s25, 0
    %p165 = por %p163, %p164
    %s167 = sadd.s32 %s166, 1
    %p170 = scmp.eq.s32.totalorder %s19, 6
    %p171 = scmp.ne.s32.totalorder %s166, %s168
    %p172 = scmp.eq.s32.totalorder %s19, 0
    %p173 = por %p171, %p172
    %p174 = scmp.ne.s32.totalorder %s166, %s168
    %p175 = scmp.eq.s32.totalorder %s24, 6
    %p176 = por %p174, %p175
    %p177 = scmp.ne.s32.totalorder %s168, %s169
    %p178 = scmp.eq.s32.totalorder %s24, 0
    %p179 = por %p177, %p178
    %p180 = scmp.ne.s32.totalorder %s168, %s169
    %p181 = scmp.eq.s32.totalorder %s25, 6
    %p182 = por %p180, %p181
    %p184 = scmp.ne.s32.totalorder %s169, %s183
    %p185 = scmp.eq.s32.totalorder %s25, 0
    %p186 = por %p184, %p185
    %s188 = sadd.s32 %s187, 1
    %p191 = scmp.eq.s32.totalorder %s19, 6
    %p192 = scmp.ne.s32.totalorder %s187, %s189
    %p193 = scmp.eq.s32.totalorder %s19, 0
    %p194 = por %p192, %p193
    %p195 = scmp.ne.s32.totalorder %s187, %s189
    %p196 = scmp.eq.s32.totalorder %s24, 6
    %p197 = por %p195, %p196
    %p198 = scmp.ne.s32.totalorder %s189, %s190
    %p199 = scmp.eq.s32.totalorder %s24, 0
    %p200 = por %p198, %p199
    %p201 = scmp.ne.s32.totalorder %s189, %s190
    %p202 = scmp.eq.s32.totalorder %s25, 6
    %p203 = por %p201, %p202
    %p205 = scmp.ne.s32.totalorder %s190, %s204
    %p206 = scmp.eq.s32.totalorder %s25, 0
    %p207 = por %p205, %p206
    %s209 = sadd.s32 %s208, 1
    %p212 = scmp.eq.s32.totalorder %s19, 6
    %p213 = scmp.ne.s32.totalorder %s208, %s210
    %p214 = scmp.eq.s32.totalorder %s19, 0
    %p215 = por %p213, %p214
    %p216 = scmp.ne.s32.totalorder %s208, %s210
    %p217 = scmp.eq.s32.totalorder %s24, 6
    %p218 = por %p216, %p217
    %p219 = scmp.ne.s32.totalorder %s210, %s211
    %p220 = scmp.eq.s32.totalorder %s24, 0
    %p221 = por %p219, %p220
    %p222 = scmp.ne.s32.totalorder %s210, %s211
    %p223 = scmp.eq.s32.totalorder %s25, 6
    %p224 = por %p222, %p223
    %p226 = scmp.ne.s32.totalorder %s211, %s225
    %p227 = scmp.eq.s32.totalorder %s25, 0
    %p228 = por %p226, %p227
    %s230 = sadd.s32 %s229, 1
    %p233 = scmp.eq.s32.totalorder %s19, 6
    %p234 = scmp.ne.s32.totalorder %s229, %s231
    %p235 = scmp.eq.s32.totalorder %s19, 0
    %p236 = por %p234, %p235
    %p237 = scmp.ne.s32.totalorder %s229, %s231
    %p238 = scmp.eq.s32.totalorder %s24, 6
    %p239 = por %p237, %p238
    %p240 = scmp.ne.s32.totalorder %s231, %s232
    %p241 = scmp.eq.s32.totalorder %s24, 0
    %p242 = por %p240, %p241
    %p243 = scmp.ne.s32.totalorder %s231, %s232
    %p244 = scmp.eq.s32.totalorder %s25, 6
    %p245 = por %p243, %p244
    %p247 = scmp.ne.s32.totalorder %s232, %s246
    %p248 = scmp.eq.s32.totalorder %s25, 0
    %p249 = por %p247, %p248
    %s251 = sadd.s32 %s250, 1
    %p254 = scmp.eq.s32.totalorder %s19, 6
    %p255 = scmp.ne.s32.totalorder %s250, %s252
    %p256 = scmp.eq.s32.totalorder %s19, 0
    %p257 = por %p255, %p256
    %p258 = scmp.ne.s32.totalorder %s250, %s252
    %p259 = scmp.eq.s32.totalorder %s24, 6
    %p260 = por %p258, %p259
    %p261 = scmp.ne.s32.totalorder %s252, %s253
    %p262 = scmp.eq.s32.totalorder %s24, 0
    %p263 = por %p261, %p262
    %p264 = scmp.ne.s32.totalorder %s252, %s253
    %p265 = scmp.eq.s32.totalorder %s25, 6
    %p266 = por %p264, %p265
    %p268 = scmp.ne.s32.totalorder %s253, %s267
    %p269 = scmp.eq.s32.totalorder %s25, 0
    %p270 = por %p268, %p269
    %s272 = sadd.s32 %s271, 1
    %p275 = scmp.eq.s32.totalorder %s19, 6
    %p276 = scmp.ne.s32.totalorder %s271, %s273
    %p277 = scmp.eq.s32.totalorder %s19, 0
    %p278 = por %p276, %p277
    %p279 = scmp.ne.s32.totalorder %s271, %s273
    %p280 = scmp.eq.s32.totalorder %s24, 6
    %p281 = por %p279, %p280
    %p282 = scmp.ne.s32.totalorder %s273, %s274
    %p283 = scmp.eq.s32.totalorder %s24, 0
    %p284 = por %p282, %p283
    %p285 = scmp.ne.s32.totalorder %s273, %s274
    %p286 = scmp.eq.s32.totalorder %s25, 6
    %p287 = por %p285, %p286
    %p289 = scmp.ne.s32.totalorder %s274, %s288
    %p290 = scmp.eq.s32.totalorder %s25, 0
    %p291 = por %p289, %p290
    %s293 = sadd.s32 %s292, 1
    %p296 = scmp.eq.s32.totalorder %s19, 6
    %p297 = scmp.ne.s32.totalorder %s292, %s294
    %p298 = scmp.eq.s32.totalorder %s19, 0
    %p299 = por %p297, %p298
    %p300 = scmp.ne.s32.totalorder %s292, %s294
    %p301 = scmp.eq.s32.totalorder %s24, 6
    %p302 = por %p300, %p301
    %p303 = scmp.ne.s32.totalorder %s294, %s295
    %p304 = scmp.eq.s32.totalorder %s24, 0
    %p305 = por %p303, %p304
    %p306 = scmp.ne.s32.totalorder %s294, %s295
    %p307 = scmp.eq.s32.totalorder %s25, 6
    %p308 = por %p306, %p307
    %p310 = scmp.ne.s32.totalorder %s295, %s309
    %p311 = scmp.eq.s32.totalorder %s25, 0
    %p312 = por %p310, %p311
    %s314 = sadd.s32 %s313, 1
    %p317 = scmp.eq.s32.totalorder %s19, 6
    %p318 = scmp.ne.s32.totalorder %s313, %s315
    %p319 = scmp.eq.s32.totalorder %s19, 0
    %p320 = por %p318, %p319
    %p321 = scmp.ne.s32.totalorder %s313, %s315
    %p322 = scmp.eq.s32.totalorder %s24, 6
    %p323 = por %p321, %p322
    %p324 = scmp.ne.s32.totalorder %s315, %s316
    %p325 = scmp.eq.s32.totalorder %s24, 0
    %p326 = por %p324, %p325
    %p327 = scmp.ne.s32.totalorder %s315, %s316
    %p328 = scmp.eq.s32.totalorder %s25, 6
    %p329 = por %p327, %p328
    %p331 = scmp.ne.s32.totalorder %s316, %s330
    %p332 = scmp.eq.s32.totalorder %s25, 0
    %p333 = por %p331, %p332
    %s334 = ssub.s32 %s27, %s34
    %s335 = ssub.s32 %s26, %s38
    %s336 = sor.u32 %s334, %s335
    %p337 = scmp.eq.s32.totalorder %s336, 0
    %s339 = sadd.s32 %s338, 1
    %s340 = scalar_select %p337, %s338, %s339
    %p343 = pneg %p337
    %p344 = scmp.eq.s32.totalorder %s19, 6
    %p345 = por %p343, %p344
    %p346 = scmp.ne.s32.totalorder %s338, %s341
    %p347 = scmp.eq.s32.totalorder %s19, 0
    %p348 = por %p346, %p347
    %p349 = scmp.ne.s32.totalorder %s338, %s341
    %p350 = scmp.eq.s32.totalorder %s24, 6
    %p351 = por %p349, %p350
    %p352 = scmp.ne.s32.totalorder %s341, %s342
    %p353 = scmp.eq.s32.totalorder %s24, 0
    %p354 = por %p352, %p353
    %p355 = scmp.ne.s32.totalorder %s341, %s342
    %p356 = scmp.eq.s32.totalorder %s25, 6
    %p357 = por %p355, %p356
    %p359 = scmp.ne.s32.totalorder %s342, %s358
    %p360 = scmp.eq.s32.totalorder %s25, 0
    %p361 = por %p359, %p360
    %p362 = scmp.le.s32.totalorder 1, %s19
    %p363 = scmp.lt.s32.totalorder %s19, 8
    %p364 = pnand %p362, %p363
    %p365 = pneg %p364
    // Predicated region
    $region9: #{topdown_decoder_forward.2} parent=5 // pred_check
      _
    $region10: #{topdown_decoder_forward.2} parent=5 // pred_check_branch
      %367 = sbr.rel (%p364) target = $region12
    $region11: #{topdown_decoder_forward.2} parent=5 // pred_region
      %s368 = ssub.s32 %s19, 1
      // Predicated region
      $region13: #{topdown_decoder_forward.2} parent=11 // pred_check
        %p369 = pneg %p85
      $region14: #{topdown_decoder_forward.2} parent=11 // pred_check_branch
        %371 = sbr.rel (%p369) target = $region16
      $region15: #{topdown_decoder_forward.2} parent=11 // pred_region
        %p372 = scmp.lt.s32.totalorder %s28, 0
        %s373 = scalar_select %p372, %s28, 0
        %s374 = smul.addr %s373, 4
        %s375 = smul.addr %s374, 8
        %s376 = scalar_lea.vmem %s1, %s375
      $region16: #{topdown_decoder_forward.2} parent=11 // pred_fallthru
        _
      // Predicated region
      $region17: #{topdown_decoder_forward.2} parent=11 // pred_check
        %p377 = pneg %p111
      $region18: #{topdown_decoder_forward.2} parent=11 // pred_check_branch
        %379 = sbr.rel (%p377) target = $region20
      $region19: #{topdown_decoder_forward.2} parent=11 // pred_region
        %p380 = scmp.lt.s32.totalorder %s28, 0
        %s381 = scalar_select %p380, %s28, 0
        %s382 = smul.addr %s381, 8
        %s383 = scalar_lea.vmem %s2, %s382
      $region20: #{topdown_decoder_forward.2} parent=11 // pred_fallthru
        _
      // Predicated region
      $region21: #{topdown_decoder_forward.2} parent=11 // pred_check
        %p384 = pneg %p137
      $region22: #{topdown_decoder_forward.2} parent=11 // pred_check_branch
        %386 = sbr.rel (%p384) target = $region24
      $region23: #{topdown_decoder_forward.2} parent=11 // pred_region
        %p387 = scmp.lt.s32.totalorder %s28, 0
        %s388 = scalar_select %p387, %s28, 0
        %s389 = smul.addr %s388, 8
        %s390 = scalar_lea.vmem %s3, %s389
      $region24: #{topdown_decoder_forward.2} parent=11 // pred_fallthru
        _
      // Predicated region
      $region25: #{topdown_decoder_forward.2} parent=11 // pred_check
        %p391 = pneg %p158
      $region26: #{topdown_decoder_forward.2} parent=11 // pred_check_branch
        %393 = sbr.rel (%p391) target = $region28
      $region27: #{topdown_decoder_forward.2} parent=11 // pred_region
        _
      $region28: #{topdown_decoder_forward.2} parent=11 // pred_fallthru
        _
      // Predicated region
      $region29: #{topdown_decoder_forward.2} parent=11 // pred_check
        %p394 = pneg %p179
      $region30: #{topdown_decoder_forward.2} parent=11 // pred_check_branch
        %396 = sbr.rel (%p394) target = $region32
      $region31: #{topdown_decoder_forward.2} parent=11 // pred_region
        _
      $region32: #{topdown_decoder_forward.2} parent=11 // pred_fallthru
        _
      // Predicated region
      $region33: #{topdown_decoder_forward.2} parent=11 // pred_check
        %p397 = pneg %p200
      $region34: #{topdown_decoder_forward.2} parent=11 // pred_check_branch
        %399 = sbr.rel (%p397) target = $region36
      $region35: #{topdown_decoder_forward.2} parent=11 // pred_region
        _
      $region36: #{topdown_decoder_forward.2} parent=11 // pred_fallthru
        _
      // Predicated region
      $region37: #{topdown_decoder_forward.2} parent=11 // pred_check
        %p400 = pneg %p221
      $region38: #{topdown_decoder_forward.2} parent=11 // pred_check_branch
        %402 = sbr.rel (%p400) target = $region40
      $region39: #{topdown_decoder_forward.2} parent=11 // pred_region
        _
      $region40: #{topdown_decoder_forward.2} parent=11 // pred_fallthru
        _
      // Predicated region
      $region41: #{topdown_decoder_forward.2} parent=11 // pred_check
        %p403 = pneg %p242
      $region42: #{topdown_decoder_forward.2} parent=11 // pred_check_branch
        %405 = sbr.rel (%p403) target = $region44
      $region43: #{topdown_decoder_forward.2} parent=11 // pred_region
        _
      $region44: #{topdown_decoder_forward.2} parent=11 // pred_fallthru
        _
      // Predicated region
      $region45: #{topdown_decoder_forward.2} parent=11 // pred_check
        %p406 = pneg %p263
      $region46: #{topdown_decoder_forward.2} parent=11 // pred_check_branch
        %408 = sbr.rel (%p406) target = $region48
      $region47: #{topdown_decoder_forward.2} parent=11 // pred_region
        _
      $region48: #{topdown_decoder_forward.2} parent=11 // pred_fallthru
        _
      // Predicated region
      $region49: #{topdown_decoder_forward.2} parent=11 // pred_check
        %p409 = pneg %p284
      $region50: #{topdown_decoder_forward.2} parent=11 // pred_check_branch
        %411 = sbr.rel (%p409) target = $region52
      $region51: #{topdown_decoder_forward.2} parent=11 // pred_region
        _
      $region52: #{topdown_decoder_forward.2} parent=11 // pred_fallthru
        _
      // Predicated region
      $region53: #{topdown_decoder_forward.2} parent=11 // pred_check
        %p412 = pneg %p305
      $region54: #{topdown_decoder_forward.2} parent=11 // pred_check_branch
        %414 = sbr.rel (%p412) target = $region56
      $region55: #{topdown_decoder_forward.2} parent=11 // pred_region
        _
      $region56: #{topdown_decoder_forward.2} parent=11 // pred_fallthru
        _
      // Predicated region
      $region57: #{topdown_decoder_forward.2} parent=11 // pred_check
        %p415 = pneg %p326
      $region58: #{topdown_decoder_forward.2} parent=11 // pred_check_branch
        %417 = sbr.rel (%p415) target = $region60
      $region59: #{topdown_decoder_forward.2} parent=11 // pred_region
        _
      $region60: #{topdown_decoder_forward.2} parent=11 // pred_fallthru
        _
    $region12: #{topdown_decoder_forward.2} parent=5 // pred_fallthru
      _
    %p418 = scmp.lt.s32.totalorder %s19, 7
    // Predicated region
    $region61: #{topdown_decoder_forward.2} parent=5 // pred_check
      %p419 = pneg %p418
    $region62: #{topdown_decoder_forward.2} parent=5 // pred_check_branch
      %421 = sbr.rel (%p419) target = $region64
    $region63: #{topdown_decoder_forward.2} parent=5 // pred_region
      // Predicated region
      $region65: #{topdown_decoder_forward.2} parent=63 // pred_check
        %p422 = pneg %p53
      $region66: #{topdown_decoder_forward.2} parent=63 // pred_check_branch
        %424 = sbr.rel (%p422) target = $region68
      $region67: #{topdown_decoder_forward.2} parent=63 // pred_region
        %p425 = scmp.lt.s32.totalorder %s27, 6
        %s426 = scalar_select %p425, %s27, 6
        %p427 = scmp.lt.s32.totalorder %s26, 0
        %s428 = scalar_select %p427, %s26, 0
        %s429 = smul.addr %s428, 4
        %s430 = smul.addr %s426, 4
        %s431 = sadd.s32 %s429, %s430
        %s432 = smul.addr %s431, 8
        %s433 = scalar_lea.vmem %s0, %s432
      $region68: #{topdown_decoder_forward.2} parent=63 // pred_fallthru
        _
    $region64: #{topdown_decoder_forward.2} parent=5 // pred_fallthru
      _
    %p434 = scmp.le.s32.totalorder 1, %s19
    %p435 = scmp.lt.s32.totalorder %s19, 8
    %p436 = pnand %p434, %p435
    %p437 = pneg %p436
    // Predicated region
    $region69: #{topdown_decoder_forward.2} parent=5 // pred_check
      _
    $region70: #{topdown_decoder_forward.2} parent=5 // pred_check_branch
      %439 = sbr.rel (%p436) target = $region72
    $region71: #{topdown_decoder_forward.2} parent=5 // pred_region
      %s440 = ssub.s32 %s19, 1
      %p441 = scmp.lt.s32.totalorder %s29, 6
      %s442 = scalar_select %p441, %s29, 6
      %p443 = scmp.lt.s32.totalorder %s28, 0
      %s444 = scalar_select %p443, %s28, 0
      %s445 = smul.addr %s444, 4
      %s446 = smul.addr %s442, 4
      %s447 = sadd.s32 %s445, %s446
      %s448 = smul.addr %s447, 8
      %s449 = scalar_lea.vmem %s0, %s448
      %p450 = pneg %p59
      %p451 = pneg %p56
      %p452 = scmp.lt.s32.totalorder %s28, 0
      %s453 = scalar_select %p452, %s28, 0
      %s454 = smul.addr %s453, 4
      %s455 = smul.addr %s454, 8
      %s456 = scalar_lea.vmem %s1, %s455
      %p457 = pneg %p85
      %p458 = pneg %p82
      %p459 = scmp.lt.s32.totalorder %s28, 0
      %s460 = scalar_select %p459, %s28, 0
      %s461 = smul.addr %s460, 8
      %s462 = scalar_lea.vmem %s2, %s461
      %p463 = pneg %p111
      %p464 = pneg %p108
      %p465 = scmp.lt.s32.totalorder %s28, 0
      %s466 = scalar_select %p465, %s28, 0
      %s467 = smul.addr %s466, 8
      %s468 = scalar_lea.vmem %s3, %s467
      %p469 = pneg %p137
      %p470 = pneg %p134
      %p471 = pneg %p158
      %p472 = pneg %p155
      %p473 = pneg %p179
      %p474 = pneg %p176
      %p475 = pneg %p200
      %p476 = pneg %p197
      %p477 = pneg %p221
      %p478 = pneg %p218
      %p479 = pneg %p242
      %p480 = pneg %p239
      %p481 = pneg %p263
      %p482 = pneg %p260
      %p483 = pneg %p284
      %p484 = pneg %p281
      %p485 = pneg %p305
      %p486 = pneg %p302
      %p487 = pneg %p326
      %p488 = pneg %p323
      %p489 = pneg %p354
      %p490 = pneg %p351
      %p491 = scmp.lt.s32.totalorder %s29, 6
      %s492 = scalar_select %p491, %s29, 6
      %p493 = scmp.lt.s32.totalorder %s28, 0
      %s494 = scalar_select %p493, %s28, 0
      %s495 = sadd.s32 %s494, %s492
      %s496 = smul.addr %s495, 8
      %s497 = scalar_lea.vmem %s13, %s496
      %p498 = scmp.lt.s32.totalorder %s29, 6
      %s499 = scalar_select %p498, %s29, 6
      %p500 = scmp.lt.s32.totalorder %s28, 0
      %s501 = scalar_select %p500, %s28, 0
      %s502 = smul.addr %s501, 4
      %s503 = smul.addr %s499, 4
      %s504 = sadd.s32 %s502, %s503
      %s505 = smul.addr %s504, 8
      %s506 = scalar_lea.vmem %s0, %s505
      %p507 = scmp.lt.s32.totalorder %s28, 0
      %s508 = scalar_select %p507, %s28, 0
      %s509 = smul.addr %s508, 4
      %s510 = smul.addr %s509, 8
      %s511 = scalar_lea.vmem %s1, %s510
      %p512 = scmp.lt.s32.totalorder %s28, 0
      %s513 = scalar_select %p512, %s28, 0
      %s514 = smul.addr %s513, 8
      %s515 = scalar_lea.vmem %s2, %s514
      %p516 = scmp.lt.s32.totalorder %s28, 0
      %s517 = scalar_select %p516, %s28, 0
      %s518 = smul.addr %s517, 8
      %s519 = scalar_lea.vmem %s3, %s518
      %p520 = scmp.lt.s32.totalorder %s29, 6
      %s521 = scalar_select %p520, %s29, 6
      %p522 = scmp.lt.s32.totalorder %s28, 0
      %s523 = scalar_select %p522, %s28, 0
      %s524 = sadd.s32 %s523, %s521
      %s525 = smul.addr %s524, 8
      %s526 = scalar_lea.vmem %s13, %s525
      %p527 = scmp.eq.s32.totalorder %s29, 0
      // Predicated region
      $region73: #{topdown_decoder_forward.2} parent=71 // pred_check
        %p528 = pneg %p527
      $region74: #{topdown_decoder_forward.2} parent=71 // pred_check_branch
        %530 = sbr.rel (%p528) target = $region76
      $region75: #{topdown_decoder_forward.2} parent=71 // pred_region
        %v531 = vld [vmem:[%s511] sm:$0xff]
        %v532 = vld [vmem:[%s511 + $0x8] sm:$0xff]
        %v533 = vld [vmem:[%s511 + $0x10] sm:$0xff]
        %v534 = vld [vmem:[%s511 + $0x18] sm:$0xff]
        %535 = vst [vmem:[#allocation2] sm:$0xff] %v531
        %536 = vst [vmem:[#allocation3] sm:$0xff] %v532
        %537 = vst [vmem:[#allocation4] sm:$0xff] %v533
        %538 = vst [vmem:[#allocation5] sm:$0xff] %v534
      $region76: #{topdown_decoder_forward.2} parent=71 // pred_fallthru
        _
      %v539 = vld [vmem:[#allocation2] sm:$0xff]
      %v540 = vld [vmem:[#allocation4] sm:$0xff]
      %v541 = vld [vmem:[%s506] sm:$0xff]
      %v542 = vld [vmem:[%s506 + $0x8] sm:$0xff]
      %v543 = vld [vmem:[%s506 + $0x10] sm:$0xff]
      %v544 = vld [vmem:[%s506 + $0x18] sm:$0xff]
      %v545 = vld [vmem:[%s4] sm:$0xff]
      %v546 = vld [vmem:[%s4 + $0x8] sm:$0xff]
      %v547 = vld [vmem:[%s4 + $0x10] sm:$0xff]
      %v548 = vld [vmem:[%s4 + $0x18] sm:$0xff]
      %v549 = vld [vmem:[%s4 + $0x20] sm:$0xff]
      %v550 = vld [vmem:[%s4 + $0x28] sm:$0xff]
      %v551 = vld [vmem:[%s4 + $0x30] sm:$0xff]
      %v552 = vld [vmem:[%s4 + $0x38] sm:$0xff]
      %v553 = vld [vmem:[%s4 + $0x40] sm:$0xff]
      %v554 = vld [vmem:[%s4 + $0x48] sm:$0xff]
      %v555 = vld [vmem:[%s4 + $0x50] sm:$0xff]
      %v556 = vld [vmem:[%s4 + $0x58] sm:$0xff]
      %v557 = vld [vmem:[%s4 + $0x60] sm:$0xff]
      %v558 = vld [vmem:[%s4 + $0x68] sm:$0xff]
      %v559 = vld [vmem:[%s4 + $0x70] sm:$0xff]
      %v560 = vld [vmem:[%s4 + $0x78] sm:$0xff]
      %v561 = vld [vmem:[%s4 + $0x80] sm:$0xff]
      %v562 = vld [vmem:[%s4 + $0x88] sm:$0xff]
      %v563 = vld [vmem:[%s4 + $0x90] sm:$0xff]
      %v564 = vld [vmem:[%s4 + $0x98] sm:$0xff]
      %v565 = vld [vmem:[%s4 + $0xa0] sm:$0xff]
      %v566 = vld [vmem:[%s4 + $0xa8] sm:$0xff]
      %v567 = vld [vmem:[%s4 + $0xb0] sm:$0xff]
      %v568 = vld [vmem:[%s4 + $0xb8] sm:$0xff]
      %v569 = vld [vmem:[%s4 + $0xc0] sm:$0xff]
      %v570 = vld [vmem:[%s4 + $0xc8] sm:$0xff]
      %v571 = vld [vmem:[%s4 + $0xd0] sm:$0xff]
      %v572 = vld [vmem:[%s4 + $0xd8] sm:$0xff]
      %v573 = vld [vmem:[%s4 + $0xe0] sm:$0xff]
      %v574 = vld [vmem:[%s4 + $0xe8] sm:$0xff]
      %v575 = vld [vmem:[%s4 + $0xf0] sm:$0xff]
      %v576 = vld [vmem:[%s4 + $0xf8] sm:$0xff]
      %v577 = vld [vmem:[%s4 + $0x100] sm:$0xff]
      %v578 = vld [vmem:[%s4 + $0x108] sm:$0xff]
      %v579 = vld [vmem:[%s4 + $0x110] sm:$0xff]
      %v580 = vld [vmem:[%s4 + $0x118] sm:$0xff]
      %v581 = vld [vmem:[%s4 + $0x120] sm:$0xff]
      %v582 = vld [vmem:[%s4 + $0x128] sm:$0xff]
      %v583 = vld [vmem:[%s4 + $0x130] sm:$0xff]
      %v584 = vld [vmem:[%s4 + $0x138] sm:$0xff]
      %v585 = vld [vmem:[%s4 + $0x140] sm:$0xff]
      %v586 = vld [vmem:[%s4 + $0x148] sm:$0xff]
      %v587 = vld [vmem:[%s4 + $0x150] sm:$0xff]
      %v588 = vld [vmem:[%s4 + $0x158] sm:$0xff]
      %v589 = vld [vmem:[%s4 + $0x160] sm:$0xff]
      %v590 = vld [vmem:[%s4 + $0x168] sm:$0xff]
      %v591 = vld [vmem:[%s4 + $0x170] sm:$0xff]
      %v592 = vld [vmem:[%s4 + $0x178] sm:$0xff]
      %v593 = vld [vmem:[%s4 + $0x180] sm:$0xff]
      %v594 = vld [vmem:[%s4 + $0x188] sm:$0xff]
      %v595 = vld [vmem:[%s4 + $0x190] sm:$0xff]
      %v596 = vld [vmem:[%s4 + $0x198] sm:$0xff]
      %v597 = vld [vmem:[%s4 + $0x1a0] sm:$0xff]
      %v598 = vld [vmem:[%s4 + $0x1a8] sm:$0xff]
      %v599 = vld [vmem:[%s4 + $0x1b0] sm:$0xff]
      %v600 = vld [vmem:[%s4 + $0x1b8] sm:$0xff]
      %v601 = vld [vmem:[%s4 + $0x1c0] sm:$0xff]
      %v602 = vld [vmem:[%s4 + $0x1c8] sm:$0xff]
      %v603 = vld [vmem:[%s4 + $0x1d0] sm:$0xff]
      %v604 = vld [vmem:[%s4 + $0x1d8] sm:$0xff]
      %v605 = vld [vmem:[%s4 + $0x1e0] sm:$0xff]
      %v606 = vld [vmem:[%s4 + $0x1e8] sm:$0xff]
      %v607 = vld [vmem:[%s4 + $0x1f0] sm:$0xff]
      %v608 = vld [vmem:[%s4 + $0x1f8] sm:$0xff]
      %609 = vmatprep.subr.mxu0 %v546
      %610 = vmatpush1.msra.mxu0 %v545
      %611 = vmatprep.subr.mxu0 %v550
      %612 = vmatpush1.msra.mxu0 %v549
      %613 = vmatprep.subr.mxu0 %v554
      %614 = vmatpush1.msra.mxu0 %v553
      %615 = vmatprep.subr.mxu0 %v558
      %616 = vmatpush1.msra.mxu0 %v557
      %617 = vmatprep.subr.mxu0 %v562
      %618 = vmatpush1.msra.mxu0 %v561
      %619 = vmatprep.subr.mxu0 %v566
      %620 = vmatpush1.msra.mxu0 %v565
      %621 = vmatprep.subr.mxu0 %v570
      %622 = vmatpush1.msra.mxu0 %v569
      %623 = vmatprep.subr.mxu0 %v574
      %624 = vmatpush1.msra.mxu0 %v573
      %625 = vmatprep.subr.mxu0 %v578
      %626 = vmatpush1.msra.mxu0 %v577
      %627 = vmatprep.subr.mxu0 %v582
      %628 = vmatpush1.msra.mxu0 %v581
      %629 = vmatprep.subr.mxu0 %v586
      %630 = vmatpush1.msra.mxu0 %v585
      %631 = vmatprep.subr.mxu0 %v590
      %632 = vmatpush1.msra.mxu0 %v589
      %633 = vmatprep.subr.mxu0 %v594
      %634 = vmatpush1.msra.mxu0 %v593
      %635 = vmatprep.subr.mxu0 %v598
      %636 = vmatpush1.msra.mxu0 %v597
      %637 = vmatprep.subr.mxu0 %v602
      %638 = vmatpush1.msra.mxu0 %v601
      %639 = vmatprep.subr.mxu0 %v606
      %640 = vmatpush1.msra.mxu0 %v605
      %641 = vmatprep.subr.mxu0 0.0
      %642 = vmatpush1.msra.mxu0 0.0
      %643 = vmatprep.subr.mxu0 0.0
      %644 = vmatpush1.msra.mxu0 0.0
      %645 = vmatprep.subr.mxu0 0.0
      %646 = vmatpush1.msra.mxu0 0.0
      %647 = vmatprep.subr.mxu0 0.0
      %648 = vmatpush1.msra.mxu0 0.0
      %649 = vmatprep.subr.mxu0 0.0
      %650 = vmatpush1.msra.mxu0 0.0
      %651 = vmatprep.subr.mxu0 0.0
      %652 = vmatpush1.msra.mxu0 0.0
      %653 = vmatprep.subr.mxu0 0.0
      %654 = vmatpush1.msra.mxu0 0.0
      %655 = vmatprep.subr.mxu0 0.0
      %656 = vmatpush1.msra.mxu0 0.0
      %657 = vmatprep.subr.mxu0 0.0
      %658 = vmatpush1.msra.mxu0 0.0
      %659 = vmatprep.subr.mxu0 0.0
      %660 = vmatpush1.msra.mxu0 0.0
      %661 = vmatprep.subr.mxu0 0.0
      %662 = vmatpush1.msra.mxu0 0.0
      %663 = vmatprep.subr.mxu0 0.0
      %664 = vmatpush1.msra.mxu0 0.0
      %665 = vmatprep.subr.mxu0 0.0
      %666 = vmatpush1.msra.mxu0 0.0
      %667 = vmatprep.subr.mxu0 0.0
      %668 = vmatpush1.msra.mxu0 0.0
      %669 = vmatprep.subr.mxu0 0.0
      %670 = vmatpush1.msra.mxu0 0.0
      %671 = vmatprep.subr.mxu0 0.0
      %672 = vmatpush1.msra.mxu0 0.0
      %673 = vmatprep.mubr.f32.mxu0 0.0
      %674 = vmatmul.mubr.f32.gmra.mrb[0].mxu0 %v540
      %v675 = vpop.f32.mrb[0].mxu0
      %v676 = vadd.f32 0.0, %v675
      %v677 = vpop.f32.mrb[0].mxu0
      %v678 = vadd.f32 0.0, %v677
      %679 = vdwg.mxu0
      %680 = vmatprep.subr.mxu0 %v548
      %681 = vmatpush1.msra.mxu0 %v547
      %682 = vmatprep.subr.mxu0 %v552
      %683 = vmatpush1.msra.mxu0 %v551
      %684 = vmatprep.subr.mxu0 %v556
      %685 = vmatpush1.msra.mxu0 %v555
      %686 = vmatprep.subr.mxu0 %v560
      %687 = vmatpush1.msra.mxu0 %v559
      %688 = vmatprep.subr.mxu0 %v564
      %689 = vmatpush1.msra.mxu0 %v563
      %690 = vmatprep.subr.mxu0 %v568
      %691 = vmatpush1.msra.mxu0 %v567
      %692 = vmatprep.subr.mxu0 %v572
      %693 = vmatpush1.msra.mxu0 %v571
      %694 = vmatprep.subr.mxu0 %v576
      %695 = vmatpush1.msra.mxu0 %v575
      %696 = vmatprep.subr.mxu0 %v580
      %697 = vmatpush1.msra.mxu0 %v579
      %698 = vmatprep.subr.mxu0 %v584
      %699 = vmatpush1.msra.mxu0 %v583
      %700 = vmatprep.subr.mxu0 %v588
      %701 = vmatpush1.msra.mxu0 %v587
      %702 = vmatprep.subr.mxu0 %v592
      %703 = vmatpush1.msra.mxu0 %v591
      %704 = vmatprep.subr.mxu0 %v596
      %705 = vmatpush1.msra.mxu0 %v595
      %706 = vmatprep.subr.mxu0 %v600
      %707 = vmatpush1.msra.mxu0 %v599
      %708 = vmatprep.subr.mxu0 %v604
      %709 = vmatpush1.msra.mxu0 %v603
      %710 = vmatprep.subr.mxu0 %v608
      %711 = vmatpush1.msra.mxu0 %v607
      %712 = vmatprep.subr.mxu0 0.0
      %713 = vmatpush1.msra.mxu0 0.0
      %714 = vmatprep.subr.mxu0 0.0
      %715 = vmatpush1.msra.mxu0 0.0
      %716 = vmatprep.subr.mxu0 0.0
      %717 = vmatpush1.msra.mxu0 0.0
      %718 = vmatprep.subr.mxu0 0.0
      %719 = vmatpush1.msra.mxu0 0.0
      %720 = vmatprep.subr.mxu0 0.0
      %721 = vmatpush1.msra.mxu0 0.0
      %722 = vmatprep.subr.mxu0 0.0
      %723 = vmatpush1.msra.mxu0 0.0
      %724 = vmatprep.subr.mxu0 0.0
      %725 = vmatpush1.msra.mxu0 0.0
      %726 = vmatprep.subr.mxu0 0.0
      %727 = vmatpush1.msra.mxu0 0.0
      %728 = vmatprep.subr.mxu0 0.0
      %729 = vmatpush1.msra.mxu0 0.0
      %730 = vmatprep.subr.mxu0 0.0
      %731 = vmatpush1.msra.mxu0 0.0
      %732 = vmatprep.subr.mxu0 0.0
      %733 = vmatpush1.msra.mxu0 0.0
      %734 = vmatprep.subr.mxu0 0.0
      %735 = vmatpush1.msra.mxu0 0.0
      %736 = vmatprep.subr.mxu0 0.0
      %737 = vmatpush1.msra.mxu0 0.0
      %738 = vmatprep.subr.mxu0 0.0
      %739 = vmatpush1.msra.mxu0 0.0
      %740 = vmatprep.subr.mxu0 0.0
      %741 = vmatpush1.msra.mxu0 0.0
      %742 = vmatprep.subr.mxu0 0.0
      %743 = vmatpush1.msra.mxu0 0.0
      %744 = vmatprep.mubr.f32.mxu0 0.0
      %745 = vmatmul.mubr.f32.gmra.mrb[0].mxu0 %v540
      %v746 = vpop.f32.mrb[0].mxu0
      %v747 = vadd.f32 0.0, %v746
      %v748 = vpop.f32.mrb[0].mxu0
      %v749 = vadd.f32 0.0, %v748
      %750 = vdwg.mxu0
      %v751 = vadd.f32 %v541, %v676
      %v752 = vadd.f32 %v542, %v678
      %v753 = vadd.f32 %v543, %v747
      %v754 = vadd.f32 %v544, %v749
      %v755 = vld [vmem:[%s5] sm:$0xff]
      %v756 = vld [vmem:[%s5 + $0x8] sm:$0xff]
      %v757 = vld [vmem:[%s5 + $0x10] sm:$0xff]
      %v758 = vld [vmem:[%s5 + $0x18] sm:$0xff]
      %v759 = vld [vmem:[%s5 + $0x20] sm:$0xff]
      %v760 = vld [vmem:[%s5 + $0x28] sm:$0xff]
      %v761 = vld [vmem:[%s5 + $0x30] sm:$0xff]
      %v762 = vld [vmem:[%s5 + $0x38] sm:$0xff]
      %v763 = vld [vmem:[%s5 + $0x40] sm:$0xff]
      %v764 = vld [vmem:[%s5 + $0x48] sm:$0xff]
      %v765 = vld [vmem:[%s5 + $0x50] sm:$0xff]
      %v766 = vld [vmem:[%s5 + $0x58] sm:$0xff]
      %v767 = vld [vmem:[%s5 + $0x60] sm:$0xff]
      %v768 = vld [vmem:[%s5 + $0x68] sm:$0xff]
      %v769 = vld [vmem:[%s5 + $0x70] sm:$0xff]
      %v770 = vld [vmem:[%s5 + $0x78] sm:$0xff]
      %v771 = vld [vmem:[%s5 + $0x80] sm:$0xff]
      %v772 = vld [vmem:[%s5 + $0x88] sm:$0xff]
      %v773 = vld [vmem:[%s5 + $0x90] sm:$0xff]
      %v774 = vld [vmem:[%s5 + $0x98] sm:$0xff]
      %v775 = vld [vmem:[%s5 + $0xa0] sm:$0xff]
      %v776 = vld [vmem:[%s5 + $0xa8] sm:$0xff]
      %v777 = vld [vmem:[%s5 + $0xb0] sm:$0xff]
      %v778 = vld [vmem:[%s5 + $0xb8] sm:$0xff]
      %v779 = vld [vmem:[%s5 + $0xc0] sm:$0xff]
      %v780 = vld [vmem:[%s5 + $0xc8] sm:$0xff]
      %v781 = vld [vmem:[%s5 + $0xd0] sm:$0xff]
      %v782 = vld [vmem:[%s5 + $0xd8] sm:$0xff]
      %v783 = vld [vmem:[%s5 + $0xe0] sm:$0xff]
      %v784 = vld [vmem:[%s5 + $0xe8] sm:$0xff]
      %v785 = vld [vmem:[%s5 + $0xf0] sm:$0xff]
      %v786 = vld [vmem:[%s5 + $0xf8] sm:$0xff]
      %v787 = vld [vmem:[%s5 + $0x100] sm:$0xff]
      %v788 = vld [vmem:[%s5 + $0x108] sm:$0xff]
      %v789 = vld [vmem:[%s5 + $0x110] sm:$0xff]
      %v790 = vld [vmem:[%s5 + $0x118] sm:$0xff]
      %v791 = vld [vmem:[%s5 + $0x120] sm:$0xff]
      %v792 = vld [vmem:[%s5 + $0x128] sm:$0xff]
      %v793 = vld [vmem:[%s5 + $0x130] sm:$0xff]
      %v794 = vld [vmem:[%s5 + $0x138] sm:$0xff]
      %v795 = vld [vmem:[%s5 + $0x140] sm:$0xff]
      %v796 = vld [vmem:[%s5 + $0x148] sm:$0xff]
      %v797 = vld [vmem:[%s5 + $0x150] sm:$0xff]
      %v798 = vld [vmem:[%s5 + $0x158] sm:$0xff]
      %v799 = vld [vmem:[%s5 + $0x160] sm:$0xff]
      %v800 = vld [vmem:[%s5 + $0x168] sm:$0xff]
      %v801 = vld [vmem:[%s5 + $0x170] sm:$0xff]
      %v802 = vld [vmem:[%s5 + $0x178] sm:$0xff]
      %v803 = vld [vmem:[%s5 + $0x180] sm:$0xff]
      %v804 = vld [vmem:[%s5 + $0x188] sm:$0xff]
      %v805 = vld [vmem:[%s5 + $0x190] sm:$0xff]
      %v806 = vld [vmem:[%s5 + $0x198] sm:$0xff]
      %v807 = vld [vmem:[%s5 + $0x1a0] sm:$0xff]
      %v808 = vld [vmem:[%s5 + $0x1a8] sm:$0xff]
      %v809 = vld [vmem:[%s5 + $0x1b0] sm:$0xff]
      %v810 = vld [vmem:[%s5 + $0x1b8] sm:$0xff]
      %v811 = vld [vmem:[%s5 + $0x1c0] sm:$0xff]
      %v812 = vld [vmem:[%s5 + $0x1c8] sm:$0xff]
      %v813 = vld [vmem:[%s5 + $0x1d0] sm:$0xff]
      %v814 = vld [vmem:[%s5 + $0x1d8] sm:$0xff]
      %v815 = vld [vmem:[%s5 + $0x1e0] sm:$0xff]
      %v816 = vld [vmem:[%s5 + $0x1e8] sm:$0xff]
      %v817 = vld [vmem:[%s5 + $0x1f0] sm:$0xff]
      %v818 = vld [vmem:[%s5 + $0x1f8] sm:$0xff]
      %819 = vmatprep.subr.mxu0 %v756
      %820 = vmatpush1.msra.mxu0 %v755
      %821 = vmatprep.subr.mxu0 %v760
      %822 = vmatpush1.msra.mxu0 %v759
      %823 = vmatprep.subr.mxu0 %v764
      %824 = vmatpush1.msra.mxu0 %v763
      %825 = vmatprep.subr.mxu0 %v768
      %826 = vmatpush1.msra.mxu0 %v767
      %827 = vmatprep.subr.mxu0 %v772
      %828 = vmatpush1.msra.mxu0 %v771
      %829 = vmatprep.subr.mxu0 %v776
      %830 = vmatpush1.msra.mxu0 %v775
      %831 = vmatprep.subr.mxu0 %v780
      %832 = vmatpush1.msra.mxu0 %v779
      %833 = vmatprep.subr.mxu0 %v784
      %834 = vmatpush1.msra.mxu0 %v783
      %835 = vmatprep.subr.mxu0 %v788
      %836 = vmatpush1.msra.mxu0 %v787
      %837 = vmatprep.subr.mxu0 %v792
      %838 = vmatpush1.msra.mxu0 %v791
      %839 = vmatprep.subr.mxu0 %v796
      %840 = vmatpush1.msra.mxu0 %v795
      %841 = vmatprep.subr.mxu0 %v800
      %842 = vmatpush1.msra.mxu0 %v799
      %843 = vmatprep.subr.mxu0 %v804
      %844 = vmatpush1.msra.mxu0 %v803
      %845 = vmatprep.subr.mxu0 %v808
      %846 = vmatpush1.msra.mxu0 %v807
      %847 = vmatprep.subr.mxu0 %v812
      %848 = vmatpush1.msra.mxu0 %v811
      %849 = vmatprep.subr.mxu0 %v816
      %850 = vmatpush1.msra.mxu0 %v815
      %851 = vmatprep.subr.mxu0 0.0
      %852 = vmatpush1.msra.mxu0 0.0
      %853 = vmatprep.subr.mxu0 0.0
      %854 = vmatpush1.msra.mxu0 0.0
      %855 = vmatprep.subr.mxu0 0.0
      %856 = vmatpush1.msra.mxu0 0.0
      %857 = vmatprep.subr.mxu0 0.0
      %858 = vmatpush1.msra.mxu0 0.0
      %859 = vmatprep.subr.mxu0 0.0
      %860 = vmatpush1.msra.mxu0 0.0
      %861 = vmatprep.subr.mxu0 0.0
      %862 = vmatpush1.msra.mxu0 0.0
      %863 = vmatprep.subr.mxu0 0.0
      %864 = vmatpush1.msra.mxu0 0.0
      %865 = vmatprep.subr.mxu0 0.0
      %866 = vmatpush1.msra.mxu0 0.0
      %867 = vmatprep.subr.mxu0 0.0
      %868 = vmatpush1.msra.mxu0 0.0
      %869 = vmatprep.subr.mxu0 0.0
      %870 = vmatpush1.msra.mxu0 0.0
      %871 = vmatprep.subr.mxu0 0.0
      %872 = vmatpush1.msra.mxu0 0.0
      %873 = vmatprep.subr.mxu0 0.0
      %874 = vmatpush1.msra.mxu0 0.0
      %875 = vmatprep.subr.mxu0 0.0
      %876 = vmatpush1.msra.mxu0 0.0
      %877 = vmatprep.subr.mxu0 0.0
      %878 = vmatpush1.msra.mxu0 0.0
      %879 = vmatprep.subr.mxu0 0.0
      %880 = vmatpush1.msra.mxu0 0.0
      %881 = vmatprep.subr.mxu0 0.0
      %882 = vmatpush1.msra.mxu0 0.0
      %883 = vmatprep.mubr.f32.mxu0 0.0
      %884 = vmatmul.mubr.f32.gmra.mrb[0].mxu0 %v539
      %v885 = vpop.f32.mrb[0].mxu0
      %v886 = vadd.f32 0.0, %v885
      %v887 = vpop.f32.mrb[0].mxu0
      %v888 = vadd.f32 0.0, %v887
      %889 = vdwg.mxu0
      %890 = vmatprep.subr.mxu0 %v758
      %891 = vmatpush1.msra.mxu0 %v757
      %892 = vmatprep.subr.mxu0 %v762
      %893 = vmatpush1.msra.mxu0 %v761
      %894 = vmatprep.subr.mxu0 %v766
      %895 = vmatpush1.msra.mxu0 %v765
      %896 = vmatprep.subr.mxu0 %v770
      %897 = vmatpush1.msra.mxu0 %v769
      %898 = vmatprep.subr.mxu0 %v774
      %899 = vmatpush1.msra.mxu0 %v773
      %900 = vmatprep.subr.mxu0 %v778
      %901 = vmatpush1.msra.mxu0 %v777
      %902 = vmatprep.subr.mxu0 %v782
      %903 = vmatpush1.msra.mxu0 %v781
      %904 = vmatprep.subr.mxu0 %v786
      %905 = vmatpush1.msra.mxu0 %v785
      %906 = vmatprep.subr.mxu0 %v790
      %907 = vmatpush1.msra.mxu0 %v789
      %908 = vmatprep.subr.mxu0 %v794
      %909 = vmatpush1.msra.mxu0 %v793
      %910 = vmatprep.subr.mxu0 %v798
      %911 = vmatpush1.msra.mxu0 %v797
      %912 = vmatprep.subr.mxu0 %v802
      %913 = vmatpush1.msra.mxu0 %v801
      %914 = vmatprep.subr.mxu0 %v806
      %915 = vmatpush1.msra.mxu0 %v805
      %916 = vmatprep.subr.mxu0 %v810
      %917 = vmatpush1.msra.mxu0 %v809
      %918 = vmatprep.subr.mxu0 %v814
      %919 = vmatpush1.msra.mxu0 %v813
      %920 = vmatprep.subr.mxu0 %v818
      %921 = vmatpush1.msra.mxu0 %v817
      %922 = vmatprep.subr.mxu0 0.0
      %923 = vmatpush1.msra.mxu0 0.0
      %924 = vmatprep.subr.mxu0 0.0
      %925 = vmatpush1.msra.mxu0 0.0
      %926 = vmatprep.subr.mxu0 0.0
      %927 = vmatpush1.msra.mxu0 0.0
      %928 = vmatprep.subr.mxu0 0.0
      %929 = vmatpush1.msra.mxu0 0.0
      %930 = vmatprep.subr.mxu0 0.0
      %931 = vmatpush1.msra.mxu0 0.0
      %932 = vmatprep.subr.mxu0 0.0
      %933 = vmatpush1.msra.mxu0 0.0
      %934 = vmatprep.subr.mxu0 0.0
      %935 = vmatpush1.msra.mxu0 0.0
      %936 = vmatprep.subr.mxu0 0.0
      %937 = vmatpush1.msra.mxu0 0.0
      %938 = vmatprep.subr.mxu0 0.0
      %939 = vmatpush1.msra.mxu0 0.0
      %940 = vmatprep.subr.mxu0 0.0
      %941 = vmatpush1.msra.mxu0 0.0
      %942 = vmatprep.subr.mxu0 0.0
      %943 = vmatpush1.msra.mxu0 0.0
      %944 = vmatprep.subr.mxu0 0.0
      %945 = vmatpush1.msra.mxu0 0.0
      %946 = vmatprep.subr.mxu0 0.0
      %947 = vmatpush1.msra.mxu0 0.0
      %948 = vmatprep.subr.mxu0 0.0
      %949 = vmatpush1.msra.mxu0 0.0
      %950 = vmatprep.subr.mxu0 0.0
      %951 = vmatpush1.msra.mxu0 0.0
      %952 = vmatprep.subr.mxu0 0.0
      %953 = vmatpush1.msra.mxu0 0.0
      %954 = vmatprep.mubr.f32.mxu0 0.0
      %955 = vmatmul.mubr.f32.gmra.mrb[0].mxu0 %v539
      %v956 = vpop.f32.mrb[0].mxu0
      %v957 = vadd.f32 0.0, %v956
      %v958 = vpop.f32.mrb[0].mxu0
      %v959 = vadd.f32 0.0, %v958
      %960 = vdwg.mxu0
      %v961 = vadd.f32 %v751, %v886
      %v962 = vadd.f32 %v752, %v888
      %v963 = vadd.f32 %v753, %v957
      %v964 = vadd.f32 %v754, %v959
      %v965 = vld [vmem:[#allocation3] sm:$0xff]
      %v966 = vxor.u32 %v961, 2147483648
      %v967 = vmul.f32 %v966, 1.442695
      %v968 = vpow.pop %v967
      %v969 = vadd.f32 %v968, 1.0
      %v970 = vrcp.pop %v969
      %v971 = vmul.f32 1.0, %v970
      %v972 = vxor.u32 %v962, 2147483648
      %v973 = vmul.f32 %v972, 1.442695
      %v974 = vpow.pop %v973
      %v975 = vadd.f32 %v974, 1.0
      %v976 = vrcp.pop %v975
      %v977 = vmul.f32 1.0, %v976
      %v978 = vtanh.pop %v963
      %v979 = vxor.u32 %v964, 2147483648
      %v980 = vmul.f32 %v979, 1.442695
      %v981 = vpow.pop %v980
      %v982 = vadd.f32 %v981, 1.0
      %v983 = vrcp.pop %v982
      %v984 = vmul.f32 1.0, %v983
      %v985 = vmul.f32 %v977, %v965
      %v986 = vmul.f32 %v971, %v978
      %v987 = vadd.f32 %v985, %v986
      %v988 = vtanh.pop %v987
      %v989 = vmul.f32 %v984, %v988
      %990 = vst [vmem:[#allocation2] sm:$0xff] %v989
      %991 = vst [vmem:[#allocation3] sm:$0xff] %v987
      %v992 = vld [vmem:[%s6] sm:$0xff]
      %v993 = vld [vmem:[%s6 + $0x8] sm:$0xff]
      %v994 = vld [vmem:[%s6 + $0x10] sm:$0xff]
      %v995 = vld [vmem:[%s6 + $0x18] sm:$0xff]
      %v996 = vld [vmem:[%s6 + $0x20] sm:$0xff]
      %v997 = vld [vmem:[%s6 + $0x28] sm:$0xff]
      %v998 = vld [vmem:[%s6 + $0x30] sm:$0xff]
      %v999 = vld [vmem:[%s6 + $0x38] sm:$0xff]
      %v1000 = vld [vmem:[%s6 + $0x40] sm:$0xff]
      %v1001 = vld [vmem:[%s6 + $0x48] sm:$0xff]
      %v1002 = vld [vmem:[%s6 + $0x50] sm:$0xff]
      %v1003 = vld [vmem:[%s6 + $0x58] sm:$0xff]
      %v1004 = vld [vmem:[%s6 + $0x60] sm:$0xff]
      %v1005 = vld [vmem:[%s6 + $0x68] sm:$0xff]
      %v1006 = vld [vmem:[%s6 + $0x70] sm:$0xff]
      %v1007 = vld [vmem:[%s6 + $0x78] sm:$0xff]
      %v1008 = vld [vmem:[%s7] sm:$0x1]
      %v1010 = vlaneseq
      %v1011 = vshrl.u32 %v1010, 7
      %v1012 = vsub.s32 0, %v1011
      %v1013 = vrot.slane %v1008, %v1012
      %1015 = vmatprep.subr.mxu0 0.0
      %1016 = vmatpush1.msra.mxu0 %v992
      %1017 = vmatprep.subr.mxu0 0.0
      %1018 = vmatpush1.msra.mxu0 %v993
      %1019 = vmatprep.subr.mxu0 0.0
      %1020 = vmatpush1.msra.mxu0 %v994
      %1021 = vmatprep.subr.mxu0 0.0
      %1022 = vmatpush1.msra.mxu0 %v995
      %1023 = vmatprep.subr.mxu0 0.0
      %1024 = vmatpush1.msra.mxu0 %v996
      %1025 = vmatprep.subr.mxu0 0.0
      %1026 = vmatpush1.msra.mxu0 %v997
      %1027 = vmatprep.subr.mxu0 0.0
      %1028 = vmatpush1.msra.mxu0 %v998
      %1029 = vmatprep.subr.mxu0 0.0
      %1030 = vmatpush1.msra.mxu0 %v999
      %1031 = vmatprep.subr.mxu0 0.0
      %1032 = vmatpush1.msra.mxu0 %v1000
      %1033 = vmatprep.subr.mxu0 0.0
      %1034 = vmatpush1.msra.mxu0 %v1001
      %1035 = vmatprep.subr.mxu0 0.0
      %1036 = vmatpush1.msra.mxu0 %v1002
      %1037 = vmatprep.subr.mxu0 0.0
      %1038 = vmatpush1.msra.mxu0 %v1003
      %1039 = vmatprep.subr.mxu0 0.0
      %1040 = vmatpush1.msra.mxu0 %v1004
      %1041 = vmatprep.subr.mxu0 0.0
      %1042 = vmatpush1.msra.mxu0 %v1005
      %1043 = vmatprep.subr.mxu0 0.0
      %1044 = vmatpush1.msra.mxu0 %v1006
      %1045 = vmatprep.subr.mxu0 0.0
      %1046 = vmatpush1.msra.mxu0 %v1007
      %1047 = vmatprep.subr.mxu0 0.0
      %1048 = vmatpush1.msra.mxu0 0.0
      %1049 = vmatprep.subr.mxu0 0.0
      %1050 = vmatpush1.msra.mxu0 0.0
      %1051 = vmatprep.subr.mxu0 0.0
      %1052 = vmatpush1.msra.mxu0 0.0
      %1053 = vmatprep.subr.mxu0 0.0
      %1054 = vmatpush1.msra.mxu0 0.0
      %1055 = vmatprep.subr.mxu0 0.0
      %1056 = vmatpush1.msra.mxu0 0.0
      %1057 = vmatprep.subr.mxu0 0.0
      %1058 = vmatpush1.msra.mxu0 0.0
      %1059 = vmatprep.subr.mxu0 0.0
      %1060 = vmatpush1.msra.mxu0 0.0
      %1061 = vmatprep.subr.mxu0 0.0
      %1062 = vmatpush1.msra.mxu0 0.0
      %1063 = vmatprep.subr.mxu0 0.0
      %1064 = vmatpush1.msra.mxu0 0.0
      %1065 = vmatprep.subr.mxu0 0.0
      %1066 = vmatpush1.msra.mxu0 0.0
      %1067 = vmatprep.subr.mxu0 0.0
      %1068 = vmatpush1.msra.mxu0 0.0
      %1069 = vmatprep.subr.mxu0 0.0
      %1070 = vmatpush1.msra.mxu0 0.0
      %1071 = vmatprep.subr.mxu0 0.0
      %1072 = vmatpush1.msra.mxu0 0.0
      %1073 = vmatprep.subr.mxu0 0.0
      %1074 = vmatpush1.msra.mxu0 0.0
      %1075 = vmatprep.subr.mxu0 0.0
      %1076 = vmatpush1.msra.mxu0 0.0
      %1077 = vmatprep.subr.mxu0 0.0
      %1078 = vmatpush1.msra.mxu0 0.0
      %1079 = vmatprep.mubr.f32.mxu0 0.0
      %1080 = vmatmul.mubr.f32.gmra.mrb[0].mxu0 %v989
      %v1081 = vpop.f32.mrb[0].mxu0
      %v1082 = vadd.f32 %v1013, %v1081
      %v1083 = vpop.f32.mrb[0].mxu0
      %1084 = vdwg.mxu0
      %v1085 = vld [vmem:[%s519] sm:$0xff]
      %v1086 = vld [vmem:[%s519 + $0x8] sm:$0xff]
      %v1087 = vld [vmem:[%s519 + $0x10] sm:$0xff]
      %v1088 = vld [vmem:[%s519 + $0x18] sm:$0xff]
      %v1089 = vld [vmem:[%s519 + $0x20] sm:$0xff]
      %v1090 = vld [vmem:[%s519 + $0x28] sm:$0xff]
      %v1091 = vld [vmem:[%s519 + $0x30] sm:$0xff]
      %v1092 = vld [vmem:[%s519 + $0x38] sm:$0xff]
      %v1093 = vld [vmem:[%s519 + $0x40] sm:$0xff]
      %v1094 = vld [vmem:[%s519 + $0x48] sm:$0xff]
      %v1095 = vld [vmem:[%s519 + $0x50] sm:$0xff]
      %v1096 = vld [vmem:[%s519 + $0x58] sm:$0xff]
      %v1097 = vld [vmem:[%s519 + $0x60] sm:$0xff]
      %v1098 = vld [vmem:[%s519 + $0x68] sm:$0xff]
      %v1099 = vld [vmem:[%s519 + $0x70] sm:$0xff]
      %v1100 = vld [vmem:[%s519 + $0x78] sm:$0xff]
      %v1101 = vld [vmem:[%s519 + $0x80] sm:$0xff]
      %v1102 = vld [vmem:[%s519 + $0x88] sm:$0xff]
      %v1103 = vld [vmem:[%s519 + $0x90] sm:$0xff]
      %v1104 = vld [vmem:[%s519 + $0x98] sm:$0xff]
      %v1105 = vld [vmem:[%s519 + $0xa0] sm:$0xff]
      %v1106 = vld [vmem:[%s519 + $0xa8] sm:$0xff]
      %v1107 = vld [vmem:[%s519 + $0xb0] sm:$0xff]
      %v1108 = vld [vmem:[%s519 + $0xb8] sm:$0xff]
      %v1109 = vld [vmem:[%s519 + $0xc0] sm:$0xff]
      %v1110 = vld [vmem:[%s519 + $0xc8] sm:$0xff]
      %v1111 = vld [vmem:[%s519 + $0xd0] sm:$0xff]
      %v1112 = vld [vmem:[%s519 + $0xd8] sm:$0xff]
      %v1113 = vld [vmem:[%s519 + $0xe0] sm:$0xff]
      %v1114 = vld [vmem:[%s519 + $0xe8] sm:$0xff]
      %v1115 = vld [vmem:[%s519 + $0xf0] sm:$0xff]
      %v1116 = vld [vmem:[%s519 + $0xf8] sm:$0xff]
      %v1117 = vld [vmem:[%s519 + $0x100] sm:$0xff]
      %v1118 = vld [vmem:[%s519 + $0x108] sm:$0xff]
      %v1119 = vld [vmem:[%s519 + $0x110] sm:$0xff]
      %v1120 = vld [vmem:[%s519 + $0x118] sm:$0xff]
      %v1121 = vadd.f32 %v1085, %v1082
      %v1122 = vadd.f32 %v1086, %v1082
      %v1123 = vadd.f32 %v1087, %v1082
      %v1124 = vadd.f32 %v1088, %v1082
      %v1125 = vadd.f32 %v1089, %v1082
      %v1126 = vadd.f32 %v1090, %v1082
      %v1127 = vadd.f32 %v1091, %v1082
      %v1128 = vadd.f32 %v1092, %v1082
      %v1129 = vadd.f32 %v1093, %v1082
      %v1130 = vadd.f32 %v1094, %v1082
      %v1131 = vadd.f32 %v1095, %v1082
      %v1132 = vadd.f32 %v1096, %v1082
      %v1133 = vadd.f32 %v1097, %v1082
      %v1134 = vadd.f32 %v1098, %v1082
      %v1135 = vadd.f32 %v1099, %v1082
      %v1136 = vadd.f32 %v1100, %v1082
      %v1137 = vadd.f32 %v1101, %v1082
      %v1138 = vadd.f32 %v1102, %v1082
      %v1139 = vadd.f32 %v1103, %v1082
      %v1140 = vadd.f32 %v1104, %v1082
      %v1141 = vadd.f32 %v1105, %v1082
      %v1142 = vadd.f32 %v1106, %v1082
      %v1143 = vadd.f32 %v1107, %v1082
      %v1144 = vadd.f32 %v1108, %v1082
      %v1145 = vadd.f32 %v1109, %v1082
      %v1146 = vadd.f32 %v1110, %v1082
      %v1147 = vadd.f32 %v1111, %v1082
      %v1148 = vadd.f32 %v1112, %v1082
      %v1149 = vadd.f32 %v1113, %v1082
      %v1150 = vadd.f32 %v1114, %v1082
      %v1151 = vadd.f32 %v1115, %v1082
      %v1152 = vadd.f32 %v1116, %v1082
      %v1153 = vadd.f32 %v1117, %v1082
      %v1154 = vadd.f32 %v1118, %v1082
      %v1155 = vadd.f32 %v1119, %v1082
      %v1156 = vadd.f32 %v1120, %v1082
      %v1157 = vmax.f32 %v1121, 0.0
      %v1158 = vmax.f32 %v1122, 0.0
      %v1159 = vmax.f32 %v1123, 0.0
      %v1160 = vmax.f32 %v1124, 0.0
      %v1161 = vmax.f32 %v1125, 0.0
      %v1162 = vmax.f32 %v1126, 0.0
      %v1163 = vmax.f32 %v1127, 0.0
      %v1164 = vmax.f32 %v1128, 0.0
      %v1165 = vmax.f32 %v1129, 0.0
      %v1166 = vmax.f32 %v1130, 0.0
      %v1167 = vmax.f32 %v1131, 0.0
      %v1168 = vmax.f32 %v1132, 0.0
      %v1169 = vmax.f32 %v1133, 0.0
      %v1170 = vmax.f32 %v1134, 0.0
      %v1171 = vmax.f32 %v1135, 0.0
      %v1172 = vmax.f32 %v1136, 0.0
      %v1173 = vmax.f32 %v1137, 0.0
      %v1174 = vmax.f32 %v1138, 0.0
      %v1175 = vmax.f32 %v1139, 0.0
      %v1176 = vmax.f32 %v1140, 0.0
      %v1177 = vmax.f32 %v1141, 0.0
      %v1178 = vmax.f32 %v1142, 0.0
      %v1179 = vmax.f32 %v1143, 0.0
      %v1180 = vmax.f32 %v1144, 0.0
      %v1181 = vmax.f32 %v1145, 0.0
      %v1182 = vmax.f32 %v1146, 0.0
      %v1183 = vmax.f32 %v1147, 0.0
      %v1184 = vmax.f32 %v1148, 0.0
      %v1185 = vmax.f32 %v1149, 0.0
      %v1186 = vmax.f32 %v1150, 0.0
      %v1187 = vmax.f32 %v1151, 0.0
      %v1188 = vmax.f32 %v1152, 0.0
      %v1189 = vmax.f32 %v1153, 0.0
      %v1190 = vmax.f32 %v1154, 0.0
      %v1191 = vmax.f32 %v1155, 0.0
      %v1192 = vmax.f32 %v1156, 0.0
      %v1193 = vld [vmem:[%s8] sm:$0x1]
      %v1195 = vlaneseq
      %v1196 = vshrl.u32 %v1195, 7
      %v1197 = vsub.s32 0, %v1196
      %v1198 = vrot.slane %v1193, %v1197
      %v1200 = vmul.f32 %v1157, %v1198
      %v1201 = vmul.f32 %v1158, %v1198
      %v1202 = vmul.f32 %v1159, %v1198
      %v1203 = vmul.f32 %v1160, %v1198
      %v1204 = vmul.f32 %v1161, %v1198
      %v1205 = vmul.f32 %v1162, %v1198
      %v1206 = vmul.f32 %v1163, %v1198
      %v1207 = vmul.f32 %v1164, %v1198
      %v1208 = vmul.f32 %v1165, %v1198
      %v1209 = vmul.f32 %v1166, %v1198
      %v1210 = vmul.f32 %v1167, %v1198
      %v1211 = vmul.f32 %v1168, %v1198
      %v1212 = vmul.f32 %v1169, %v1198
      %v1213 = vmul.f32 %v1170, %v1198
      %v1214 = vmul.f32 %v1171, %v1198
      %v1215 = vmul.f32 %v1172, %v1198
      %v1216 = vmul.f32 %v1173, %v1198
      %v1217 = vmul.f32 %v1174, %v1198
      %v1218 = vmul.f32 %v1175, %v1198
      %v1219 = vmul.f32 %v1176, %v1198
      %v1220 = vmul.f32 %v1177, %v1198
      %v1221 = vmul.f32 %v1178, %v1198
      %v1222 = vmul.f32 %v1179, %v1198
      %v1223 = vmul.f32 %v1180, %v1198
      %v1224 = vmul.f32 %v1181, %v1198
      %v1225 = vmul.f32 %v1182, %v1198
      %v1226 = vmul.f32 %v1183, %v1198
      %v1227 = vmul.f32 %v1184, %v1198
      %v1228 = vmul.f32 %v1185, %v1198
      %v1229 = vmul.f32 %v1186, %v1198
      %v1230 = vmul.f32 %v1187, %v1198
      %v1231 = vmul.f32 %v1188, %v1198
      %v1232 = vmul.f32 %v1189, %v1198
      %v1233 = vmul.f32 %v1190, %v1198
      %v1234 = vmul.f32 %v1191, %v1198
      %v1235 = vmul.f32 %v1192, %v1198
      %1236 = vadd.xlane.f32.xlu0 %v1200
      %v1237 = vpop.xlane.xlu0 %1236
      %1238 = vadd.xlane.f32.xlu0 %v1201
      %v1239 = vpop.xlane.xlu0 %1238
      %1240 = vadd.xlane.f32.xlu0 %v1202
      %v1241 = vpop.xlane.xlu0 %1240
      %1242 = vadd.xlane.f32.xlu0 %v1203
      %v1243 = vpop.xlane.xlu0 %1242
      %1244 = vadd.xlane.f32.xlu0 %v1204
      %v1245 = vpop.xlane.xlu0 %1244
      %1246 = vadd.xlane.f32.xlu0 %v1205
      %v1247 = vpop.xlane.xlu0 %1246
      %1248 = vadd.xlane.f32.xlu0 %v1206
      %v1249 = vpop.xlane.xlu0 %1248
      %1250 = vadd.xlane.f32.xlu0 %v1207
      %v1251 = vpop.xlane.xlu0 %1250
      %1252 = vadd.xlane.f32.xlu0 %v1208
      %v1253 = vpop.xlane.xlu0 %1252
      %1254 = vadd.xlane.f32.xlu0 %v1209
      %v1255 = vpop.xlane.xlu0 %1254
      %1256 = vadd.xlane.f32.xlu0 %v1210
      %v1257 = vpop.xlane.xlu0 %1256
      %1258 = vadd.xlane.f32.xlu0 %v1211
      %v1259 = vpop.xlane.xlu0 %1258
      %1260 = vadd.xlane.f32.xlu0 %v1212
      %v1261 = vpop.xlane.xlu0 %1260
      %1262 = vadd.xlane.f32.xlu0 %v1213
      %v1263 = vpop.xlane.xlu0 %1262
      %1264 = vadd.xlane.f32.xlu0 %v1214
      %v1265 = vpop.xlane.xlu0 %1264
      %1266 = vadd.xlane.f32.xlu0 %v1215
      %v1267 = vpop.xlane.xlu0 %1266
      %1268 = vadd.xlane.f32.xlu0 %v1216
      %v1269 = vpop.xlane.xlu0 %1268
      %1270 = vadd.xlane.f32.xlu0 %v1217
      %v1271 = vpop.xlane.xlu0 %1270
      %1272 = vadd.xlane.f32.xlu0 %v1218
      %v1273 = vpop.xlane.xlu0 %1272
      %1274 = vadd.xlane.f32.xlu0 %v1219
      %v1275 = vpop.xlane.xlu0 %1274
      %1276 = vadd.xlane.f32.xlu0 %v1220
      %v1277 = vpop.xlane.xlu0 %1276
      %1278 = vadd.xlane.f32.xlu0 %v1221
      %v1279 = vpop.xlane.xlu0 %1278
      %1280 = vadd.xlane.f32.xlu0 %v1222
      %v1281 = vpop.xlane.xlu0 %1280
      %1282 = vadd.xlane.f32.xlu0 %v1223
      %v1283 = vpop.xlane.xlu0 %1282
      %1284 = vadd.xlane.f32.xlu0 %v1224
      %v1285 = vpop.xlane.xlu0 %1284
      %1286 = vadd.xlane.f32.xlu0 %v1225
      %v1287 = vpop.xlane.xlu0 %1286
      %1288 = vadd.xlane.f32.xlu0 %v1226
      %v1289 = vpop.xlane.xlu0 %1288
      %1290 = vadd.xlane.f32.xlu0 %v1227
      %v1291 = vpop.xlane.xlu0 %1290
      %1292 = vadd.xlane.f32.xlu0 %v1228
      %v1293 = vpop.xlane.xlu0 %1292
      %1294 = vadd.xlane.f32.xlu0 %v1229
      %v1295 = vpop.xlane.xlu0 %1294
      %1296 = vadd.xlane.f32.xlu0 %v1230
      %v1297 = vpop.xlane.xlu0 %1296
      %1298 = vadd.xlane.f32.xlu0 %v1231
      %v1299 = vpop.xlane.xlu0 %1298
      %1300 = vadd.xlane.f32.xlu0 %v1232
      %v1301 = vpop.xlane.xlu0 %1300
      %1302 = vadd.xlane.f32.xlu0 %v1233
      %v1303 = vpop.xlane.xlu0 %1302
      %1304 = vadd.xlane.f32.xlu0 %v1234
      %v1305 = vpop.xlane.xlu0 %1304
      %1306 = vadd.xlane.f32.xlu0 %v1235
      %v1307 = vpop.xlane.xlu0 %1306
      %v1308 = vmax.f32 %v1237, %v1245
      %v1309 = vmax.f32 %v1239, %v1247
      %v1310 = vmax.f32 %v1241, %v1249
      %v1311 = vmax.f32 %v1243, %v1251
      %v1312 = vmax.f32 %v1308, %v1253
      %v1313 = vmax.f32 %v1309, %v1255
      %v1314 = vmax.f32 %v1310, %v1257
      %v1315 = vmax.f32 %v1311, %v1259
      %v1316 = vmax.f32 %v1312, %v1261
      %v1317 = vmax.f32 %v1313, %v1263
      %v1318 = vmax.f32 %v1314, %v1265
      %v1319 = vmax.f32 %v1315, %v1267
      %v1320 = vmax.f32 %v1316, %v1269
      %v1321 = vmax.f32 %v1317, %v1271
      %v1322 = vmax.f32 %v1318, %v1273
      %v1323 = vmax.f32 %v1319, %v1275
      %v1324 = vmax.f32 %v1320, %v1277
      %v1325 = vmax.f32 %v1321, %v1279
      %v1326 = vmax.f32 %v1322, %v1281
      %v1327 = vmax.f32 %v1323, %v1283
      %v1328 = vmax.f32 %v1324, %v1285
      %v1329 = vmax.f32 %v1325, %v1287
      %v1330 = vmax.f32 %v1326, %v1289
      %v1331 = vmax.f32 %v1327, %v1291
      %v1332 = vmax.f32 %v1328, %v1293
      %v1333 = vmax.f32 %v1329, %v1295
      %v1334 = vmax.f32 %v1330, %v1297
      %v1335 = vmax.f32 %v1331, %v1299
      %v1336 = vmax.f32 %v1332, %v1301
      %v1337 = vmax.f32 %v1333, %v1303
      %v1338 = vmax.f32 %v1334, %v1305
      %v1339 = vmax.f32 %v1335, %v1307
      %v1340 = vmax.f32 %v1336, %v1337
      %v1341 = vmax.f32 %v1338, %v1339
      %v1342 = vmax.f32 %v1340, %v1341
      %v1343 = vsub.f32 %v1237, %v1342
      %v1344 = vsub.f32 %v1239, %v1342
      %v1345 = vsub.f32 %v1241, %v1342
      %v1346 = vsub.f32 %v1243, %v1342
      %v1347 = vsub.f32 %v1245, %v1342
      %v1348 = vsub.f32 %v1247, %v1342
      %v1349 = vsub.f32 %v1249, %v1342
      %v1350 = vsub.f32 %v1251, %v1342
      %v1351 = vsub.f32 %v1253, %v1342
      %v1352 = vsub.f32 %v1255, %v1342
      %v1353 = vsub.f32 %v1257, %v1342
      %v1354 = vsub.f32 %v1259, %v1342
      %v1355 = vsub.f32 %v1261, %v1342
      %v1356 = vsub.f32 %v1263, %v1342
      %v1357 = vsub.f32 %v1265, %v1342
      %v1358 = vsub.f32 %v1267, %v1342
      %v1359 = vsub.f32 %v1269, %v1342
      %v1360 = vsub.f32 %v1271, %v1342
      %v1361 = vsub.f32 %v1273, %v1342
      %v1362 = vsub.f32 %v1275, %v1342
      %v1363 = vsub.f32 %v1277, %v1342
      %v1364 = vsub.f32 %v1279, %v1342
      %v1365 = vsub.f32 %v1281, %v1342
      %v1366 = vsub.f32 %v1283, %v1342
      %v1367 = vsub.f32 %v1285, %v1342
      %v1368 = vsub.f32 %v1287, %v1342
      %v1369 = vsub.f32 %v1289, %v1342
      %v1370 = vsub.f32 %v1291, %v1342
      %v1371 = vsub.f32 %v1293, %v1342
      %v1372 = vsub.f32 %v1295, %v1342
      %v1373 = vsub.f32 %v1297, %v1342
      %v1374 = vsub.f32 %v1299, %v1342
      %v1375 = vsub.f32 %v1301, %v1342
      %v1376 = vsub.f32 %v1303, %v1342
      %v1377 = vsub.f32 %v1305, %v1342
      %v1378 = vsub.f32 %v1307, %v1342
      %v1379 = vmul.f32 %v1343, 1.442695
      %v1380 = vpow.pop %v1379
      %v1381 = vmul.f32 %v1344, 1.442695
      %v1382 = vpow.pop %v1381
      %v1383 = vmul.f32 %v1345, 1.442695
      %v1384 = vpow.pop %v1383
      %v1385 = vmul.f32 %v1346, 1.442695
      %v1386 = vpow.pop %v1385
      %v1387 = vmul.f32 %v1347, 1.442695
      %v1388 = vpow.pop %v1387
      %v1389 = vmul.f32 %v1348, 1.442695
      %v1390 = vpow.pop %v1389
      %v1391 = vmul.f32 %v1349, 1.442695
      %v1392 = vpow.pop %v1391
      %v1393 = vmul.f32 %v1350, 1.442695
      %v1394 = vpow.pop %v1393
      %v1395 = vmul.f32 %v1351, 1.442695
      %v1396 = vpow.pop %v1395
      %v1397 = vmul.f32 %v1352, 1.442695
      %v1398 = vpow.pop %v1397
      %v1399 = vmul.f32 %v1353, 1.442695
      %v1400 = vpow.pop %v1399
      %v1401 = vmul.f32 %v1354, 1.442695
      %v1402 = vpow.pop %v1401
      %v1403 = vmul.f32 %v1355, 1.442695
      %v1404 = vpow.pop %v1403
      %v1405 = vmul.f32 %v1356, 1.442695
      %v1406 = vpow.pop %v1405
      %v1407 = vmul.f32 %v1357, 1.442695
      %v1408 = vpow.pop %v1407
      %v1409 = vmul.f32 %v1358, 1.442695
      %v1410 = vpow.pop %v1409
      %v1411 = vmul.f32 %v1359, 1.442695
      %v1412 = vpow.pop %v1411
      %v1413 = vmul.f32 %v1360, 1.442695
      %v1414 = vpow.pop %v1413
      %v1415 = vmul.f32 %v1361, 1.442695
      %v1416 = vpow.pop %v1415
      %v1417 = vmul.f32 %v1362, 1.442695
      %v1418 = vpow.pop %v1417
      %v1419 = vmul.f32 %v1363, 1.442695
      %v1420 = vpow.pop %v1419
      %v1421 = vmul.f32 %v1364, 1.442695
      %v1422 = vpow.pop %v1421
      %v1423 = vmul.f32 %v1365, 1.442695
      %v1424 = vpow.pop %v1423
      %v1425 = vmul.f32 %v1366, 1.442695
      %v1426 = vpow.pop %v1425
      %v1427 = vmul.f32 %v1367, 1.442695
      %v1428 = vpow.pop %v1427
      %v1429 = vmul.f32 %v1368, 1.442695
      %v1430 = vpow.pop %v1429
      %v1431 = vmul.f32 %v1369, 1.442695
      %v1432 = vpow.pop %v1431
      %v1433 = vmul.f32 %v1370, 1.442695
      %v1434 = vpow.pop %v1433
      %v1435 = vmul.f32 %v1371, 1.442695
      %v1436 = vpow.pop %v1435
      %v1437 = vmul.f32 %v1372, 1.442695
      %v1438 = vpow.pop %v1437
      %v1439 = vmul.f32 %v1373, 1.442695
      %v1440 = vpow.pop %v1439
      %v1441 = vmul.f32 %v1374, 1.442695
      %v1442 = vpow.pop %v1441
      %v1443 = vmul.f32 %v1375, 1.442695
      %v1444 = vpow.pop %v1443
      %v1445 = vmul.f32 %v1376, 1.442695
      %v1446 = vpow.pop %v1445
      %v1447 = vmul.f32 %v1377, 1.442695
      %v1448 = vpow.pop %v1447
      %v1449 = vmul.f32 %v1378, 1.442695
      %v1450 = vpow.pop %v1449
      %v1451 = vadd.f32 %v1380, %v1382
      %v1452 = vadd.f32 %v1451, %v1384
      %v1453 = vadd.f32 %v1452, %v1386
      %v1454 = vadd.f32 %v1453, %v1388
      %v1455 = vadd.f32 %v1454, %v1390
      %v1456 = vadd.f32 %v1455, %v1392
      %v1457 = vadd.f32 %v1456, %v1394
      %v1458 = vadd.f32 %v1457, %v1396
      %v1459 = vadd.f32 %v1458, %v1398
      %v1460 = vadd.f32 %v1459, %v1400
      %v1461 = vadd.f32 %v1460, %v1402
      %v1462 = vadd.f32 %v1461, %v1404
      %v1463 = vadd.f32 %v1462, %v1406
      %v1464 = vadd.f32 %v1463, %v1408
      %v1465 = vadd.f32 %v1464, %v1410
      %v1466 = vadd.f32 %v1465, %v1412
      %v1467 = vadd.f32 %v1466, %v1414
      %v1468 = vadd.f32 %v1467, %v1416
      %v1469 = vadd.f32 %v1468, %v1418
      %v1470 = vadd.f32 %v1469, %v1420
      %v1471 = vadd.f32 %v1470, %v1422
      %v1472 = vadd.f32 %v1471, %v1424
      %v1473 = vadd.f32 %v1472, %v1426
      %v1474 = vadd.f32 %v1473, %v1428
      %v1475 = vadd.f32 %v1474, %v1430
      %v1476 = vadd.f32 %v1475, %v1432
      %v1477 = vadd.f32 %v1476, %v1434
      %v1478 = vadd.f32 %v1477, %v1436
      %v1479 = vadd.f32 %v1478, %v1438
      %v1480 = vadd.f32 %v1479, %v1440
      %v1481 = vadd.f32 %v1480, %v1442
      %v1482 = vadd.f32 %v1481, %v1444
      %v1483 = vadd.f32 %v1482, %v1446
      %v1484 = vadd.f32 %v1483, %v1448
      %v1485 = vadd.f32 %v1484, %v1450
      %v1486 = vrcp.pop %v1485
      %v1487 = vmul.f32 %v1380, %v1486
      %v1488 = vmul.f32 %v1382, %v1486
      %v1489 = vmul.f32 %v1384, %v1486
      %v1490 = vmul.f32 %v1386, %v1486
      %v1491 = vmul.f32 %v1388, %v1486
      %v1492 = vmul.f32 %v1390, %v1486
      %v1493 = vmul.f32 %v1392, %v1486
      %v1494 = vmul.f32 %v1394, %v1486
      %v1495 = vmul.f32 %v1396, %v1486
      %v1496 = vmul.f32 %v1398, %v1486
      %v1497 = vmul.f32 %v1400, %v1486
      %v1498 = vmul.f32 %v1402, %v1486
      %v1499 = vmul.f32 %v1404, %v1486
      %v1500 = vmul.f32 %v1406, %v1486
      %v1501 = vmul.f32 %v1408, %v1486
      %v1502 = vmul.f32 %v1410, %v1486
      %v1503 = vmul.f32 %v1412, %v1486
      %v1504 = vmul.f32 %v1414, %v1486
      %v1505 = vmul.f32 %v1416, %v1486
      %v1506 = vmul.f32 %v1418, %v1486
      %v1507 = vmul.f32 %v1420, %v1486
      %v1508 = vmul.f32 %v1422, %v1486
      %v1509 = vmul.f32 %v1424, %v1486
      %v1510 = vmul.f32 %v1426, %v1486
      %v1511 = vmul.f32 %v1428, %v1486
      %v1512 = vmul.f32 %v1430, %v1486
      %v1513 = vmul.f32 %v1432, %v1486
      %v1514 = vmul.f32 %v1434, %v1486
      %v1515 = vmul.f32 %v1436, %v1486
      %v1516 = vmul.f32 %v1438, %v1486
      %v1517 = vmul.f32 %v1440, %v1486
      %v1518 = vmul.f32 %v1442, %v1486
      %v1519 = vmul.f32 %v1444, %v1486
      %v1520 = vmul.f32 %v1446, %v1486
      %v1521 = vmul.f32 %v1448, %v1486
      %v1522 = vmul.f32 %v1450, %v1486
      %v1523 = vld [vmem:[%s515] sm:$0xff]
      %v1524 = vld [vmem:[%s515 + $0x8] sm:$0xff]
      %v1525 = vld [vmem:[%s515 + $0x10] sm:$0xff]
      %v1526 = vld [vmem:[%s515 + $0x18] sm:$0xff]
      %v1527 = vld [vmem:[%s515 + $0x20] sm:$0xff]
      %v1528 = vld [vmem:[%s515 + $0x28] sm:$0xff]
      %v1529 = vld [vmem:[%s515 + $0x30] sm:$0xff]
      %v1530 = vld [vmem:[%s515 + $0x38] sm:$0xff]
      %v1531 = vld [vmem:[%s515 + $0x40] sm:$0xff]
      %v1532 = vld [vmem:[%s515 + $0x48] sm:$0xff]
      %v1533 = vld [vmem:[%s515 + $0x50] sm:$0xff]
      %v1534 = vld [vmem:[%s515 + $0x58] sm:$0xff]
      %v1535 = vld [vmem:[%s515 + $0x60] sm:$0xff]
      %v1536 = vld [vmem:[%s515 + $0x68] sm:$0xff]
      %v1537 = vld [vmem:[%s515 + $0x70] sm:$0xff]
      %v1538 = vld [vmem:[%s515 + $0x78] sm:$0xff]
      %v1539 = vld [vmem:[%s515 + $0x80] sm:$0xff]
      %v1540 = vld [vmem:[%s515 + $0x88] sm:$0xff]
      %v1541 = vld [vmem:[%s515 + $0x90] sm:$0xff]
      %v1542 = vld [vmem:[%s515 + $0x98] sm:$0xff]
      %v1543 = vld [vmem:[%s515 + $0xa0] sm:$0xff]
      %v1544 = vld [vmem:[%s515 + $0xa8] sm:$0xff]
      %v1545 = vld [vmem:[%s515 + $0xb0] sm:$0xff]
      %v1546 = vld [vmem:[%s515 + $0xb8] sm:$0xff]
      %v1547 = vld [vmem:[%s515 + $0xc0] sm:$0xff]
      %v1548 = vld [vmem:[%s515 + $0xc8] sm:$0xff]
      %v1549 = vld [vmem:[%s515 + $0xd0] sm:$0xff]
      %v1550 = vld [vmem:[%s515 + $0xd8] sm:$0xff]
      %v1551 = vld [vmem:[%s515 + $0xe0] sm:$0xff]
      %v1552 = vld [vmem:[%s515 + $0xe8] sm:$0xff]
      %v1553 = vld [vmem:[%s515 + $0xf0] sm:$0xff]
      %v1554 = vld [vmem:[%s515 + $0xf8] sm:$0xff]
      %v1555 = vld [vmem:[%s515 + $0x100] sm:$0xff]
      %v1556 = vld [vmem:[%s515 + $0x108] sm:$0xff]
      %v1557 = vld [vmem:[%s515 + $0x110] sm:$0xff]
      %v1558 = vld [vmem:[%s515 + $0x118] sm:$0xff]
      %v1559 = vmul.f32 %v1523, %v1487
      %v1560 = vmul.f32 %v1524, %v1488
      %v1561 = vmul.f32 %v1525, %v1489
      %v1562 = vmul.f32 %v1526, %v1490
      %v1563 = vmul.f32 %v1527, %v1491
      %v1564 = vmul.f32 %v1528, %v1492
      %v1565 = vmul.f32 %v1529, %v1493
      %v1566 = vmul.f32 %v1530, %v1494
      %v1567 = vmul.f32 %v1531, %v1495
      %v1568 = vmul.f32 %v1532, %v1496
      %v1569 = vmul.f32 %v1533, %v1497
      %v1570 = vmul.f32 %v1534, %v1498
      %v1571 = vmul.f32 %v1535, %v1499
      %v1572 = vmul.f32 %v1536, %v1500
      %v1573 = vmul.f32 %v1537, %v1501
      %v1574 = vmul.f32 %v1538, %v1502
      %v1575 = vmul.f32 %v1539, %v1503
      %v1576 = vmul.f32 %v1540, %v1504
      %v1577 = vmul.f32 %v1541, %v1505
      %v1578 = vmul.f32 %v1542, %v1506
      %v1579 = vmul.f32 %v1543, %v1507
      %v1580 = vmul.f32 %v1544, %v1508
      %v1581 = vmul.f32 %v1545, %v1509
      %v1582 = vmul.f32 %v1546, %v1510
      %v1583 = vmul.f32 %v1547, %v1511
      %v1584 = vmul.f32 %v1548, %v1512
      %v1585 = vmul.f32 %v1549, %v1513
      %v1586 = vmul.f32 %v1550, %v1514
      %v1587 = vmul.f32 %v1551, %v1515
      %v1588 = vmul.f32 %v1552, %v1516
      %v1589 = vmul.f32 %v1553, %v1517
      %v1590 = vmul.f32 %v1554, %v1518
      %v1591 = vmul.f32 %v1555, %v1519
      %v1592 = vmul.f32 %v1556, %v1520
      %v1593 = vmul.f32 %v1557, %v1521
      %v1594 = vmul.f32 %v1558, %v1522
      %vm1595 = vcmask 523264
      %v1596 = vsel %vm1595, %v1559, 0.0
      %v1597 = vsel %vm1595, %v1560, 0.0
      %v1598 = vadd.f32 %v1596, %v1597
      %v1599 = vsel %vm1595, %v1561, 0.0
      %v1600 = vadd.f32 %v1598, %v1599
      %v1601 = vsel %vm1595, %v1562, 0.0
      %v1602 = vadd.f32 %v1600, %v1601
      %v1603 = vsel %vm1595, %v1563, 0.0
      %v1604 = vadd.f32 %v1602, %v1603
      %v1605 = vsel %vm1595, %v1564, 0.0
      %v1606 = vadd.f32 %v1604, %v1605
      %v1607 = vsel %vm1595, %v1565, 0.0
      %v1608 = vadd.f32 %v1606, %v1607
      %v1609 = vsel %vm1595, %v1566, 0.0
      %v1610 = vadd.f32 %v1608, %v1609
      %v1611 = vsel %vm1595, %v1567, 0.0
      %v1612 = vadd.f32 %v1610, %v1611
      %v1613 = vsel %vm1595, %v1568, 0.0
      %v1614 = vadd.f32 %v1612, %v1613
      %v1615 = vsel %vm1595, %v1569, 0.0
      %v1616 = vadd.f32 %v1614, %v1615
      %v1617 = vsel %vm1595, %v1570, 0.0
      %v1618 = vadd.f32 %v1616, %v1617
      %v1619 = vsel %vm1595, %v1571, 0.0
      %v1620 = vadd.f32 %v1618, %v1619
      %v1621 = vsel %vm1595, %v1572, 0.0
      %v1622 = vadd.f32 %v1620, %v1621
      %v1623 = vsel %vm1595, %v1573, 0.0
      %v1624 = vadd.f32 %v1622, %v1623
      %v1625 = vsel %vm1595, %v1574, 0.0
      %v1626 = vadd.f32 %v1624, %v1625
      %v1627 = vsel %vm1595, %v1575, 0.0
      %v1628 = vadd.f32 %v1626, %v1627
      %v1629 = vsel %vm1595, %v1576, 0.0
      %v1630 = vadd.f32 %v1628, %v1629
      %v1631 = vsel %vm1595, %v1577, 0.0
      %v1632 = vadd.f32 %v1630, %v1631
      %v1633 = vsel %vm1595, %v1578, 0.0
      %v1634 = vadd.f32 %v1632, %v1633
      %v1635 = vsel %vm1595, %v1579, 0.0
      %v1636 = vadd.f32 %v1634, %v1635
      %v1637 = vsel %vm1595, %v1580, 0.0
      %v1638 = vadd.f32 %v1636, %v1637
      %v1639 = vsel %vm1595, %v1581, 0.0
      %v1640 = vadd.f32 %v1638, %v1639
      %v1641 = vsel %vm1595, %v1582, 0.0
      %v1642 = vadd.f32 %v1640, %v1641
      %v1643 = vsel %vm1595, %v1583, 0.0
      %v1644 = vadd.f32 %v1642, %v1643
      %v1645 = vsel %vm1595, %v1584, 0.0
      %v1646 = vadd.f32 %v1644, %v1645
      %v1647 = vsel %vm1595, %v1585, 0.0
      %v1648 = vadd.f32 %v1646, %v1647
      %v1649 = vsel %vm1595, %v1586, 0.0
      %v1650 = vadd.f32 %v1648, %v1649
      %v1651 = vsel %vm1595, %v1587, 0.0
      %v1652 = vadd.f32 %v1650, %v1651
      %v1653 = vsel %vm1595, %v1588, 0.0
      %v1654 = vadd.f32 %v1652, %v1653
      %v1655 = vsel %vm1595, %v1589, 0.0
      %v1656 = vadd.f32 %v1654, %v1655
      %v1657 = vsel %vm1595, %v1590, 0.0
      %v1658 = vadd.f32 %v1656, %v1657
      %v1659 = vsel %vm1595, %v1591, 0.0
      %v1660 = vadd.f32 %v1658, %v1659
      %v1661 = vsel %vm1595, %v1592, 0.0
      %v1662 = vadd.f32 %v1660, %v1661
      %v1663 = vsel %vm1595, %v1593, 0.0
      %v1664 = vadd.f32 %v1662, %v1663
      %v1665 = vsel %vm1595, %v1594, 0.0
      %v1666 = vadd.f32 %v1664, %v1665
      %v1667 = vld [vmem:[%s9] sm:$0xff]
      %v1668 = vld [vmem:[%s9 + $0x8] sm:$0xff]
      %v1669 = vld [vmem:[%s9 + $0x10] sm:$0xff]
      %v1670 = vld [vmem:[%s9 + $0x18] sm:$0xff]
      %v1671 = vld [vmem:[%s9 + $0x20] sm:$0xff]
      %v1672 = vld [vmem:[%s9 + $0x28] sm:$0xff]
      %v1673 = vld [vmem:[%s9 + $0x30] sm:$0xff]
      %v1674 = vld [vmem:[%s9 + $0x38] sm:$0xff]
      %v1675 = vld [vmem:[%s9 + $0x40] sm:$0xff]
      %v1676 = vld [vmem:[%s9 + $0x48] sm:$0xff]
      %v1677 = vld [vmem:[%s9 + $0x50] sm:$0xff]
      %v1678 = vld [vmem:[%s9 + $0x58] sm:$0xff]
      %v1679 = vld [vmem:[%s9 + $0x60] sm:$0xff]
      %v1680 = vld [vmem:[%s9 + $0x68] sm:$0xff]
      %v1681 = vld [vmem:[%s9 + $0x70] sm:$0xff]
      %v1682 = vld [vmem:[%s9 + $0x78] sm:$0xff]
      %v1683 = vld [vmem:[%s9 + $0x80] sm:$0xff]
      %v1684 = vld [vmem:[%s9 + $0x88] sm:$0xff]
      %v1685 = vld [vmem:[%s9 + $0x90] sm:$0xff]
      %v1686 = vld [vmem:[%s9 + $0x98] sm:$0xff]
      %v1687 = vld [vmem:[%s9 + $0xa0] sm:$0xff]
      %v1688 = vld [vmem:[%s9 + $0xa8] sm:$0xff]
      %v1689 = vld [vmem:[%s9 + $0xb0] sm:$0xff]
      %v1690 = vld [vmem:[%s9 + $0xb8] sm:$0xff]
      %v1691 = vld [vmem:[%s9 + $0xc0] sm:$0xff]
      %v1692 = vld [vmem:[%s9 + $0xc8] sm:$0xff]
      %v1693 = vld [vmem:[%s9 + $0xd0] sm:$0xff]
      %v1694 = vld [vmem:[%s9 + $0xd8] sm:$0xff]
      %v1695 = vld [vmem:[%s9 + $0xe0] sm:$0xff]
      %v1696 = vld [vmem:[%s9 + $0xe8] sm:$0xff]
      %v1697 = vld [vmem:[%s9 + $0xf0] sm:$0xff]
      %v1698 = vld [vmem:[%s9 + $0xf8] sm:$0xff]
      %v1699 = vld [vmem:[%s10] sm:$0xff]
      %v1700 = vld [vmem:[%s10 + $0x8] sm:$0xff]
      %v1701 = vld [vmem:[%s10 + $0x10] sm:$0xff]
      %v1702 = vld [vmem:[%s10 + $0x18] sm:$0xff]
      %v1703 = vld [vmem:[%s10 + $0x20] sm:$0xff]
      %v1704 = vld [vmem:[%s10 + $0x28] sm:$0xff]
      %v1705 = vld [vmem:[%s10 + $0x30] sm:$0xff]
      %v1706 = vld [vmem:[%s10 + $0x38] sm:$0xff]
      %v1707 = vld [vmem:[%s10 + $0x40] sm:$0xff]
      %v1708 = vld [vmem:[%s10 + $0x48] sm:$0xff]
      %v1709 = vld [vmem:[%s10 + $0x50] sm:$0xff]
      %v1710 = vld [vmem:[%s10 + $0x58] sm:$0xff]
      %v1711 = vld [vmem:[%s10 + $0x60] sm:$0xff]
      %v1712 = vld [vmem:[%s10 + $0x68] sm:$0xff]
      %v1713 = vld [vmem:[%s10 + $0x70] sm:$0xff]
      %v1714 = vld [vmem:[%s10 + $0x78] sm:$0xff]
      %v1715 = vld [vmem:[%s10 + $0x80] sm:$0xff]
      %v1716 = vld [vmem:[%s10 + $0x88] sm:$0xff]
      %v1717 = vld [vmem:[%s10 + $0x90] sm:$0xff]
      %v1718 = vld [vmem:[%s10 + $0x98] sm:$0xff]
      %v1719 = vld [vmem:[%s10 + $0xa0] sm:$0xff]
      %v1720 = vld [vmem:[%s10 + $0xa8] sm:$0xff]
      %v1721 = vld [vmem:[%s10 + $0xb0] sm:$0xff]
      %v1722 = vld [vmem:[%s10 + $0xb8] sm:$0xff]
      %v1723 = vld [vmem:[%s10 + $0xc0] sm:$0xff]
      %v1724 = vld [vmem:[%s10 + $0xc8] sm:$0xff]
      %v1725 = vld [vmem:[%s10 + $0xd0] sm:$0xff]
      %v1726 = vld [vmem:[%s10 + $0xd8] sm:$0xff]
      %v1727 = vld [vmem:[%s10 + $0xe0] sm:$0xff]
      %v1728 = vld [vmem:[%s10 + $0xe8] sm:$0xff]
      %v1729 = vld [vmem:[%s10 + $0xf0] sm:$0xff]
      %v1730 = vld [vmem:[%s10 + $0xf8] sm:$0xff]
      %v1731 = vld [vmem:[%s10 + $0x100] sm:$0xff]
      %v1732 = vld [vmem:[%s10 + $0x108] sm:$0xff]
      %v1733 = vld [vmem:[%s10 + $0x110] sm:$0xff]
      %v1734 = vld [vmem:[%s10 + $0x118] sm:$0xff]
      %v1735 = vld [vmem:[%s10 + $0x120] sm:$0xff]
      %v1736 = vld [vmem:[%s10 + $0x128] sm:$0xff]
      %v1737 = vld [vmem:[%s10 + $0x130] sm:$0xff]
      %v1738 = vld [vmem:[%s10 + $0x138] sm:$0xff]
      %v1739 = vld [vmem:[%s10 + $0x140] sm:$0xff]
      %v1740 = vld [vmem:[%s10 + $0x148] sm:$0xff]
      %v1741 = vld [vmem:[%s10 + $0x150] sm:$0xff]
      %v1742 = vld [vmem:[%s10 + $0x158] sm:$0xff]
      %v1743 = vld [vmem:[%s10 + $0x160] sm:$0xff]
      %v1744 = vld [vmem:[%s10 + $0x168] sm:$0xff]
      %v1745 = vld [vmem:[%s10 + $0x170] sm:$0xff]
      %v1746 = vld [vmem:[%s10 + $0x178] sm:$0xff]
      %v1747 = vld [vmem:[%s10 + $0x180] sm:$0xff]
      %v1748 = vld [vmem:[%s10 + $0x188] sm:$0xff]
      %v1749 = vld [vmem:[%s10 + $0x190] sm:$0xff]
      %v1750 = vld [vmem:[%s10 + $0x198] sm:$0xff]
      %v1751 = vld [vmem:[%s10 + $0x1a0] sm:$0xff]
      %v1752 = vld [vmem:[%s10 + $0x1a8] sm:$0xff]
      %v1753 = vld [vmem:[%s10 + $0x1b0] sm:$0xff]
      %v1754 = vld [vmem:[%s10 + $0x1b8] sm:$0xff]
      %v1755 = vld [vmem:[%s10 + $0x1c0] sm:$0xff]
      %v1756 = vld [vmem:[%s10 + $0x1c8] sm:$0xff]
      %v1757 = vld [vmem:[%s10 + $0x1d0] sm:$0xff]
      %v1758 = vld [vmem:[%s10 + $0x1d8] sm:$0xff]
      %v1759 = vld [vmem:[%s10 + $0x1e0] sm:$0xff]
      %v1760 = vld [vmem:[%s10 + $0x1e8] sm:$0xff]
      %v1761 = vld [vmem:[%s10 + $0x1f0] sm:$0xff]
      %v1762 = vld [vmem:[%s10 + $0x1f8] sm:$0xff]
      %1763 = vmatprep.subr.mxu0 %v1700
      %1764 = vmatpush1.msra.mxu0 %v1699
      %1765 = vmatprep.subr.mxu0 %v1704
      %1766 = vmatpush1.msra.mxu0 %v1703
      %1767 = vmatprep.subr.mxu0 %v1708
      %1768 = vmatpush1.msra.mxu0 %v1707
      %1769 = vmatprep.subr.mxu0 %v1712
      %1770 = vmatpush1.msra.mxu0 %v1711
      %1771 = vmatprep.subr.mxu0 %v1716
      %1772 = vmatpush1.msra.mxu0 %v1715
      %1773 = vmatprep.subr.mxu0 %v1720
      %1774 = vmatpush1.msra.mxu0 %v1719
      %1775 = vmatprep.subr.mxu0 %v1724
      %1776 = vmatpush1.msra.mxu0 %v1723
      %1777 = vmatprep.subr.mxu0 %v1728
      %1778 = vmatpush1.msra.mxu0 %v1727
      %1779 = vmatprep.subr.mxu0 %v1732
      %1780 = vmatpush1.msra.mxu0 %v1731
      %1781 = vmatprep.subr.mxu0 %v1736
      %1782 = vmatpush1.msra.mxu0 %v1735
      %1783 = vmatprep.subr.mxu0 %v1740
      %1784 = vmatpush1.msra.mxu0 %v1739
      %1785 = vmatprep.subr.mxu0 %v1744
      %1786 = vmatpush1.msra.mxu0 %v1743
      %1787 = vmatprep.subr.mxu0 %v1748
      %1788 = vmatpush1.msra.mxu0 %v1747
      %1789 = vmatprep.subr.mxu0 %v1752
      %1790 = vmatpush1.msra.mxu0 %v1751
      %1791 = vmatprep.subr.mxu0 %v1756
      %1792 = vmatpush1.msra.mxu0 %v1755
      %1793 = vmatprep.subr.mxu0 %v1760
      %1794 = vmatpush1.msra.mxu0 %v1759
      %1795 = vmatprep.subr.mxu0 0.0
      %1796 = vmatpush1.msra.mxu0 0.0
      %1797 = vmatprep.subr.mxu0 0.0
      %1798 = vmatpush1.msra.mxu0 0.0
      %1799 = vmatprep.subr.mxu0 0.0
      %1800 = vmatpush1.msra.mxu0 0.0
      %1801 = vmatprep.subr.mxu0 0.0
      %1802 = vmatpush1.msra.mxu0 0.0
      %1803 = vmatprep.subr.mxu0 0.0
      %1804 = vmatpush1.msra.mxu0 0.0
      %1805 = vmatprep.subr.mxu0 0.0
      %1806 = vmatpush1.msra.mxu0 0.0
      %1807 = vmatprep.subr.mxu0 0.0
      %1808 = vmatpush1.msra.mxu0 0.0
      %1809 = vmatprep.subr.mxu0 0.0
      %1810 = vmatpush1.msra.mxu0 0.0
      %1811 = vmatprep.subr.mxu0 0.0
      %1812 = vmatpush1.msra.mxu0 0.0
      %1813 = vmatprep.subr.mxu0 0.0
      %1814 = vmatpush1.msra.mxu0 0.0
      %1815 = vmatprep.subr.mxu0 0.0
      %1816 = vmatpush1.msra.mxu0 0.0
      %1817 = vmatprep.subr.mxu0 0.0
      %1818 = vmatpush1.msra.mxu0 0.0
      %1819 = vmatprep.subr.mxu0 0.0
      %1820 = vmatpush1.msra.mxu0 0.0
      %1821 = vmatprep.subr.mxu0 0.0
      %1822 = vmatpush1.msra.mxu0 0.0
      %1823 = vmatprep.subr.mxu0 0.0
      %1824 = vmatpush1.msra.mxu0 0.0
      %1825 = vmatprep.subr.mxu0 0.0
      %1826 = vmatpush1.msra.mxu0 0.0
      %1827 = vmatprep.mubr.f32.mxu0 0.0
      %1828 = vmatmul.mubr.f32.gmra.mrb[0].mxu0 %v989
      %v1829 = vpop.f32.mrb[0].mxu0
      %v1830 = vadd.f32 0.0, %v1829
      %v1831 = vpop.f32.mrb[0].mxu0
      %v1832 = vadd.f32 0.0, %v1831
      %1833 = vdwg.mxu0
      %1834 = vmatprep.subr.mxu0 %v1702
      %1835 = vmatpush1.msra.mxu0 %v1701
      %1836 = vmatprep.subr.mxu0 %v1706
      %1837 = vmatpush1.msra.mxu0 %v1705
      %1838 = vmatprep.subr.mxu0 %v1710
      %1839 = vmatpush1.msra.mxu0 %v1709
      %1840 = vmatprep.subr.mxu0 %v1714
      %1841 = vmatpush1.msra.mxu0 %v1713
      %1842 = vmatprep.subr.mxu0 %v1718
      %1843 = vmatpush1.msra.mxu0 %v1717
      %1844 = vmatprep.subr.mxu0 %v1722
      %1845 = vmatpush1.msra.mxu0 %v1721
      %1846 = vmatprep.subr.mxu0 %v1726
      %1847 = vmatpush1.msra.mxu0 %v1725
      %1848 = vmatprep.subr.mxu0 %v1730
      %1849 = vmatpush1.msra.mxu0 %v1729
      %1850 = vmatprep.subr.mxu0 %v1734
      %1851 = vmatpush1.msra.mxu0 %v1733
      %1852 = vmatprep.subr.mxu0 %v1738
      %1853 = vmatpush1.msra.mxu0 %v1737
      %1854 = vmatprep.subr.mxu0 %v1742
      %1855 = vmatpush1.msra.mxu0 %v1741
      %1856 = vmatprep.subr.mxu0 %v1746
      %1857 = vmatpush1.msra.mxu0 %v1745
      %1858 = vmatprep.subr.mxu0 %v1750
      %1859 = vmatpush1.msra.mxu0 %v1749
      %1860 = vmatprep.subr.mxu0 %v1754
      %1861 = vmatpush1.msra.mxu0 %v1753
      %1862 = vmatprep.subr.mxu0 %v1758
      %1863 = vmatpush1.msra.mxu0 %v1757
      %1864 = vmatprep.subr.mxu0 %v1762
      %1865 = vmatpush1.msra.mxu0 %v1761
      %1866 = vmatprep.subr.mxu0 0.0
      %1867 = vmatpush1.msra.mxu0 0.0
      %1868 = vmatprep.subr.mxu0 0.0
      %1869 = vmatpush1.msra.mxu0 0.0
      %1870 = vmatprep.subr.mxu0 0.0
      %1871 = vmatpush1.msra.mxu0 0.0
      %1872 = vmatprep.subr.mxu0 0.0
      %1873 = vmatpush1.msra.mxu0 0.0
      %1874 = vmatprep.subr.mxu0 0.0
      %1875 = vmatpush1.msra.mxu0 0.0
      %1876 = vmatprep.subr.mxu0 0.0
      %1877 = vmatpush1.msra.mxu0 0.0
      %1878 = vmatprep.subr.mxu0 0.0
      %1879 = vmatpush1.msra.mxu0 0.0
      %1880 = vmatprep.subr.mxu0 0.0
      %1881 = vmatpush1.msra.mxu0 0.0
      %1882 = vmatprep.subr.mxu0 0.0
      %1883 = vmatpush1.msra.mxu0 0.0
      %1884 = vmatprep.subr.mxu0 0.0
      %1885 = vmatpush1.msra.mxu0 0.0
      %1886 = vmatprep.subr.mxu0 0.0
      %1887 = vmatpush1.msra.mxu0 0.0
      %1888 = vmatprep.subr.mxu0 0.0
      %1889 = vmatpush1.msra.mxu0 0.0
      %1890 = vmatprep.subr.mxu0 0.0
      %1891 = vmatpush1.msra.mxu0 0.0
      %1892 = vmatprep.subr.mxu0 0.0
      %1893 = vmatpush1.msra.mxu0 0.0
      %1894 = vmatprep.subr.mxu0 0.0
      %1895 = vmatpush1.msra.mxu0 0.0
      %1896 = vmatprep.subr.mxu0 0.0
      %1897 = vmatpush1.msra.mxu0 0.0
      %1898 = vmatprep.mubr.f32.mxu0 0.0
      %1899 = vmatmul.mubr.f32.gmra.mrb[0].mxu0 %v989
      %v1900 = vpop.f32.mrb[0].mxu0
      %v1901 = vadd.f32 0.0, %v1900
      %v1902 = vpop.f32.mrb[0].mxu0
      %v1903 = vadd.f32 0.0, %v1902
      %1904 = vdwg.mxu0
      %v1906 = vsel %vm1595, %v1666, 0
      %1908 = vmatprep.subr.mxu0 %v1668
      %1909 = vmatpush1.msra.mxu0 %v1667
      %1910 = vmatprep.subr.mxu0 %v1672
      %1911 = vmatpush1.msra.mxu0 %v1671
      %1912 = vmatprep.subr.mxu0 %v1676
      %1913 = vmatpush1.msra.mxu0 %v1675
      %1914 = vmatprep.subr.mxu0 %v1680
      %1915 = vmatpush1.msra.mxu0 %v1679
      %1916 = vmatprep.subr.mxu0 %v1684
      %1917 = vmatpush1.msra.mxu0 %v1683
      %1918 = vmatprep.subr.mxu0 %v1688
      %1919 = vmatpush1.msra.mxu0 %v1687
      %1920 = vmatprep.subr.mxu0 %v1692
      %1921 = vmatpush1.msra.mxu0 %v1691
      %1922 = vmatprep.subr.mxu0 %v1696
      %1923 = vmatpush1.msra.mxu0 %v1695
      %1924 = vmatprep.subr.mxu0 0.0
      %1925 = vmatpush1.msra.mxu0 0.0
      %1926 = vmatprep.subr.mxu0 0.0
      %1927 = vmatpush1.msra.mxu0 0.0
      %1928 = vmatprep.subr.mxu0 0.0
      %1929 = vmatpush1.msra.mxu0 0.0
      %1930 = vmatprep.subr.mxu0 0.0
      %1931 = vmatpush1.msra.mxu0 0.0
      %1932 = vmatprep.subr.mxu0 0.0
      %1933 = vmatpush1.msra.mxu0 0.0
      %1934 = vmatprep.subr.mxu0 0.0
      %1935 = vmatpush1.msra.mxu0 0.0
      %1936 = vmatprep.subr.mxu0 0.0
      %1937 = vmatpush1.msra.mxu0 0.0
      %1938 = vmatprep.subr.mxu0 0.0
      %1939 = vmatpush1.msra.mxu0 0.0
      %1940 = vmatprep.subr.mxu0 0.0
      %1941 = vmatpush1.msra.mxu0 0.0
      %1942 = vmatprep.subr.mxu0 0.0
      %1943 = vmatpush1.msra.mxu0 0.0
      %1944 = vmatprep.subr.mxu0 0.0
      %1945 = vmatpush1.msra.mxu0 0.0
      %1946 = vmatprep.subr.mxu0 0.0
      %1947 = vmatpush1.msra.mxu0 0.0
      %1948 = vmatprep.subr.mxu0 0.0
      %1949 = vmatpush1.msra.mxu0 0.0
      %1950 = vmatprep.subr.mxu0 0.0
      %1951 = vmatpush1.msra.mxu0 0.0
      %1952 = vmatprep.subr.mxu0 0.0
      %1953 = vmatpush1.msra.mxu0 0.0
      %1954 = vmatprep.subr.mxu0 0.0
      %1955 = vmatpush1.msra.mxu0 0.0
      %1956 = vmatprep.subr.mxu0 0.0
      %1957 = vmatpush1.msra.mxu0 0.0
      %1958 = vmatprep.subr.mxu0 0.0
      %1959 = vmatpush1.msra.mxu0 0.0
      %1960 = vmatprep.subr.mxu0 0.0
      %1961 = vmatpush1.msra.mxu0 0.0
      %1962 = vmatprep.subr.mxu0 0.0
      %1963 = vmatpush1.msra.mxu0 0.0
      %1964 = vmatprep.subr.mxu0 0.0
      %1965 = vmatpush1.msra.mxu0 0.0
      %1966 = vmatprep.subr.mxu0 0.0
      %1967 = vmatpush1.msra.mxu0 0.0
      %1968 = vmatprep.subr.mxu0 0.0
      %1969 = vmatpush1.msra.mxu0 0.0
      %1970 = vmatprep.subr.mxu0 0.0
      %1971 = vmatpush1.msra.mxu0 0.0
      %1972 = vmatprep.mubr.f32.mxu0 0.0
      %1973 = vmatmul.mubr.f32.gmra.mrb[0].mxu0 %v1906
      %v1974 = vpop.f32.mrb[0].mxu0
      %v1975 = vadd.f32 %v1830, %v1974
      %v1976 = vpop.f32.mrb[0].mxu0
      %v1977 = vadd.f32 %v1832, %v1976
      %1978 = vdwg.mxu0
      %1979 = vmatprep.subr.mxu0 %v1670
      %1980 = vmatpush1.msra.mxu0 %v1669
      %1981 = vmatprep.subr.mxu0 %v1674
      %1982 = vmatpush1.msra.mxu0 %v1673
      %1983 = vmatprep.subr.mxu0 %v1678
      %1984 = vmatpush1.msra.mxu0 %v1677
      %1985 = vmatprep.subr.mxu0 %v1682
      %1986 = vmatpush1.msra.mxu0 %v1681
      %1987 = vmatprep.subr.mxu0 %v1686
      %1988 = vmatpush1.msra.mxu0 %v1685
      %1989 = vmatprep.subr.mxu0 %v1690
      %1990 = vmatpush1.msra.mxu0 %v1689
      %1991 = vmatprep.subr.mxu0 %v1694
      %1992 = vmatpush1.msra.mxu0 %v1693
      %1993 = vmatprep.subr.mxu0 %v1698
      %1994 = vmatpush1.msra.mxu0 %v1697
      %1995 = vmatprep.subr.mxu0 0.0
      %1996 = vmatpush1.msra.mxu0 0.0
      %1997 = vmatprep.subr.mxu0 0.0
      %1998 = vmatpush1.msra.mxu0 0.0
      %1999 = vmatprep.subr.mxu0 0.0
      %2000 = vmatpush1.msra.mxu0 0.0
      %2001 = vmatprep.subr.mxu0 0.0
      %2002 = vmatpush1.msra.mxu0 0.0
      %2003 = vmatprep.subr.mxu0 0.0
      %2004 = vmatpush1.msra.mxu0 0.0
      %2005 = vmatprep.subr.mxu0 0.0
      %2006 = vmatpush1.msra.mxu0 0.0
      %2007 = vmatprep.subr.mxu0 0.0
      %2008 = vmatpush1.msra.mxu0 0.0
      %2009 = vmatprep.subr.mxu0 0.0
      %2010 = vmatpush1.msra.mxu0 0.0
      %2011 = vmatprep.subr.mxu0 0.0
      %2012 = vmatpush1.msra.mxu0 0.0
      %2013 = vmatprep.subr.mxu0 0.0
      %2014 = vmatpush1.msra.mxu0 0.0
      %2015 = vmatprep.subr.mxu0 0.0
      %2016 = vmatpush1.msra.mxu0 0.0
      %2017 = vmatprep.subr.mxu0 0.0
      %2018 = vmatpush1.msra.mxu0 0.0
      %2019 = vmatprep.subr.mxu0 0.0
      %2020 = vmatpush1.msra.mxu0 0.0
      %2021 = vmatprep.subr.mxu0 0.0
      %2022 = vmatpush1.msra.mxu0 0.0
      %2023 = vmatprep.subr.mxu0 0.0
      %2024 = vmatpush1.msra.mxu0 0.0
      %2025 = vmatprep.subr.mxu0 0.0
      %2026 = vmatpush1.msra.mxu0 0.0
      %2027 = vmatprep.subr.mxu0 0.0
      %2028 = vmatpush1.msra.mxu0 0.0
      %2029 = vmatprep.subr.mxu0 0.0
      %2030 = vmatpush1.msra.mxu0 0.0
      %2031 = vmatprep.subr.mxu0 0.0
      %2032 = vmatpush1.msra.mxu0 0.0
      %2033 = vmatprep.subr.mxu0 0.0
      %2034 = vmatpush1.msra.mxu0 0.0
      %2035 = vmatprep.subr.mxu0 0.0
      %2036 = vmatpush1.msra.mxu0 0.0
      %2037 = vmatprep.subr.mxu0 0.0
      %2038 = vmatpush1.msra.mxu0 0.0
      %2039 = vmatprep.subr.mxu0 0.0
      %2040 = vmatpush1.msra.mxu0 0.0
      %2041 = vmatprep.subr.mxu0 0.0
      %2042 = vmatpush1.msra.mxu0 0.0
      %2043 = vmatprep.mubr.f32.mxu0 0.0
      %2044 = vmatmul.mubr.f32.gmra.mrb[0].mxu0 %v1906
      %v2045 = vpop.f32.mrb[0].mxu0
      %v2046 = vadd.f32 %v1901, %v2045
      %v2047 = vpop.f32.mrb[0].mxu0
      %v2048 = vadd.f32 %v1903, %v2047
      %2049 = vdwg.mxu0
      %v2050 = vld [vmem:[%s11] sm:$0xff]
      %v2051 = vld [vmem:[%s11 + $0x8] sm:$0xff]
      %v2052 = vld [vmem:[%s11 + $0x10] sm:$0xff]
      %v2053 = vld [vmem:[%s11 + $0x18] sm:$0xff]
      %v2054 = vld [vmem:[%s11 + $0x20] sm:$0xff]
      %v2055 = vld [vmem:[%s11 + $0x28] sm:$0xff]
      %v2056 = vld [vmem:[%s11 + $0x30] sm:$0xff]
      %v2057 = vld [vmem:[%s11 + $0x38] sm:$0xff]
      %v2058 = vld [vmem:[%s11 + $0x40] sm:$0xff]
      %v2059 = vld [vmem:[%s11 + $0x48] sm:$0xff]
      %v2060 = vld [vmem:[%s11 + $0x50] sm:$0xff]
      %v2061 = vld [vmem:[%s11 + $0x58] sm:$0xff]
      %v2062 = vld [vmem:[%s11 + $0x60] sm:$0xff]
      %v2063 = vld [vmem:[%s11 + $0x68] sm:$0xff]
      %v2064 = vld [vmem:[%s11 + $0x70] sm:$0xff]
      %v2065 = vld [vmem:[%s11 + $0x78] sm:$0xff]
      %v2066 = vld [vmem:[%s11 + $0x80] sm:$0xff]
      %v2067 = vld [vmem:[%s11 + $0x88] sm:$0xff]
      %v2068 = vld [vmem:[%s11 + $0x90] sm:$0xff]
      %v2069 = vld [vmem:[%s11 + $0x98] sm:$0xff]
      %v2070 = vld [vmem:[%s11 + $0xa0] sm:$0xff]
      %v2071 = vld [vmem:[%s11 + $0xa8] sm:$0xff]
      %v2072 = vld [vmem:[%s11 + $0xb0] sm:$0xff]
      %v2073 = vld [vmem:[%s11 + $0xb8] sm:$0xff]
      %v2074 = vld [vmem:[%s11 + $0xc0] sm:$0xff]
      %v2075 = vld [vmem:[%s11 + $0xc8] sm:$0xff]
      %v2076 = vld [vmem:[%s11 + $0xd0] sm:$0xff]
      %v2077 = vld [vmem:[%s11 + $0xd8] sm:$0xff]
      %v2078 = vld [vmem:[%s11 + $0xe0] sm:$0xff]
      %v2079 = vld [vmem:[%s11 + $0xe8] sm:$0xff]
      %v2080 = vld [vmem:[%s11 + $0xf0] sm:$0xff]
      %v2081 = vld [vmem:[%s11 + $0xf8] sm:$0xff]
      %v2082 = vld [vmem:[%s11 + $0x100] sm:$0xff]
      %v2083 = vld [vmem:[%s11 + $0x108] sm:$0xff]
      %v2084 = vld [vmem:[%s11 + $0x110] sm:$0xff]
      %v2085 = vld [vmem:[%s11 + $0x118] sm:$0xff]
      %v2086 = vld [vmem:[%s11 + $0x120] sm:$0xff]
      %v2087 = vld [vmem:[%s11 + $0x128] sm:$0xff]
      %v2088 = vld [vmem:[%s11 + $0x130] sm:$0xff]
      %v2089 = vld [vmem:[%s11 + $0x138] sm:$0xff]
      %v2090 = vld [vmem:[%s11 + $0x140] sm:$0xff]
      %v2091 = vld [vmem:[%s11 + $0x148] sm:$0xff]
      %v2092 = vld [vmem:[%s11 + $0x150] sm:$0xff]
      %v2093 = vld [vmem:[%s11 + $0x158] sm:$0xff]
      %v2094 = vld [vmem:[%s11 + $0x160] sm:$0xff]
      %v2095 = vld [vmem:[%s11 + $0x168] sm:$0xff]
      %v2096 = vld [vmem:[%s11 + $0x170] sm:$0xff]
      %v2097 = vld [vmem:[%s11 + $0x178] sm:$0xff]
      %v2098 = vld [vmem:[%s11 + $0x180] sm:$0xff]
      %v2099 = vld [vmem:[%s11 + $0x188] sm:$0xff]
      %v2100 = vld [vmem:[%s11 + $0x190] sm:$0xff]
      %v2101 = vld [vmem:[%s11 + $0x198] sm:$0xff]
      %v2102 = vld [vmem:[%s11 + $0x1a0] sm:$0xff]
      %v2103 = vld [vmem:[%s11 + $0x1a8] sm:$0xff]
      %v2104 = vld [vmem:[%s11 + $0x1b0] sm:$0xff]
      %v2105 = vld [vmem:[%s11 + $0x1b8] sm:$0xff]
      %v2106 = vld [vmem:[%s11 + $0x1c0] sm:$0xff]
      %v2107 = vld [vmem:[%s11 + $0x1c8] sm:$0xff]
      %v2108 = vld [vmem:[%s11 + $0x1d0] sm:$0xff]
      %v2109 = vld [vmem:[%s11 + $0x1d8] sm:$0xff]
      %v2110 = vld [vmem:[%s11 + $0x1e0] sm:$0xff]
      %v2111 = vld [vmem:[%s11 + $0x1e8] sm:$0xff]
      %v2112 = vld [vmem:[%s11 + $0x1f0] sm:$0xff]
      %v2113 = vld [vmem:[%s11 + $0x1f8] sm:$0xff]
      %2114 = vmatprep.subr.mxu0 %v2051
      %2115 = vmatpush1.msra.mxu0 %v2050
      %2116 = vmatprep.subr.mxu0 %v2055
      %2117 = vmatpush1.msra.mxu0 %v2054
      %2118 = vmatprep.subr.mxu0 %v2059
      %2119 = vmatpush1.msra.mxu0 %v2058
      %2120 = vmatprep.subr.mxu0 %v2063
      %2121 = vmatpush1.msra.mxu0 %v2062
      %2122 = vmatprep.subr.mxu0 %v2067
      %2123 = vmatpush1.msra.mxu0 %v2066
      %2124 = vmatprep.subr.mxu0 %v2071
      %2125 = vmatpush1.msra.mxu0 %v2070
      %2126 = vmatprep.subr.mxu0 %v2075
      %2127 = vmatpush1.msra.mxu0 %v2074
      %2128 = vmatprep.subr.mxu0 %v2079
      %2129 = vmatpush1.msra.mxu0 %v2078
      %2130 = vmatprep.subr.mxu0 %v2083
      %2131 = vmatpush1.msra.mxu0 %v2082
      %2132 = vmatprep.subr.mxu0 %v2087
      %2133 = vmatpush1.msra.mxu0 %v2086
      %2134 = vmatprep.subr.mxu0 %v2091
      %2135 = vmatpush1.msra.mxu0 %v2090
      %2136 = vmatprep.subr.mxu0 %v2095
      %2137 = vmatpush1.msra.mxu0 %v2094
      %2138 = vmatprep.subr.mxu0 %v2099
      %2139 = vmatpush1.msra.mxu0 %v2098
      %2140 = vmatprep.subr.mxu0 %v2103
      %2141 = vmatpush1.msra.mxu0 %v2102
      %2142 = vmatprep.subr.mxu0 %v2107
      %2143 = vmatpush1.msra.mxu0 %v2106
      %2144 = vmatprep.subr.mxu0 %v2111
      %2145 = vmatpush1.msra.mxu0 %v2110
      %2146 = vmatprep.subr.mxu0 0.0
      %2147 = vmatpush1.msra.mxu0 0.0
      %2148 = vmatprep.subr.mxu0 0.0
      %2149 = vmatpush1.msra.mxu0 0.0
      %2150 = vmatprep.subr.mxu0 0.0
      %2151 = vmatpush1.msra.mxu0 0.0
      %2152 = vmatprep.subr.mxu0 0.0
      %2153 = vmatpush1.msra.mxu0 0.0
      %2154 = vmatprep.subr.mxu0 0.0
      %2155 = vmatpush1.msra.mxu0 0.0
      %2156 = vmatprep.subr.mxu0 0.0
      %2157 = vmatpush1.msra.mxu0 0.0
      %2158 = vmatprep.subr.mxu0 0.0
      %2159 = vmatpush1.msra.mxu0 0.0
      %2160 = vmatprep.subr.mxu0 0.0
      %2161 = vmatpush1.msra.mxu0 0.0
      %2162 = vmatprep.subr.mxu0 0.0
      %2163 = vmatpush1.msra.mxu0 0.0
      %2164 = vmatprep.subr.mxu0 0.0
      %2165 = vmatpush1.msra.mxu0 0.0
      %2166 = vmatprep.subr.mxu0 0.0
      %2167 = vmatpush1.msra.mxu0 0.0
      %2168 = vmatprep.subr.mxu0 0.0
      %2169 = vmatpush1.msra.mxu0 0.0
      %2170 = vmatprep.subr.mxu0 0.0
      %2171 = vmatpush1.msra.mxu0 0.0
      %2172 = vmatprep.subr.mxu0 0.0
      %2173 = vmatpush1.msra.mxu0 0.0
      %2174 = vmatprep.subr.mxu0 0.0
      %2175 = vmatpush1.msra.mxu0 0.0
      %2176 = vmatprep.subr.mxu0 0.0
      %2177 = vmatpush1.msra.mxu0 0.0
      %2178 = vmatprep.mubr.f32.mxu0 0.0
      %2179 = vmatmul.mubr.f32.gmra.mrb[0].mxu0 %v540
      %v2180 = vpop.f32.mrb[0].mxu0
      %v2181 = vadd.f32 0.0, %v2180
      %v2182 = vpop.f32.mrb[0].mxu0
      %v2183 = vadd.f32 0.0, %v2182
      %2184 = vdwg.mxu0
      %2185 = vmatprep.subr.mxu0 %v2053
      %2186 = vmatpush1.msra.mxu0 %v2052
      %2187 = vmatprep.subr.mxu0 %v2057
      %2188 = vmatpush1.msra.mxu0 %v2056
      %2189 = vmatprep.subr.mxu0 %v2061
      %2190 = vmatpush1.msra.mxu0 %v2060
      %2191 = vmatprep.subr.mxu0 %v2065
      %2192 = vmatpush1.msra.mxu0 %v2064
      %2193 = vmatprep.subr.mxu0 %v2069
      %2194 = vmatpush1.msra.mxu0 %v2068
      %2195 = vmatprep.subr.mxu0 %v2073
      %2196 = vmatpush1.msra.mxu0 %v2072
      %2197 = vmatprep.subr.mxu0 %v2077
      %2198 = vmatpush1.msra.mxu0 %v2076
      %2199 = vmatprep.subr.mxu0 %v2081
      %2200 = vmatpush1.msra.mxu0 %v2080
      %2201 = vmatprep.subr.mxu0 %v2085
      %2202 = vmatpush1.msra.mxu0 %v2084
      %2203 = vmatprep.subr.mxu0 %v2089
      %2204 = vmatpush1.msra.mxu0 %v2088
      %2205 = vmatprep.subr.mxu0 %v2093
      %2206 = vmatpush1.msra.mxu0 %v2092
      %2207 = vmatprep.subr.mxu0 %v2097
      %2208 = vmatpush1.msra.mxu0 %v2096
      %2209 = vmatprep.subr.mxu0 %v2101
      %2210 = vmatpush1.msra.mxu0 %v2100
      %2211 = vmatprep.subr.mxu0 %v2105
      %2212 = vmatpush1.msra.mxu0 %v2104
      %2213 = vmatprep.subr.mxu0 %v2109
      %2214 = vmatpush1.msra.mxu0 %v2108
      %2215 = vmatprep.subr.mxu0 %v2113
      %2216 = vmatpush1.msra.mxu0 %v2112
      %2217 = vmatprep.subr.mxu0 0.0
      %2218 = vmatpush1.msra.mxu0 0.0
      %2219 = vmatprep.subr.mxu0 0.0
      %2220 = vmatpush1.msra.mxu0 0.0
      %2221 = vmatprep.subr.mxu0 0.0
      %2222 = vmatpush1.msra.mxu0 0.0
      %2223 = vmatprep.subr.mxu0 0.0
      %2224 = vmatpush1.msra.mxu0 0.0
      %2225 = vmatprep.subr.mxu0 0.0
      %2226 = vmatpush1.msra.mxu0 0.0
      %2227 = vmatprep.subr.mxu0 0.0
      %2228 = vmatpush1.msra.mxu0 0.0
      %2229 = vmatprep.subr.mxu0 0.0
      %2230 = vmatpush1.msra.mxu0 0.0
      %2231 = vmatprep.subr.mxu0 0.0
      %2232 = vmatpush1.msra.mxu0 0.0
      %2233 = vmatprep.subr.mxu0 0.0
      %2234 = vmatpush1.msra.mxu0 0.0
      %2235 = vmatprep.subr.mxu0 0.0
      %2236 = vmatpush1.msra.mxu0 0.0
      %2237 = vmatprep.subr.mxu0 0.0
      %2238 = vmatpush1.msra.mxu0 0.0
      %2239 = vmatprep.subr.mxu0 0.0
      %2240 = vmatpush1.msra.mxu0 0.0
      %2241 = vmatprep.subr.mxu0 0.0
      %2242 = vmatpush1.msra.mxu0 0.0
      %2243 = vmatprep.subr.mxu0 0.0
      %2244 = vmatpush1.msra.mxu0 0.0
      %2245 = vmatprep.subr.mxu0 0.0
      %2246 = vmatpush1.msra.mxu0 0.0
      %2247 = vmatprep.subr.mxu0 0.0
      %2248 = vmatpush1.msra.mxu0 0.0
      %2249 = vmatprep.mubr.f32.mxu0 0.0
      %2250 = vmatmul.mubr.f32.gmra.mrb[0].mxu0 %v540
      %v2251 = vpop.f32.mrb[0].mxu0
      %v2252 = vadd.f32 0.0, %v2251
      %v2253 = vpop.f32.mrb[0].mxu0
      %v2254 = vadd.f32 0.0, %v2253
      %2255 = vdwg.mxu0
      %v2256 = vadd.f32 %v1975, %v2181
      %v2257 = vadd.f32 %v1977, %v2183
      %v2258 = vadd.f32 %v2046, %v2252
      %v2259 = vadd.f32 %v2048, %v2254
      %v2260 = vld [vmem:[%s12] sm:$0xf]
      %v2262 = vlaneseq
      %v2263 = vshrl.u32 %v2262, 7
      %v2264 = vsub.s32 0, %v2263
      %v2265 = vrot.slane %v2260, %v2264
      %v2266 = vlaneseq
      %v2267 = vshrl.u32 %v2266, 7
      %v2268 = vsub.s32 1, %v2267
      %v2269 = vrot.slane %v2260, %v2268
      %v2270 = vlaneseq
      %v2271 = vshrl.u32 %v2270, 7
      %v2272 = vsub.s32 2, %v2271
      %v2273 = vrot.slane %v2260, %v2272
      %v2274 = vlaneseq
      %v2275 = vshrl.u32 %v2274, 7
      %v2276 = vsub.s32 3, %v2275
      %v2277 = vrot.slane %v2260, %v2276
      %v2282 = vadd.f32 %v2256, %v2265
      %v2283 = vadd.f32 %v2257, %v2269
      %v2284 = vadd.f32 %v2258, %v2273
      %v2285 = vadd.f32 %v2259, %v2277
      %v2286 = vld [vmem:[#allocation5] sm:$0xff]
      %v2287 = vxor.u32 %v2282, 2147483648
      %v2288 = vmul.f32 %v2287, 1.442695
      %v2289 = vpow.pop %v2288
      %v2290 = vadd.f32 %v2289, 1.0
      %v2291 = vrcp.pop %v2290
      %v2292 = vmul.f32 1.0, %v2291
      %v2293 = vxor.u32 %v2283, 2147483648
      %v2294 = vmul.f32 %v2293, 1.442695
      %v2295 = vpow.pop %v2294
      %v2296 = vadd.f32 %v2295, 1.0
      %v2297 = vrcp.pop %v2296
      %v2298 = vmul.f32 1.0, %v2297
      %v2299 = vtanh.pop %v2284
      %v2300 = vxor.u32 %v2285, 2147483648
      %v2301 = vmul.f32 %v2300, 1.442695
      %v2302 = vpow.pop %v2301
      %v2303 = vadd.f32 %v2302, 1.0
      %v2304 = vrcp.pop %v2303
      %v2305 = vmul.f32 1.0, %v2304
      %v2306 = vmul.f32 %v2298, %v2286
      %v2307 = vmul.f32 %v2292, %v2299
      %v2308 = vadd.f32 %v2306, %v2307
      %v2309 = vtanh.pop %v2308
      %v2310 = vmul.f32 %v2305, %v2309
      %2311 = vst [vmem:[#allocation4] sm:$0xff] %v2310
      %2312 = vst [vmem:[#allocation5] sm:$0xff] %v2308
      %2313 = vst [vmem:[%s526] sm:$0xff] %v2310
      %p2314 = scmp.lt.s32.totalorder %s29, 6
      %s2315 = scalar_select %p2314, %s29, 6
      %p2316 = scmp.lt.s32.totalorder %s28, 0
      %s2317 = scalar_select %p2316, %s28, 0
      %s2318 = sadd.s32 %s2317, %s2315
      %s2319 = smul.addr %s2318, 8
      %s2320 = scalar_lea.vmem %s13, %s2319
      // Predicated region
      $region77: #{topdown_decoder_forward.2} parent=71 // pred_check
        %p2321 = pneg %p351
      $region78: #{topdown_decoder_forward.2} parent=71 // pred_check_branch
        %2323 = sbr.rel (%p2321) target = $region80
      $region79: #{topdown_decoder_forward.2} parent=71 // pred_region
        _
      $region80: #{topdown_decoder_forward.2} parent=71 // pred_fallthru
        _
    $region72: #{topdown_decoder_forward.2} parent=5 // pred_fallthru
      _
    %p2324 = scmp.le.s32.totalorder 2, %s19
    // Predicated region
    $region81: #{topdown_decoder_forward.2} parent=5 // pred_check
      %p2325 = pneg %p2324
    $region82: #{topdown_decoder_forward.2} parent=5 // pred_check_branch
      %2327 = sbr.rel (%p2325) target = $region84
    $region83: #{topdown_decoder_forward.2} parent=5 // pred_region
      %s2328 = ssub.s32 %s19, 2
      // Predicated region
      $region85: #{topdown_decoder_forward.2} parent=83 // pred_check
        %p2329 = pneg %p357
      $region86: #{topdown_decoder_forward.2} parent=83 // pred_check_branch
        %2331 = sbr.rel (%p2329) target = $region88
      $region87: #{topdown_decoder_forward.2} parent=83 // pred_region
        %p2332 = scmp.lt.s32.totalorder %s31, 6
        %s2333 = scalar_select %p2332, %s31, 6
        %p2334 = scmp.lt.s32.totalorder %s30, 0
        %s2335 = scalar_select %p2334, %s30, 0
        %s2336 = sadd.s32 %s2335, %s2333
        %s2337 = smul.addr %s2336, 8
        %s2338 = scalar_lea.vmem %s13, %s2337
      $region88: #{topdown_decoder_forward.2} parent=83 // pred_fallthru
        _
    $region84: #{topdown_decoder_forward.2} parent=5 // pred_fallthru
      _
  $region6: #{topdown_decoder_forward.2} parent=0 // loop_footer
    %s23 = sadd.s32 1, %s19
  $region7: #{topdown_decoder_forward.2} parent=0 // loop_footer_branch
    %18 = sbr.rel target = $region3
  $region8: #{topdown_decoder_forward.2} parent=0 // loop_exit
    _

</llo_original>
